<compile_context>
chip_gen: v5e
topology: v5e:2x2
jax: 0.10.0
libtpu: 0.0.40
codegen_flags: <defaults>
</compile_context>

<pallas_src>
import numpy as np
import jax
import jax.numpy as jnp
from jax.experimental import pallas as pl
from jax.experimental.pallas import tpu as pltpu


def _conv_out(size, k, s):
    return (size - k) // s + 1


# ---------------------------------------------------------------------------
# Fused kernel: conv1 -> conv2 -> conv3 for one image per grid step
# ---------------------------------------------------------------------------
def _make_fused_kernel(OH1, OW1, OH2, OW2, OH3, OW3, C, C1, C2):
    Kt1 = 16 * C                       # per-tap K for conv1 (s2d(4) channels)
    M1, M2, M3 = OH1 * OW1, OH2 * OW2, OH3 * OW3
    bf16, f32 = jnp.bfloat16, jnp.float32

    def kernel(xs_ref, w1_ref, w2_ref, w3_ref, b1_ref, b2_ref, b3_ref, out_ref):
        # ---- conv1: 8x8 / stride 4  ==  2x2 / stride 1 over the s2d(4) map --
        h1 = None
        t = 0
        for a in range(2):
            for b in range(2):
                tap = xs_ref[0, a:a + OH1, b:b + OW1, :].reshape(M1, Kt1)  # bf16
                d = jnp.dot(tap, w1_ref[t * Kt1:(t + 1) * Kt1, :],
                            preferred_element_type=f32)
                h1 = d if h1 is None else h1 + d
                t += 1
        h1 = h1 + b1_ref[...]                                   # (M1, C1) f32

        # ---- conv2: 4x4 / stride 2  ==  parity split + 2x2 / stride 1 -------
        h1p = h1.reshape(OH1 // 2, 2, OW1 // 2, 2, C1)          # (bi,r2,bj,s2,c)
        par = {(r, s): h1p[:, r, :, s, :]                        # (OH1//2, OW1//2, C1)
               for r in range(2) for s in range(2)}
        h2 = None
        t = 0
        for a in range(2):
            for b in range(2):
                for r in range(2):
                    for s in range(2):
                        tap = par[(r, s)][a:a + OH2, b:b + OW2, :]
                        tap = tap.reshape(M2, C1).astype(bf16)
                        d = jnp.dot(tap, w2_ref[t * C1:(t + 1) * C1, :],
                                    preferred_element_type=f32)
                        h2 = d if h2 is None else h2 + d
                        t += 1
        h2 = h2 + b2_ref[...]                                   # (M2, C2) f32

        # ---- conv3: 3x3 / stride 1 ------------------------------------------
        h2s = h2.reshape(OH2, OW2, C2)
        h3 = None
        t = 0
        for di in range(3):
            for dj in range(3):
                tap = h2s[di:di + OH3, dj:dj + OW3, :].reshape(M3, C2).astype(bf16)
                d = jnp.dot(tap, w3_ref[t * C2:(t + 1) * C2, :],
                            preferred_element_type=f32)
                h3 = d if h3 is None else h3 + d
                t += 1
        out_ref[0] = h3 + b3_ref[...]                           # (M3, OC3) f32

    return kernel


# ---------------------------------------------------------------------------
# Parameters (matching torch init) and one-time weight prep
# ---------------------------------------------------------------------------
def xavier_uniform(key, shape):
    oc, ic, kh, kw = shape
    fan_in, fan_out = ic * kh * kw, oc * kh * kw
    bound = float(np.sqrt(6.0 / (fan_in + fan_out)))
    return jax.random.uniform(key, shape, jnp.float32, -bound, bound)


def init_params(key, in_channels=3):
    k1, k2, k3 = jax.random.split(key, 3)
    return {
        "w1": xavier_uniform(k1, (32, in_channels, 8, 8)),
        "b1": jnp.zeros((32,), jnp.float32),
        "w2": xavier_uniform(k2, (64, 32, 4, 4)),
        "b2": jnp.zeros((64,), jnp.float32),
        "w3": xavier_uniform(k3, (64, 64, 3, 3)),
        "b3": jnp.zeros((64,), jnp.float32),
    }


def prepare_params(params):
    """One-time prep (outside the hot path): OIHW -> [K, OC] bf16 matmul
    operands whose row order matches the in-kernel tap order, + [1, OC] f32
    biases."""
    w1, w2, w3 = params["w1"], params["w2"], params["w3"]

    # conv1: kernel pos (kh, kw) = (4a + r4, 4b + s4); rows ordered (a, b, r4, s4, c)
    oc1, c, _, _ = w1.shape
    w1m = jnp.transpose(w1, (2, 3, 1, 0)).reshape(2, 4, 2, 4, c, oc1)
    w1m = jnp.transpose(w1m, (0, 2, 1, 3, 4, 5)).reshape(64 * c, oc1).astype(jnp.bfloat16)

    # conv2: kernel pos (kh, kw) = (2a + r2, 2b + s2); rows ordered (a, b, r2, s2, c1)
    oc2, c1, _, _ = w2.shape
    w2m = jnp.transpose(w2, (2, 3, 1, 0)).reshape(2, 2, 2, 2, c1, oc2)
    w2m = jnp.transpose(w2m, (0, 2, 1, 3, 4, 5)).reshape(16 * c1, oc2).astype(jnp.bfloat16)

    # conv3: standard (kh, kw, c2) row order
    oc3, c2, kh3, kw3 = w3.shape
    w3m = jnp.transpose(w3, (2, 3, 1, 0)).reshape(kh3 * kw3 * c2, oc3).astype(jnp.bfloat16)

    return (
        (w1m, params["b1"].reshape(1, -1).astype(jnp.float32)),
        (w2m, params["b2"].reshape(1, -1).astype(jnp.float32)),
        (w3m, params["b3"].reshape(1, -1).astype(jnp.float32)),
    )


# ---------------------------------------------------------------------------
# Forward pass (single fused pallas_call)
# ---------------------------------------------------------------------------
def picture_processor_forward(x_nchw, prepped):
    """x: [B, C, H, W] f32 -> flattened features [B, OC3*OH3*OW3] (PyTorch order)."""
    (w1m, b1), (w2m, b2), (w3m, b3) = prepped
    B, C, H, W = x_nchw.shape
    OH1, OW1 = _conv_out(H, 8, 4), _conv_out(W, 8, 4)
    OH2, OW2 = _conv_out(OH1, 4, 2), _conv_out(OW1, 4, 2)
    OH3, OW3 = _conv_out(OH2, 3, 1), _conv_out(OW2, 3, 1)
    assert OH3 >= 1 and OW3 >= 1, "input spatial size too small"
    # TODO(synk): support odd conv1 output extents (needs a one-row/col zero pad
    # of h1 before the conv2 parity split).
    assert OH1 % 2 == 0 and OW1 % 2 == 0, "conv1 output extent must be even"

    C1, C2, C3 = w1m.shape[1], w2m.shape[1], w3m.shape[1]
    M3 = OH3 * OW3

    # --- XLA-side pre-pack (once, zero expansion): crop, NCHW->NHWC,
    #     space-to-depth(4) so conv1 becomes a 2x2/stride-1 conv, cast bf16 ---
    Hc, Wc = 4 * (OH1 + 1), 4 * (OW1 + 1)
    xs = jnp.transpose(x_nchw[:, :, :Hc, :Wc], (0, 2, 3, 1))        # (B,Hc,Wc,C)
    xs = xs.reshape(B, OH1 + 1, 4, OW1 + 1, 4, C)
    xs = jnp.transpose(xs, (0, 1, 3, 2, 4, 5)).reshape(B, OH1 + 1, OW1 + 1, 16 * C)
    xs = xs.astype(jnp.bfloat16)

    kernel = _make_fused_kernel(OH1, OW1, OH2, OW2, OH3, OW3, C, C1, C2)

    flops = 2 * B * (OH1 * OW1 * (64 * C) * C1
                     + OH2 * OW2 * (16 * C1) * C2
                     + OH3 * OW3 * (9 * C2) * C3)
    bytes_accessed = (xs.size * 2 + (w1m.size + w2m.size + w3m.size) * 2
                      + B * M3 * C3 * 4)
    cost = pl.CostEstimate(flops=flops, transcendentals=0,
                           bytes_accessed=bytes_accessed)

    out = pl.pallas_call(
        kernel,
        out_shape=jax.ShapeDtypeStruct((B, M3, C3), jnp.float32),
        grid=(B,),
        in_specs=[
            pl.BlockSpec((1, OH1 + 1, OW1 + 1, 16 * C), lambda n: (n, 0, 0, 0)),
            pl.BlockSpec(w1m.shape, lambda n: (0, 0)),
            pl.BlockSpec(w2m.shape, lambda n: (0, 0)),
            pl.BlockSpec(w3m.shape, lambda n: (0, 0)),
            pl.BlockSpec(b1.shape, lambda n: (0, 0)),
            pl.BlockSpec(b2.shape, lambda n: (0, 0)),
            pl.BlockSpec(b3.shape, lambda n: (0, 0)),
        ],
        out_specs=pl.BlockSpec((1, M3, C3), lambda n: (n, 0, 0)),
        compiler_params=pltpu.CompilerParams(dimension_semantics=("parallel",)),
        cost_estimate=cost,
    )(xs, w1m, w2m, w3m, b1, b2, b3)

    # --- XLA-side post: rows are (p, q); reorder to PyTorch's NCHW flatten ---
    out = out.reshape(B, OH3, OW3, C3)
    out = jnp.transpose(out, (0, 3, 1, 2)).reshape(B, -1)
    return out
    # TODO(synk): return_stats=True path (get_activated_ratio) is a host-side
    # statistic outside the Pallas hot path; not implemented here.


# ---------------------------------------------------------------------------
# XLA reference with matching bf16-operand / f32-accumulate numerics
# ---------------------------------------------------------------------------
def _forward_ref(x, params):
    def conv(x, w, b, stride):
        y = jax.lax.conv_general_dilated(
            x.astype(jnp.bfloat16),
            w.astype(jnp.bfloat16),
            window_strides=stride,
            padding="VALID",
            dimension_numbers=("NCHW", "OIHW", "NCHW"),
            preferred_element_type=jnp.float32,
        )
        return y + b[None, :, None, None]

    x = conv(x, params["w1"], params["b1"], (4, 4))
    x = conv(x, params["w2"], params["b2"], (2, 2))
    x = conv(x, params["w3"], params["b3"], (1, 1))
    return x.reshape(x.shape[0], -1)


if __name__ == "__main__":
    key = jax.random.PRNGKey(0)
    kp, kx = jax.random.split(key)

    in_channels = 4
    params = init_params(kp, in_channels=in_channels)
    prepped = prepare_params(params)

    # 52 -> (52-8)/4+1=12 -> (12-4)/2+1=5 -> (5-3)/1+1=3  => flat dim = 64*3*3
    x = jax.random.normal(kx, (2, in_channels, 52, 52), dtype=jnp.float32)

    fwd = jax.jit(picture_processor_forward)
    out = jax.block_until_ready(fwd(x, prepped))

    ref = jax.block_until_ready(_forward_ref(x, params))
    assert out.shape == (2, 64 * 3 * 3), out.shape
    np.testing.assert_allclose(np.asarray(out), np.asarray(ref), rtol=2e-2, atol=2e-2)

    print("KERNEL_OK")
</pallas_src>

<mosaic_0001>
module attributes {stable_mosaic.version = 11 : i64} {
  func.func @kernel(%arg0: i32, %arg1: memref<1x13x13x64xbf16, #tpu.memory_space<vmem>>, %arg2: memref<256x32xbf16, #tpu.memory_space<vmem>>, %arg3: memref<512x64xbf16, #tpu.memory_space<vmem>>, %arg4: memref<576x64xbf16, #tpu.memory_space<vmem>>, %arg5: memref<1x32xf32, #tpu.memory_space<vmem>>, %arg6: memref<1x64xf32, #tpu.memory_space<vmem>>, %arg7: memref<1x64xf32, #tpu.memory_space<vmem>>, %arg8: memref<1x9x64xf32, #tpu.memory_space<vmem>>) attributes {dimension_semantics = [#tpu.dimension_semantics<parallel>], iteration_bounds = array<i64: 2>, scalar_prefetch = 0 : i64, scratch_operands = 0 : i64, tpu.core_type = #tpu.core_type<tc>, window_params = [{transform_indices = @transform_0, window_bounds = array<i64: 1, 13, 13, 64>}, {pipeline_mode = #tpu.pipeline_mode<synchronous>, transform_indices = @transform_1, window_bounds = array<i64: 256, 32>}, {pipeline_mode = #tpu.pipeline_mode<synchronous>, transform_indices = @transform_2, window_bounds = array<i64: 512, 64>}, {pipeline_mode = #tpu.pipeline_mode<synchronous>, transform_indices = @transform_3, window_bounds = array<i64: 576, 64>}, {pipeline_mode = #tpu.pipeline_mode<synchronous>, transform_indices = @transform_4, window_bounds = array<i64: 1, 32>}, {pipeline_mode = #tpu.pipeline_mode<synchronous>, transform_indices = @transform_5, window_bounds = array<i64: 1, 64>}, {pipeline_mode = #tpu.pipeline_mode<synchronous>, transform_indices = @transform_6, window_bounds = array<i64: 1, 64>}, {transform_indices = @transform_7, window_bounds = array<i64: 1, 9, 64>}]} {
    %c0 = arith.constant 0 : index
    %c0_0 = arith.constant 0 : index
    %c0_1 = arith.constant 0 : index
    %c0_2 = arith.constant 0 : index
    %0 = vector.load %arg1[%c0, %c0_0, %c0_1, %c0_2] : memref<1x13x13x64xbf16, #tpu.memory_space<vmem>>, vector<1x12x12x64xbf16>
    %1 = vector.shape_cast %0 : vector<1x12x12x64xbf16> to vector<12x12x64xbf16>
    %2 = vector.shape_cast %1 : vector<12x12x64xbf16> to vector<144x64xbf16>
    %c0_3 = arith.constant 0 : index
    %c0_4 = arith.constant 0 : index
    %3 = vector.load %arg2[%c0_3, %c0_4] : memref<256x32xbf16, #tpu.memory_space<vmem>>, vector<64x32xbf16>
    %cst = arith.constant dense<0.000000e+00> : vector<144x32xf32>
    %4 = tpu.matmul %2, %3, %cst {dimension_numbers = #tpu.dot_dimension_numbers<[1], [0], [0], [1], [0, 0, 1, 1], [], []>} : vector<144x64xbf16>, vector<64x32xbf16>, vector<144x32xf32> -> vector<144x32xf32>
    %c0_5 = arith.constant 0 : index
    %c0_6 = arith.constant 0 : index
    %c1 = arith.constant 1 : index
    %c0_7 = arith.constant 0 : index
    %5 = vector.load %arg1[%c0_5, %c0_6, %c1, %c0_7] : memref<1x13x13x64xbf16, #tpu.memory_space<vmem>>, vector<1x12x12x64xbf16>
    %6 = vector.shape_cast %5 : vector<1x12x12x64xbf16> to vector<12x12x64xbf16>
    %7 = vector.shape_cast %6 : vector<12x12x64xbf16> to vector<144x64xbf16>
    %c64 = arith.constant 64 : index
    %c0_8 = arith.constant 0 : index
    %8 = vector.load %arg2[%c64, %c0_8] : memref<256x32xbf16, #tpu.memory_space<vmem>>, vector<64x32xbf16>
    %cst_9 = arith.constant dense<0.000000e+00> : vector<144x32xf32>
    %9 = tpu.matmul %7, %8, %cst_9 {dimension_numbers = #tpu.dot_dimension_numbers<[1], [0], [0], [1], [0, 0, 1, 1], [], []>} : vector<144x64xbf16>, vector<64x32xbf16>, vector<144x32xf32> -> vector<144x32xf32>
    %10 = arith.addf %4, %9 : vector<144x32xf32>
    %c0_10 = arith.constant 0 : index
    %c1_11 = arith.constant 1 : index
    %c0_12 = arith.constant 0 : index
    %c0_13 = arith.constant 0 : index
    %11 = vector.load %arg1[%c0_10, %c1_11, %c0_12, %c0_13] : memref<1x13x13x64xbf16, #tpu.memory_space<vmem>>, vector<1x12x12x64xbf16>
    %12 = vector.shape_cast %11 : vector<1x12x12x64xbf16> to vector<12x12x64xbf16>
    %13 = vector.shape_cast %12 : vector<12x12x64xbf16> to vector<144x64xbf16>
    %c128 = arith.constant 128 : index
    %c0_14 = arith.constant 0 : index
    %14 = vector.load %arg2[%c128, %c0_14] : memref<256x32xbf16, #tpu.memory_space<vmem>>, vector<64x32xbf16>
    %cst_15 = arith.constant dense<0.000000e+00> : vector<144x32xf32>
    %15 = tpu.matmul %13, %14, %cst_15 {dimension_numbers = #tpu.dot_dimension_numbers<[1], [0], [0], [1], [0, 0, 1, 1], [], []>} : vector<144x64xbf16>, vector<64x32xbf16>, vector<144x32xf32> -> vector<144x32xf32>
    %16 = arith.addf %10, %15 : vector<144x32xf32>
    %c0_16 = arith.constant 0 : index
    %c1_17 = arith.constant 1 : index
    %c1_18 = arith.constant 1 : index
    %c0_19 = arith.constant 0 : index
    %17 = vector.load %arg1[%c0_16, %c1_17, %c1_18, %c0_19] : memref<1x13x13x64xbf16, #tpu.memory_space<vmem>>, vector<1x12x12x64xbf16>
    %18 = vector.shape_cast %17 : vector<1x12x12x64xbf16> to vector<12x12x64xbf16>
    %19 = vector.shape_cast %18 : vector<12x12x64xbf16> to vector<144x64xbf16>
    %c192 = arith.constant 192 : index
    %c0_20 = arith.constant 0 : index
    %20 = vector.load %arg2[%c192, %c0_20] : memref<256x32xbf16, #tpu.memory_space<vmem>>, vector<64x32xbf16>
    %cst_21 = arith.constant dense<0.000000e+00> : vector<144x32xf32>
    %21 = tpu.matmul %19, %20, %cst_21 {dimension_numbers = #tpu.dot_dimension_numbers<[1], [0], [0], [1], [0, 0, 1, 1], [], []>} : vector<144x64xbf16>, vector<64x32xbf16>, vector<144x32xf32> -> vector<144x32xf32>
    %22 = arith.addf %16, %21 : vector<144x32xf32>
    %c0_22 = arith.constant 0 : index
    %c0_23 = arith.constant 0 : index
    %23 = vector.load %arg5[%c0_22, %c0_23] : memref<1x32xf32, #tpu.memory_space<vmem>>, vector<1x32xf32>
    %24 = vector.broadcast %23 : vector<1x32xf32> to vector<144x32xf32>
    %25 = arith.addf %22, %24 : vector<144x32xf32>
    %26 = vector.shape_cast %25 : vector<144x32xf32> to vector<6x2x6x2x32xf32>
    %27 = vector.extract_strided_slice %26 {offsets = [0, 0, 0, 0, 0], sizes = [6, 1, 6, 1, 32], strides = [1, 1, 1, 1, 1]} : vector<6x2x6x2x32xf32> to vector<6x1x6x1x32xf32>
    %28 = vector.shape_cast %27 : vector<6x1x6x1x32xf32> to vector<6x6x32xf32>
    %29 = vector.extract_strided_slice %26 {offsets = [0, 0, 0, 1, 0], sizes = [6, 1, 6, 1, 32], strides = [1, 1, 1, 1, 1]} : vector<6x2x6x2x32xf32> to vector<6x1x6x1x32xf32>
    %30 = vector.shape_cast %29 : vector<6x1x6x1x32xf32> to vector<6x6x32xf32>
    %31 = vector.extract_strided_slice %26 {offsets = [0, 1, 0, 0, 0], sizes = [6, 1, 6, 1, 32], strides = [1, 1, 1, 1, 1]} : vector<6x2x6x2x32xf32> to vector<6x1x6x1x32xf32>
    %32 = vector.shape_cast %31 : vector<6x1x6x1x32xf32> to vector<6x6x32xf32>
    %33 = vector.extract_strided_slice %26 {offsets = [0, 1, 0, 1, 0], sizes = [6, 1, 6, 1, 32], strides = [1, 1, 1, 1, 1]} : vector<6x2x6x2x32xf32> to vector<6x1x6x1x32xf32>
    %34 = vector.shape_cast %33 : vector<6x1x6x1x32xf32> to vector<6x6x32xf32>
    %35 = vector.extract_strided_slice %28 {offsets = [0, 0, 0], sizes = [5, 5, 32], strides = [1, 1, 1]} : vector<6x6x32xf32> to vector<5x5x32xf32>
    %36 = vector.shape_cast %35 : vector<5x5x32xf32> to vector<25x32xf32>
    %37 = arith.truncf %36 : vector<25x32xf32> to vector<25x32xbf16>
    %c0_24 = arith.constant 0 : index
    %c0_25 = arith.constant 0 : index
    %38 = vector.load %arg3[%c0_24, %c0_25] : memref<512x64xbf16, #tpu.memory_space<vmem>>, vector<32x64xbf16>
    %cst_26 = arith.constant dense<0.000000e+00> : vector<25x64xf32>
    %39 = tpu.matmul %37, %38, %cst_26 {dimension_numbers = #tpu.dot_dimension_numbers<[1], [0], [0], [1], [0, 0, 1, 1], [], []>} : vector<25x32xbf16>, vector<32x64xbf16>, vector<25x64xf32> -> vector<25x64xf32>
    %40 = vector.extract_strided_slice %30 {offsets = [0, 0, 0], sizes = [5, 5, 32], strides = [1, 1, 1]} : vector<6x6x32xf32> to vector<5x5x32xf32>
    %41 = vector.shape_cast %40 : vector<5x5x32xf32> to vector<25x32xf32>
    %42 = arith.truncf %41 : vector<25x32xf32> to vector<25x32xbf16>
    %c32 = arith.constant 32 : index
    %c0_27 = arith.constant 0 : index
    %43 = vector.load %arg3[%c32, %c0_27] : memref<512x64xbf16, #tpu.memory_space<vmem>>, vector<32x64xbf16>
    %cst_28 = arith.constant dense<0.000000e+00> : vector<25x64xf32>
    %44 = tpu.matmul %42, %43, %cst_28 {dimension_numbers = #tpu.dot_dimension_numbers<[1], [0], [0], [1], [0, 0, 1, 1], [], []>} : vector<25x32xbf16>, vector<32x64xbf16>, vector<25x64xf32> -> vector<25x64xf32>
    %45 = arith.addf %39, %44 : vector<25x64xf32>
    %46 = vector.extract_strided_slice %32 {offsets = [0, 0, 0], sizes = [5, 5, 32], strides = [1, 1, 1]} : vector<6x6x32xf32> to vector<5x5x32xf32>
    %47 = vector.shape_cast %46 : vector<5x5x32xf32> to vector<25x32xf32>
    %48 = arith.truncf %47 : vector<25x32xf32> to vector<25x32xbf16>
    %c64_29 = arith.constant 64 : index
    %c0_30 = arith.constant 0 : index
    %49 = vector.load %arg3[%c64_29, %c0_30] : memref<512x64xbf16, #tpu.memory_space<vmem>>, vector<32x64xbf16>
    %cst_31 = arith.constant dense<0.000000e+00> : vector<25x64xf32>
    %50 = tpu.matmul %48, %49, %cst_31 {dimension_numbers = #tpu.dot_dimension_numbers<[1], [0], [0], [1], [0, 0, 1, 1], [], []>} : vector<25x32xbf16>, vector<32x64xbf16>, vector<25x64xf32> -> vector<25x64xf32>
    %51 = arith.addf %45, %50 : vector<25x64xf32>
    %52 = vector.extract_strided_slice %34 {offsets = [0, 0, 0], sizes = [5, 5, 32], strides = [1, 1, 1]} : vector<6x6x32xf32> to vector<5x5x32xf32>
    %53 = vector.shape_cast %52 : vector<5x5x32xf32> to vector<25x32xf32>
    %54 = arith.truncf %53 : vector<25x32xf32> to vector<25x32xbf16>
    %c96 = arith.constant 96 : index
    %c0_32 = arith.constant 0 : index
    %55 = vector.load %arg3[%c96, %c0_32] : memref<512x64xbf16, #tpu.memory_space<vmem>>, vector<32x64xbf16>
    %cst_33 = arith.constant dense<0.000000e+00> : vector<25x64xf32>
    %56 = tpu.matmul %54, %55, %cst_33 {dimension_numbers = #tpu.dot_dimension_numbers<[1], [0], [0], [1], [0, 0, 1, 1], [], []>} : vector<25x32xbf16>, vector<32x64xbf16>, vector<25x64xf32> -> vector<25x64xf32>
    %57 = arith.addf %51, %56 : vector<25x64xf32>
    %58 = vector.extract_strided_slice %28 {offsets = [0, 1, 0], sizes = [5, 5, 32], strides = [1, 1, 1]} : vector<6x6x32xf32> to vector<5x5x32xf32>
    %59 = vector.shape_cast %58 : vector<5x5x32xf32> to vector<25x32xf32>
    %60 = arith.truncf %59 : vector<25x32xf32> to vector<25x32xbf16>
    %c128_34 = arith.constant 128 : index
    %c0_35 = arith.constant 0 : index
    %61 = vector.load %arg3[%c128_34, %c0_35] : memref<512x64xbf16, #tpu.memory_space<vmem>>, vector<32x64xbf16>
    %cst_36 = arith.constant dense<0.000000e+00> : vector<25x64xf32>
    %62 = tpu.matmul %60, %61, %cst_36 {dimension_numbers = #tpu.dot_dimension_numbers<[1], [0], [0], [1], [0, 0, 1, 1], [], []>} : vector<25x32xbf16>, vector<32x64xbf16>, vector<25x64xf32> -> vector<25x64xf32>
    %63 = arith.addf %57, %62 : vector<25x64xf32>
    %64 = vector.extract_strided_slice %30 {offsets = [0, 1, 0], sizes = [5, 5, 32], strides = [1, 1, 1]} : vector<6x6x32xf32> to vector<5x5x32xf32>
    %65 = vector.shape_cast %64 : vector<5x5x32xf32> to vector<25x32xf32>
    %66 = arith.truncf %65 : vector<25x32xf32> to vector<25x32xbf16>
    %c160 = arith.constant 160 : index
    %c0_37 = arith.constant 0 : index
    %67 = vector.load %arg3[%c160, %c0_37] : memref<512x64xbf16, #tpu.memory_space<vmem>>, vector<32x64xbf16>
    %cst_38 = arith.constant dense<0.000000e+00> : vector<25x64xf32>
    %68 = tpu.matmul %66, %67, %cst_38 {dimension_numbers = #tpu.dot_dimension_numbers<[1], [0], [0], [1], [0, 0, 1, 1], [], []>} : vector<25x32xbf16>, vector<32x64xbf16>, vector<25x64xf32> -> vector<25x64xf32>
    %69 = arith.addf %63, %68 : vector<25x64xf32>
    %70 = vector.extract_strided_slice %32 {offsets = [0, 1, 0], sizes = [5, 5, 32], strides = [1, 1, 1]} : vector<6x6x32xf32> to vector<5x5x32xf32>
    %71 = vector.shape_cast %70 : vector<5x5x32xf32> to vector<25x32xf32>
    %72 = arith.truncf %71 : vector<25x32xf32> to vector<25x32xbf16>
    %c192_39 = arith.constant 192 : index
    %c0_40 = arith.constant 0 : index
    %73 = vector.load %arg3[%c192_39, %c0_40] : memref<512x64xbf16, #tpu.memory_space<vmem>>, vector<32x64xbf16>
    %cst_41 = arith.constant dense<0.000000e+00> : vector<25x64xf32>
    %74 = tpu.matmul %72, %73, %cst_41 {dimension_numbers = #tpu.dot_dimension_numbers<[1], [0], [0], [1], [0, 0, 1, 1], [], []>} : vector<25x32xbf16>, vector<32x64xbf16>, vector<25x64xf32> -> vector<25x64xf32>
    %75 = arith.addf %69, %74 : vector<25x64xf32>
    %76 = vector.extract_strided_slice %34 {offsets = [0, 1, 0], sizes = [5, 5, 32], strides = [1, 1, 1]} : vector<6x6x32xf32> to vector<5x5x32xf32>
    %77 = vector.shape_cast %76 : vector<5x5x32xf32> to vector<25x32xf32>
    %78 = arith.truncf %77 : vector<25x32xf32> to vector<25x32xbf16>
    %c224 = arith.constant 224 : index
    %c0_42 = arith.constant 0 : index
    %79 = vector.load %arg3[%c224, %c0_42] : memref<512x64xbf16, #tpu.memory_space<vmem>>, vector<32x64xbf16>
    %cst_43 = arith.constant dense<0.000000e+00> : vector<25x64xf32>
    %80 = tpu.matmul %78, %79, %cst_43 {dimension_numbers = #tpu.dot_dimension_numbers<[1], [0], [0], [1], [0, 0, 1, 1], [], []>} : vector<25x32xbf16>, vector<32x64xbf16>, vector<25x64xf32> -> vector<25x64xf32>
    %81 = arith.addf %75, %80 : vector<25x64xf32>
    %82 = vector.extract_strided_slice %28 {offsets = [1, 0, 0], sizes = [5, 5, 32], strides = [1, 1, 1]} : vector<6x6x32xf32> to vector<5x5x32xf32>
    %83 = vector.shape_cast %82 : vector<5x5x32xf32> to vector<25x32xf32>
    %84 = arith.truncf %83 : vector<25x32xf32> to vector<25x32xbf16>
    %c256 = arith.constant 256 : index
    %c0_44 = arith.constant 0 : index
    %85 = vector.load %arg3[%c256, %c0_44] : memref<512x64xbf16, #tpu.memory_space<vmem>>, vector<32x64xbf16>
    %cst_45 = arith.constant dense<0.000000e+00> : vector<25x64xf32>
    %86 = tpu.matmul %84, %85, %cst_45 {dimension_numbers = #tpu.dot_dimension_numbers<[1], [0], [0], [1], [0, 0, 1, 1], [], []>} : vector<25x32xbf16>, vector<32x64xbf16>, vector<25x64xf32> -> vector<25x64xf32>
    %87 = arith.addf %81, %86 : vector<25x64xf32>
    %88 = vector.extract_strided_slice %30 {offsets = [1, 0, 0], sizes = [5, 5, 32], strides = [1, 1, 1]} : vector<6x6x32xf32> to vector<5x5x32xf32>
    %89 = vector.shape_cast %88 : vector<5x5x32xf32> to vector<25x32xf32>
    %90 = arith.truncf %89 : vector<25x32xf32> to vector<25x32xbf16>
    %c288 = arith.constant 288 : index
    %c0_46 = arith.constant 0 : index
    %91 = vector.load %arg3[%c288, %c0_46] : memref<512x64xbf16, #tpu.memory_space<vmem>>, vector<32x64xbf16>
    %cst_47 = arith.constant dense<0.000000e+00> : vector<25x64xf32>
    %92 = tpu.matmul %90, %91, %cst_47 {dimension_numbers = #tpu.dot_dimension_numbers<[1], [0], [0], [1], [0, 0, 1, 1], [], []>} : vector<25x32xbf16>, vector<32x64xbf16>, vector<25x64xf32> -> vector<25x64xf32>
    %93 = arith.addf %87, %92 : vector<25x64xf32>
    %94 = vector.extract_strided_slice %32 {offsets = [1, 0, 0], sizes = [5, 5, 32], strides = [1, 1, 1]} : vector<6x6x32xf32> to vector<5x5x32xf32>
    %95 = vector.shape_cast %94 : vector<5x5x32xf32> to vector<25x32xf32>
    %96 = arith.truncf %95 : vector<25x32xf32> to vector<25x32xbf16>
    %c320 = arith.constant 320 : index
    %c0_48 = arith.constant 0 : index
    %97 = vector.load %arg3[%c320, %c0_48] : memref<512x64xbf16, #tpu.memory_space<vmem>>, vector<32x64xbf16>
    %cst_49 = arith.constant dense<0.000000e+00> : vector<25x64xf32>
    %98 = tpu.matmul %96, %97, %cst_49 {dimension_numbers = #tpu.dot_dimension_numbers<[1], [0], [0], [1], [0, 0, 1, 1], [], []>} : vector<25x32xbf16>, vector<32x64xbf16>, vector<25x64xf32> -> vector<25x64xf32>
    %99 = arith.addf %93, %98 : vector<25x64xf32>
    %100 = vector.extract_strided_slice %34 {offsets = [1, 0, 0], sizes = [5, 5, 32], strides = [1, 1, 1]} : vector<6x6x32xf32> to vector<5x5x32xf32>
    %101 = vector.shape_cast %100 : vector<5x5x32xf32> to vector<25x32xf32>
    %102 = arith.truncf %101 : vector<25x32xf32> to vector<25x32xbf16>
    %c352 = arith.constant 352 : index
    %c0_50 = arith.constant 0 : index
    %103 = vector.load %arg3[%c352, %c0_50] : memref<512x64xbf16, #tpu.memory_space<vmem>>, vector<32x64xbf16>
    %cst_51 = arith.constant dense<0.000000e+00> : vector<25x64xf32>
    %104 = tpu.matmul %102, %103, %cst_51 {dimension_numbers = #tpu.dot_dimension_numbers<[1], [0], [0], [1], [0, 0, 1, 1], [], []>} : vector<25x32xbf16>, vector<32x64xbf16>, vector<25x64xf32> -> vector<25x64xf32>
    %105 = arith.addf %99, %104 : vector<25x64xf32>
    %106 = vector.extract_strided_slice %28 {offsets = [1, 1, 0], sizes = [5, 5, 32], strides = [1, 1, 1]} : vector<6x6x32xf32> to vector<5x5x32xf32>
    %107 = vector.shape_cast %106 : vector<5x5x32xf32> to vector<25x32xf32>
    %108 = arith.truncf %107 : vector<25x32xf32> to vector<25x32xbf16>
    %c384 = arith.constant 384 : index
    %c0_52 = arith.constant 0 : index
    %109 = vector.load %arg3[%c384, %c0_52] : memref<512x64xbf16, #tpu.memory_space<vmem>>, vector<32x64xbf16>
    %cst_53 = arith.constant dense<0.000000e+00> : vector<25x64xf32>
    %110 = tpu.matmul %108, %109, %cst_53 {dimension_numbers = #tpu.dot_dimension_numbers<[1], [0], [0], [1], [0, 0, 1, 1], [], []>} : vector<25x32xbf16>, vector<32x64xbf16>, vector<25x64xf32> -> vector<25x64xf32>
    %111 = arith.addf %105, %110 : vector<25x64xf32>
    %112 = vector.extract_strided_slice %30 {offsets = [1, 1, 0], sizes = [5, 5, 32], strides = [1, 1, 1]} : vector<6x6x32xf32> to vector<5x5x32xf32>
    %113 = vector.shape_cast %112 : vector<5x5x32xf32> to vector<25x32xf32>
    %114 = arith.truncf %113 : vector<25x32xf32> to vector<25x32xbf16>
    %c416 = arith.constant 416 : index
    %c0_54 = arith.constant 0 : index
    %115 = vector.load %arg3[%c416, %c0_54] : memref<512x64xbf16, #tpu.memory_space<vmem>>, vector<32x64xbf16>
    %cst_55 = arith.constant dense<0.000000e+00> : vector<25x64xf32>
    %116 = tpu.matmul %114, %115, %cst_55 {dimension_numbers = #tpu.dot_dimension_numbers<[1], [0], [0], [1], [0, 0, 1, 1], [], []>} : vector<25x32xbf16>, vector<32x64xbf16>, vector<25x64xf32> -> vector<25x64xf32>
    %117 = arith.addf %111, %116 : vector<25x64xf32>
    %118 = vector.extract_strided_slice %32 {offsets = [1, 1, 0], sizes = [5, 5, 32], strides = [1, 1, 1]} : vector<6x6x32xf32> to vector<5x5x32xf32>
    %119 = vector.shape_cast %118 : vector<5x5x32xf32> to vector<25x32xf32>
    %120 = arith.truncf %119 : vector<25x32xf32> to vector<25x32xbf16>
    %c448 = arith.constant 448 : index
    %c0_56 = arith.constant 0 : index
    %121 = vector.load %arg3[%c448, %c0_56] : memref<512x64xbf16, #tpu.memory_space<vmem>>, vector<32x64xbf16>
    %cst_57 = arith.constant dense<0.000000e+00> : vector<25x64xf32>
    %122 = tpu.matmul %120, %121, %cst_57 {dimension_numbers = #tpu.dot_dimension_numbers<[1], [0], [0], [1], [0, 0, 1, 1], [], []>} : vector<25x32xbf16>, vector<32x64xbf16>, vector<25x64xf32> -> vector<25x64xf32>
    %123 = arith.addf %117, %122 : vector<25x64xf32>
    %124 = vector.extract_strided_slice %34 {offsets = [1, 1, 0], sizes = [5, 5, 32], strides = [1, 1, 1]} : vector<6x6x32xf32> to vector<5x5x32xf32>
    %125 = vector.shape_cast %124 : vector<5x5x32xf32> to vector<25x32xf32>
    %126 = arith.truncf %125 : vector<25x32xf32> to vector<25x32xbf16>
    %c480 = arith.constant 480 : index
    %c0_58 = arith.constant 0 : index
    %127 = vector.load %arg3[%c480, %c0_58] : memref<512x64xbf16, #tpu.memory_space<vmem>>, vector<32x64xbf16>
    %cst_59 = arith.constant dense<0.000000e+00> : vector<25x64xf32>
    %128 = tpu.matmul %126, %127, %cst_59 {dimension_numbers = #tpu.dot_dimension_numbers<[1], [0], [0], [1], [0, 0, 1, 1], [], []>} : vector<25x32xbf16>, vector<32x64xbf16>, vector<25x64xf32> -> vector<25x64xf32>
    %129 = arith.addf %123, %128 : vector<25x64xf32>
    %c0_60 = arith.constant 0 : index
    %c0_61 = arith.constant 0 : index
    %130 = vector.load %arg6[%c0_60, %c0_61] : memref<1x64xf32, #tpu.memory_space<vmem>>, vector<1x64xf32>
    %131 = vector.broadcast %130 : vector<1x64xf32> to vector<25x64xf32>
    %132 = arith.addf %129, %131 : vector<25x64xf32>
    %133 = vector.shape_cast %132 : vector<25x64xf32> to vector<5x5x64xf32>
    %134 = vector.extract_strided_slice %133 {offsets = [0, 0, 0], sizes = [3, 3, 64], strides = [1, 1, 1]} : vector<5x5x64xf32> to vector<3x3x64xf32>
    %135 = vector.shape_cast %134 : vector<3x3x64xf32> to vector<9x64xf32>
    %136 = arith.truncf %135 : vector<9x64xf32> to vector<9x64xbf16>
    %c0_62 = arith.constant 0 : index
    %c0_63 = arith.constant 0 : index
    %137 = vector.load %arg4[%c0_62, %c0_63] : memref<576x64xbf16, #tpu.memory_space<vmem>>, vector<64x64xbf16>
    %cst_64 = arith.constant dense<0.000000e+00> : vector<9x64xf32>
    %138 = tpu.matmul %136, %137, %cst_64 {dimension_numbers = #tpu.dot_dimension_numbers<[1], [0], [0], [1], [0, 0, 1, 1], [], []>} : vector<9x64xbf16>, vector<64x64xbf16>, vector<9x64xf32> -> vector<9x64xf32>
    %139 = vector.extract_strided_slice %133 {offsets = [0, 1, 0], sizes = [3, 3, 64], strides = [1, 1, 1]} : vector<5x5x64xf32> to vector<3x3x64xf32>
    %140 = vector.shape_cast %139 : vector<3x3x64xf32> to vector<9x64xf32>
    %141 = arith.truncf %140 : vector<9x64xf32> to vector<9x64xbf16>
    %c64_65 = arith.constant 64 : index
    %c0_66 = arith.constant 0 : index
    %142 = vector.load %arg4[%c64_65, %c0_66] : memref<576x64xbf16, #tpu.memory_space<vmem>>, vector<64x64xbf16>
    %cst_67 = arith.constant dense<0.000000e+00> : vector<9x64xf32>
    %143 = tpu.matmul %141, %142, %cst_67 {dimension_numbers = #tpu.dot_dimension_numbers<[1], [0], [0], [1], [0, 0, 1, 1], [], []>} : vector<9x64xbf16>, vector<64x64xbf16>, vector<9x64xf32> -> vector<9x64xf32>
    %144 = arith.addf %138, %143 : vector<9x64xf32>
    %145 = vector.extract_strided_slice %133 {offsets = [0, 2, 0], sizes = [3, 3, 64], strides = [1, 1, 1]} : vector<5x5x64xf32> to vector<3x3x64xf32>
    %146 = vector.shape_cast %145 : vector<3x3x64xf32> to vector<9x64xf32>
    %147 = arith.truncf %146 : vector<9x64xf32> to vector<9x64xbf16>
    %c128_68 = arith.constant 128 : index
    %c0_69 = arith.constant 0 : index
    %148 = vector.load %arg4[%c128_68, %c0_69] : memref<576x64xbf16, #tpu.memory_space<vmem>>, vector<64x64xbf16>
    %cst_70 = arith.constant dense<0.000000e+00> : vector<9x64xf32>
    %149 = tpu.matmul %147, %148, %cst_70 {dimension_numbers = #tpu.dot_dimension_numbers<[1], [0], [0], [1], [0, 0, 1, 1], [], []>} : vector<9x64xbf16>, vector<64x64xbf16>, vector<9x64xf32> -> vector<9x64xf32>
    %150 = arith.addf %144, %149 : vector<9x64xf32>
    %151 = vector.extract_strided_slice %133 {offsets = [1, 0, 0], sizes = [3, 3, 64], strides = [1, 1, 1]} : vector<5x5x64xf32> to vector<3x3x64xf32>
    %152 = vector.shape_cast %151 : vector<3x3x64xf32> to vector<9x64xf32>
    %153 = arith.truncf %152 : vector<9x64xf32> to vector<9x64xbf16>
    %c192_71 = arith.constant 192 : index
    %c0_72 = arith.constant 0 : index
    %154 = vector.load %arg4[%c192_71, %c0_72] : memref<576x64xbf16, #tpu.memory_space<vmem>>, vector<64x64xbf16>
    %cst_73 = arith.constant dense<0.000000e+00> : vector<9x64xf32>
    %155 = tpu.matmul %153, %154, %cst_73 {dimension_numbers = #tpu.dot_dimension_numbers<[1], [0], [0], [1], [0, 0, 1, 1], [], []>} : vector<9x64xbf16>, vector<64x64xbf16>, vector<9x64xf32> -> vector<9x64xf32>
    %156 = arith.addf %150, %155 : vector<9x64xf32>
    %157 = vector.extract_strided_slice %133 {offsets = [1, 1, 0], sizes = [3, 3, 64], strides = [1, 1, 1]} : vector<5x5x64xf32> to vector<3x3x64xf32>
    %158 = vector.shape_cast %157 : vector<3x3x64xf32> to vector<9x64xf32>
    %159 = arith.truncf %158 : vector<9x64xf32> to vector<9x64xbf16>
    %c256_74 = arith.constant 256 : index
    %c0_75 = arith.constant 0 : index
    %160 = vector.load %arg4[%c256_74, %c0_75] : memref<576x64xbf16, #tpu.memory_space<vmem>>, vector<64x64xbf16>
    %cst_76 = arith.constant dense<0.000000e+00> : vector<9x64xf32>
    %161 = tpu.matmul %159, %160, %cst_76 {dimension_numbers = #tpu.dot_dimension_numbers<[1], [0], [0], [1], [0, 0, 1, 1], [], []>} : vector<9x64xbf16>, vector<64x64xbf16>, vector<9x64xf32> -> vector<9x64xf32>
    %162 = arith.addf %156, %161 : vector<9x64xf32>
    %163 = vector.extract_strided_slice %133 {offsets = [1, 2, 0], sizes = [3, 3, 64], strides = [1, 1, 1]} : vector<5x5x64xf32> to vector<3x3x64xf32>
    %164 = vector.shape_cast %163 : vector<3x3x64xf32> to vector<9x64xf32>
    %165 = arith.truncf %164 : vector<9x64xf32> to vector<9x64xbf16>
    %c320_77 = arith.constant 320 : index
    %c0_78 = arith.constant 0 : index
    %166 = vector.load %arg4[%c320_77, %c0_78] : memref<576x64xbf16, #tpu.memory_space<vmem>>, vector<64x64xbf16>
    %cst_79 = arith.constant dense<0.000000e+00> : vector<9x64xf32>
    %167 = tpu.matmul %165, %166, %cst_79 {dimension_numbers = #tpu.dot_dimension_numbers<[1], [0], [0], [1], [0, 0, 1, 1], [], []>} : vector<9x64xbf16>, vector<64x64xbf16>, vector<9x64xf32> -> vector<9x64xf32>
    %168 = arith.addf %162, %167 : vector<9x64xf32>
    %169 = vector.extract_strided_slice %133 {offsets = [2, 0, 0], sizes = [3, 3, 64], strides = [1, 1, 1]} : vector<5x5x64xf32> to vector<3x3x64xf32>
    %170 = vector.shape_cast %169 : vector<3x3x64xf32> to vector<9x64xf32>
    %171 = arith.truncf %170 : vector<9x64xf32> to vector<9x64xbf16>
    %c384_80 = arith.constant 384 : index
    %c0_81 = arith.constant 0 : index
    %172 = vector.load %arg4[%c384_80, %c0_81] : memref<576x64xbf16, #tpu.memory_space<vmem>>, vector<64x64xbf16>
    %cst_82 = arith.constant dense<0.000000e+00> : vector<9x64xf32>
    %173 = tpu.matmul %171, %172, %cst_82 {dimension_numbers = #tpu.dot_dimension_numbers<[1], [0], [0], [1], [0, 0, 1, 1], [], []>} : vector<9x64xbf16>, vector<64x64xbf16>, vector<9x64xf32> -> vector<9x64xf32>
    %174 = arith.addf %168, %173 : vector<9x64xf32>
    %175 = vector.extract_strided_slice %133 {offsets = [2, 1, 0], sizes = [3, 3, 64], strides = [1, 1, 1]} : vector<5x5x64xf32> to vector<3x3x64xf32>
    %176 = vector.shape_cast %175 : vector<3x3x64xf32> to vector<9x64xf32>
    %177 = arith.truncf %176 : vector<9x64xf32> to vector<9x64xbf16>
    %c448_83 = arith.constant 448 : index
    %c0_84 = arith.constant 0 : index
    %178 = vector.load %arg4[%c448_83, %c0_84] : memref<576x64xbf16, #tpu.memory_space<vmem>>, vector<64x64xbf16>
    %cst_85 = arith.constant dense<0.000000e+00> : vector<9x64xf32>
    %179 = tpu.matmul %177, %178, %cst_85 {dimension_numbers = #tpu.dot_dimension_numbers<[1], [0], [0], [1], [0, 0, 1, 1], [], []>} : vector<9x64xbf16>, vector<64x64xbf16>, vector<9x64xf32> -> vector<9x64xf32>
    %180 = arith.addf %174, %179 : vector<9x64xf32>
    %181 = vector.extract_strided_slice %133 {offsets = [2, 2, 0], sizes = [3, 3, 64], strides = [1, 1, 1]} : vector<5x5x64xf32> to vector<3x3x64xf32>
    %182 = vector.shape_cast %181 : vector<3x3x64xf32> to vector<9x64xf32>
    %183 = arith.truncf %182 : vector<9x64xf32> to vector<9x64xbf16>
    %c512 = arith.constant 512 : index
    %c0_86 = arith.constant 0 : index
    %184 = vector.load %arg4[%c512, %c0_86] : memref<576x64xbf16, #tpu.memory_space<vmem>>, vector<64x64xbf16>
    %cst_87 = arith.constant dense<0.000000e+00> : vector<9x64xf32>
    %185 = tpu.matmul %183, %184, %cst_87 {dimension_numbers = #tpu.dot_dimension_numbers<[1], [0], [0], [1], [0, 0, 1, 1], [], []>} : vector<9x64xbf16>, vector<64x64xbf16>, vector<9x64xf32> -> vector<9x64xf32>
    %186 = arith.addf %180, %185 : vector<9x64xf32>
    %c0_88 = arith.constant 0 : index
    %c0_89 = arith.constant 0 : index
    %187 = vector.load %arg7[%c0_88, %c0_89] : memref<1x64xf32, #tpu.memory_space<vmem>>, vector<1x64xf32>
    %188 = vector.broadcast %187 : vector<1x64xf32> to vector<9x64xf32>
    %189 = arith.addf %186, %188 : vector<9x64xf32>
    %c0_90 = arith.constant 0 : index
    %c0_91 = arith.constant 0 : index
    %c0_92 = arith.constant 0 : index
    %190 = vector.load %arg8[%c0_90, %c0_91, %c0_92] : memref<1x9x64xf32, #tpu.memory_space<vmem>>, vector<1x9x64xf32>
    %191 = vector.shape_cast %190 : vector<1x9x64xf32> to vector<9x64xf32>
    %192 = vector.shape_cast %189 : vector<9x64xf32> to vector<1x9x64xf32>
    tpu.vector_store %arg8[%c0_90, %c0_91, %c0_92], %192 {strides = array<i32>} : memref<1x9x64xf32, #tpu.memory_space<vmem>>, vector<1x9x64xf32>,
    return
  }
  func.func @transform_0(%arg0: i32) -> (i32, i32, i32, i32) {
    %c0_i32 = arith.constant 0 : i32
    %c0_i32_0 = arith.constant 0 : i32
    %c0_i32_1 = arith.constant 0 : i32
    %c0_i32_2 = arith.constant 0 : i32
    return %arg0, %c0_i32, %c0_i32_0, %c0_i32_1 : i32, i32, i32, i32
  }
  func.func @transform_1(%arg0: i32) -> (i32, i32) {
    %c0_i32 = arith.constant 0 : i32
    %c0_i32_0 = arith.constant 0 : i32
    %c0_i32_1 = arith.constant 0 : i32
    return %c0_i32, %c0_i32_0 : i32, i32
  }
  func.func @transform_2(%arg0: i32) -> (i32, i32) {
    %c0_i32 = arith.constant 0 : i32
    %c0_i32_0 = arith.constant 0 : i32
    %c0_i32_1 = arith.constant 0 : i32
    return %c0_i32, %c0_i32_0 : i32, i32
  }
  func.func @transform_3(%arg0: i32) -> (i32, i32) {
    %c0_i32 = arith.constant 0 : i32
    %c0_i32_0 = arith.constant 0 : i32
    %c0_i32_1 = arith.constant 0 : i32
    return %c0_i32, %c0_i32_0 : i32, i32
  }
  func.func @transform_4(%arg0: i32) -> (i32, i32) {
    %c0_i32 = arith.constant 0 : i32
    %c0_i32_0 = arith.constant 0 : i32
    %c0_i32_1 = arith.constant 0 : i32
    return %c0_i32, %c0_i32_0 : i32, i32
  }
  func.func @transform_5(%arg0: i32) -> (i32, i32) {
    %c0_i32 = arith.constant 0 : i32
    %c0_i32_0 = arith.constant 0 : i32
    %c0_i32_1 = arith.constant 0 : i32
    return %c0_i32, %c0_i32_0 : i32, i32
  }
  func.func @transform_6(%arg0: i32) -> (i32, i32) {
    %c0_i32 = arith.constant 0 : i32
    %c0_i32_0 = arith.constant 0 : i32
    %c0_i32_1 = arith.constant 0 : i32
    return %c0_i32, %c0_i32_0 : i32, i32
  }
  func.func @transform_7(%arg0: i32) -> (i32, i32, i32) {
    %c0_i32 = arith.constant 0 : i32
    %c0_i32_0 = arith.constant 0 : i32
    %c0_i32_1 = arith.constant 0 : i32
    return %arg0, %c0_i32, %c0_i32_0 : i32, i32, i32
  }
}

</mosaic_0001>

<llo_original>
// kernel: picture_processor_forward.1
$region0: #{picture_processor_forward.1}
  #allocation0 [shape = 'u32[]', space=smem, size = 0x4, offset = 0x4, fixed_abs, tag = 'smem constant byte address 0x4 - core index']
  #allocation1 [shape = 'u32[72,128]{1,0:T(1,128)}', space=vmem, size = 0x9000, scoped, tag = 'internal scratch']
  %s0 = inlined_call_operand.vmem [shape: bf16[2,13,13,64], index: 0, kind: input, shape index: {}]
  %s1 = inlined_call_operand.vmem [shape: bf16[256,32], index: 1, kind: input, shape index: {}]
  %s2 = inlined_call_operand.vmem [shape: bf16[512,64], index: 2, kind: input, shape index: {}]
  %s3 = inlined_call_operand.vmem [shape: bf16[576,64], index: 3, kind: input, shape index: {}]
  %s4 = inlined_call_operand.vmem [shape: f32[1,32], index: 4, kind: input, shape index: {}]
  %s5 = inlined_call_operand.vmem [shape: f32[1,64], index: 5, kind: input, shape index: {}]
  %s6 = inlined_call_operand.vmem [shape: f32[1,64], index: 6, kind: input, shape index: {}]
  %s7 = inlined_call_operand.vmem [shape: f32[2,9,64], index: 7, kind: output, shape index: {}]
  %s8 = sld [smem:[#allocation0]]
  $region61: #{picture_processor_forward.1} parent=0
    _
  %s10 = ssub.s32 1, %s8
  %s11 = scalar_select 0, %s10, %s8
  loop: start=0, step=1, limit=4
  $region2: #{picture_processor_forward.1} parent=0 // loop_pre_header
    _
  $region3: #{picture_processor_forward.1} parent=0 // loop_header
    %s13 = sphi 0, %s17
    %p14 = scmp.ge.s32.totalorder %s13, 4
    %s23 = sphi 0, %s25
    %s26 = sphi 0, %s23
    %s27 = sphi 0, %s26
    %s43 = sphi 0, %s27
    %s47 = sphi 0, %s47
    %s49 = sphi 0, %s47
    %s50 = sphi 0, %s49
    %s64 = sphi 0, %s50
    %s68 = sphi 0, %s68
    %s70 = sphi 0, %s68
    %s71 = sphi 0, %s70
    %s85 = sphi 0, %s71
    %s89 = sphi 0, %s89
    %s91 = sphi 0, %s89
    %s92 = sphi 0, %s91
    %s106 = sphi 0, %s92
    %s110 = sphi 0, %s110
    %s112 = sphi 0, %s110
    %s113 = sphi 0, %s112
    %s127 = sphi 0, %s113
    %s131 = sphi 0, %s131
    %s133 = sphi 0, %s131
    %s134 = sphi 0, %s133
    %s148 = sphi 0, %s134
    %s152 = sphi 0, %s152
    %s154 = sphi 0, %s152
    %s155 = sphi 0, %s154
    %s169 = sphi 0, %s155
    %s175 = sphi 0, %s177
    %s178 = sphi 0, %s175
    %s179 = sphi 0, %s178
    %s195 = sphi 0, %s179
  $region4: #{picture_processor_forward.1} parent=0 // loop_header_branch
    %16 = sbr.rel (%p14) target = $region8
  $region5: #{picture_processor_forward.1} parent=0 // loop_body
    %s18 = ssub.s32 %s13, 1
    %s19 = ssub.s32 %s13, 2
    %s20 = sadd.s32 %s13, 1
    %s21 = ssub.s32 %s13, %s20
    %p22 = scmp.eq.s32.totalorder %s21, 0
    %s24 = sadd.s32 %s23, 1
    %s25 = scalar_select %p22, %s23, %s24
    %p28 = pneg %p22
    %p29 = scmp.eq.s32.totalorder %s13, 1
    %p30 = por %p28, %p29
    %p31 = scmp.ne.s32.totalorder %s23, %s26
    %p32 = scmp.eq.s32.totalorder %s13, 0
    %p33 = por %p31, %p32
    %p34 = scmp.ne.s32.totalorder %s23, %s26
    %p35 = scmp.eq.s32.totalorder %s18, 1
    %p36 = por %p34, %p35
    %p37 = scmp.ne.s32.totalorder %s26, %s27
    %p38 = scmp.eq.s32.totalorder %s18, 0
    %p39 = por %p37, %p38
    %p40 = scmp.ne.s32.totalorder %s26, %s27
    %p41 = scmp.eq.s32.totalorder %s19, 1
    %p42 = por %p40, %p41
    %p44 = scmp.ne.s32.totalorder %s27, %s43
    %p45 = scmp.eq.s32.totalorder %s19, 0
    %p46 = por %p44, %p45
    %s48 = sadd.s32 %s47, 1
    %p51 = scmp.eq.s32.totalorder %s13, 1
    %p52 = scmp.ne.s32.totalorder %s47, %s49
    %p53 = scmp.eq.s32.totalorder %s13, 0
    %p54 = por %p52, %p53
    %p55 = scmp.ne.s32.totalorder %s47, %s49
    %p56 = scmp.eq.s32.totalorder %s18, 1
    %p57 = por %p55, %p56
    %p58 = scmp.ne.s32.totalorder %s49, %s50
    %p59 = scmp.eq.s32.totalorder %s18, 0
    %p60 = por %p58, %p59
    %p61 = scmp.ne.s32.totalorder %s49, %s50
    %p62 = scmp.eq.s32.totalorder %s19, 1
    %p63 = por %p61, %p62
    %p65 = scmp.ne.s32.totalorder %s50, %s64
    %p66 = scmp.eq.s32.totalorder %s19, 0
    %p67 = por %p65, %p66
    %s69 = sadd.s32 %s68, 1
    %p72 = scmp.eq.s32.totalorder %s13, 1
    %p73 = scmp.ne.s32.totalorder %s68, %s70
    %p74 = scmp.eq.s32.totalorder %s13, 0
    %p75 = por %p73, %p74
    %p76 = scmp.ne.s32.totalorder %s68, %s70
    %p77 = scmp.eq.s32.totalorder %s18, 1
    %p78 = por %p76, %p77
    %p79 = scmp.ne.s32.totalorder %s70, %s71
    %p80 = scmp.eq.s32.totalorder %s18, 0
    %p81 = por %p79, %p80
    %p82 = scmp.ne.s32.totalorder %s70, %s71
    %p83 = scmp.eq.s32.totalorder %s19, 1
    %p84 = por %p82, %p83
    %p86 = scmp.ne.s32.totalorder %s71, %s85
    %p87 = scmp.eq.s32.totalorder %s19, 0
    %p88 = por %p86, %p87
    %s90 = sadd.s32 %s89, 1
    %p93 = scmp.eq.s32.totalorder %s13, 1
    %p94 = scmp.ne.s32.totalorder %s89, %s91
    %p95 = scmp.eq.s32.totalorder %s13, 0
    %p96 = por %p94, %p95
    %p97 = scmp.ne.s32.totalorder %s89, %s91
    %p98 = scmp.eq.s32.totalorder %s18, 1
    %p99 = por %p97, %p98
    %p100 = scmp.ne.s32.totalorder %s91, %s92
    %p101 = scmp.eq.s32.totalorder %s18, 0
    %p102 = por %p100, %p101
    %p103 = scmp.ne.s32.totalorder %s91, %s92
    %p104 = scmp.eq.s32.totalorder %s19, 1
    %p105 = por %p103, %p104
    %p107 = scmp.ne.s32.totalorder %s92, %s106
    %p108 = scmp.eq.s32.totalorder %s19, 0
    %p109 = por %p107, %p108
    %s111 = sadd.s32 %s110, 1
    %p114 = scmp.eq.s32.totalorder %s13, 1
    %p115 = scmp.ne.s32.totalorder %s110, %s112
    %p116 = scmp.eq.s32.totalorder %s13, 0
    %p117 = por %p115, %p116
    %p118 = scmp.ne.s32.totalorder %s110, %s112
    %p119 = scmp.eq.s32.totalorder %s18, 1
    %p120 = por %p118, %p119
    %p121 = scmp.ne.s32.totalorder %s112, %s113
    %p122 = scmp.eq.s32.totalorder %s18, 0
    %p123 = por %p121, %p122
    %p124 = scmp.ne.s32.totalorder %s112, %s113
    %p125 = scmp.eq.s32.totalorder %s19, 1
    %p126 = por %p124, %p125
    %p128 = scmp.ne.s32.totalorder %s113, %s127
    %p129 = scmp.eq.s32.totalorder %s19, 0
    %p130 = por %p128, %p129
    %s132 = sadd.s32 %s131, 1
    %p135 = scmp.eq.s32.totalorder %s13, 1
    %p136 = scmp.ne.s32.totalorder %s131, %s133
    %p137 = scmp.eq.s32.totalorder %s13, 0
    %p138 = por %p136, %p137
    %p139 = scmp.ne.s32.totalorder %s131, %s133
    %p140 = scmp.eq.s32.totalorder %s18, 1
    %p141 = por %p139, %p140
    %p142 = scmp.ne.s32.totalorder %s133, %s134
    %p143 = scmp.eq.s32.totalorder %s18, 0
    %p144 = por %p142, %p143
    %p145 = scmp.ne.s32.totalorder %s133, %s134
    %p146 = scmp.eq.s32.totalorder %s19, 1
    %p147 = por %p145, %p146
    %p149 = scmp.ne.s32.totalorder %s134, %s148
    %p150 = scmp.eq.s32.totalorder %s19, 0
    %p151 = por %p149, %p150
    %s153 = sadd.s32 %s152, 1
    %p156 = scmp.eq.s32.totalorder %s13, 1
    %p157 = scmp.ne.s32.totalorder %s152, %s154
    %p158 = scmp.eq.s32.totalorder %s13, 0
    %p159 = por %p157, %p158
    %p160 = scmp.ne.s32.totalorder %s152, %s154
    %p161 = scmp.eq.s32.totalorder %s18, 1
    %p162 = por %p160, %p161
    %p163 = scmp.ne.s32.totalorder %s154, %s155
    %p164 = scmp.eq.s32.totalorder %s18, 0
    %p165 = por %p163, %p164
    %p166 = scmp.ne.s32.totalorder %s154, %s155
    %p167 = scmp.eq.s32.totalorder %s19, 1
    %p168 = por %p166, %p167
    %p170 = scmp.ne.s32.totalorder %s155, %s169
    %p171 = scmp.eq.s32.totalorder %s19, 0
    %p172 = por %p170, %p171
    %s173 = ssub.s32 %s13, %s20
    %p174 = scmp.eq.s32.totalorder %s173, 0
    %s176 = sadd.s32 %s175, 1
    %s177 = scalar_select %p174, %s175, %s176
    %p180 = pneg %p174
    %p181 = scmp.eq.s32.totalorder %s13, 1
    %p182 = por %p180, %p181
    %p183 = scmp.ne.s32.totalorder %s175, %s178
    %p184 = scmp.eq.s32.totalorder %s13, 0
    %p185 = por %p183, %p184
    %p186 = scmp.ne.s32.totalorder %s175, %s178
    %p187 = scmp.eq.s32.totalorder %s18, 1
    %p188 = por %p186, %p187
    %p189 = scmp.ne.s32.totalorder %s178, %s179
    %p190 = scmp.eq.s32.totalorder %s18, 0
    %p191 = por %p189, %p190
    %p192 = scmp.ne.s32.totalorder %s178, %s179
    %p193 = scmp.eq.s32.totalorder %s19, 1
    %p194 = por %p192, %p193
    %p196 = scmp.ne.s32.totalorder %s179, %s195
    %p197 = scmp.eq.s32.totalorder %s19, 0
    %p198 = por %p196, %p197
    %p199 = scmp.le.s32.totalorder 1, %s13
    %p200 = scmp.lt.s32.totalorder %s13, 3
    %p201 = pnand %p199, %p200
    %p202 = pneg %p201
    // Predicated region
    $region9: #{picture_processor_forward.1} parent=5 // pred_check
      _
    $region10: #{picture_processor_forward.1} parent=5 // pred_check_branch
      %204 = sbr.rel (%p201) target = $region12
    $region11: #{picture_processor_forward.1} parent=5 // pred_region
      %s205 = ssub.s32 %s13, 1
      // Predicated region
      $region13: #{picture_processor_forward.1} parent=11 // pred_check
        %p206 = pneg %p60
      $region14: #{picture_processor_forward.1} parent=11 // pred_check_branch
        %208 = sbr.rel (%p206) target = $region16
      $region15: #{picture_processor_forward.1} parent=11 // pred_region
        _
      $region16: #{picture_processor_forward.1} parent=11 // pred_fallthru
        _
      // Predicated region
      $region17: #{picture_processor_forward.1} parent=11 // pred_check
        %p209 = pneg %p81
      $region18: #{picture_processor_forward.1} parent=11 // pred_check_branch
        %211 = sbr.rel (%p209) target = $region20
      $region19: #{picture_processor_forward.1} parent=11 // pred_region
        _
      $region20: #{picture_processor_forward.1} parent=11 // pred_fallthru
        _
      // Predicated region
      $region21: #{picture_processor_forward.1} parent=11 // pred_check
        %p212 = pneg %p102
      $region22: #{picture_processor_forward.1} parent=11 // pred_check_branch
        %214 = sbr.rel (%p212) target = $region24
      $region23: #{picture_processor_forward.1} parent=11 // pred_region
        _
      $region24: #{picture_processor_forward.1} parent=11 // pred_fallthru
        _
      // Predicated region
      $region25: #{picture_processor_forward.1} parent=11 // pred_check
        %p215 = pneg %p123
      $region26: #{picture_processor_forward.1} parent=11 // pred_check_branch
        %217 = sbr.rel (%p215) target = $region28
      $region27: #{picture_processor_forward.1} parent=11 // pred_region
        _
      $region28: #{picture_processor_forward.1} parent=11 // pred_fallthru
        _
      // Predicated region
      $region29: #{picture_processor_forward.1} parent=11 // pred_check
        %p218 = pneg %p144
      $region30: #{picture_processor_forward.1} parent=11 // pred_check_branch
        %220 = sbr.rel (%p218) target = $region32
      $region31: #{picture_processor_forward.1} parent=11 // pred_region
        _
      $region32: #{picture_processor_forward.1} parent=11 // pred_fallthru
        _
      // Predicated region
      $region33: #{picture_processor_forward.1} parent=11 // pred_check
        %p221 = pneg %p165
      $region34: #{picture_processor_forward.1} parent=11 // pred_check_branch
        %223 = sbr.rel (%p221) target = $region36
      $region35: #{picture_processor_forward.1} parent=11 // pred_region
        _
      $region36: #{picture_processor_forward.1} parent=11 // pred_fallthru
        _
    $region12: #{picture_processor_forward.1} parent=5 // pred_fallthru
      _
    %p224 = scmp.lt.s32.totalorder %s13, 2
    // Predicated region
    $region37: #{picture_processor_forward.1} parent=5 // pred_check
      %p225 = pneg %p224
    $region38: #{picture_processor_forward.1} parent=5 // pred_check_branch
      %227 = sbr.rel (%p225) target = $region40
    $region39: #{picture_processor_forward.1} parent=5 // pred_region
      // Predicated region
      $region41: #{picture_processor_forward.1} parent=39 // pred_check
        %p228 = pneg %p33
      $region42: #{picture_processor_forward.1} parent=39 // pred_check_branch
        %230 = sbr.rel (%p228) target = $region44
      $region43: #{picture_processor_forward.1} parent=39 // pred_region
        %p231 = scmp.lt.s32.totalorder %s13, 1
        %s232 = scalar_select %p231, %s13, 1
        %s233 = smul.addr %s232, 26
        %s234 = smul.addr %s233, 4
        %s235 = scalar_lea.vmem %s0, %s234
      $region44: #{picture_processor_forward.1} parent=39 // pred_fallthru
        _
    $region40: #{picture_processor_forward.1} parent=5 // pred_fallthru
      _
    %p236 = scmp.le.s32.totalorder 1, %s13
    %p237 = scmp.lt.s32.totalorder %s13, 3
    %p238 = pnand %p236, %p237
    %p239 = pneg %p238
    // Predicated region
    $region45: #{picture_processor_forward.1} parent=5 // pred_check
      _
    $region46: #{picture_processor_forward.1} parent=5 // pred_check_branch
      %241 = sbr.rel (%p238) target = $region48
    $region47: #{picture_processor_forward.1} parent=5 // pred_region
      %s242 = ssub.s32 %s13, 1
      %p243 = scmp.lt.s32.totalorder %s18, 1
      %s244 = scalar_select %p243, %s18, 1
      %s245 = smul.addr %s244, 26
      %s246 = smul.addr %s245, 4
      %s247 = scalar_lea.vmem %s0, %s246
      %p248 = pneg %p39
      %p249 = pneg %p36
      %p250 = pneg %p60
      %p251 = pneg %p57
      %p252 = pneg %p81
      %p253 = pneg %p78
      %p254 = pneg %p102
      %p255 = pneg %p99
      %p256 = pneg %p123
      %p257 = pneg %p120
      %p258 = pneg %p144
      %p259 = pneg %p141
      %p260 = pneg %p165
      %p261 = pneg %p162
      %p262 = pneg %p191
      %p263 = pneg %p188
      %p264 = scmp.lt.s32.totalorder %s18, 1
      %s265 = scalar_select %p264, %s18, 1
      %s266 = smul.addr %s265, 2
      %s267 = smul.addr %s266, 8
      %s268 = scalar_lea.vmem %s7, %s267
      %p269 = scmp.lt.s32.totalorder %s18, 1
      %s270 = scalar_select %p269, %s18, 1
      %s271 = smul.addr %s270, 26
      %s272 = smul.addr %s271, 4
      %s273 = scalar_lea.vmem %s0, %s272
      %p274 = scmp.lt.s32.totalorder %s18, 1
      %s275 = scalar_select %p274, %s18, 1
      %s276 = smul.addr %s275, 2
      %s277 = smul.addr %s276, 8
      %s278 = scalar_lea.vmem %s7, %s277
      %v280 = vld [vmem:[%s273] sm:$0xf]
      %v281 = vld [vmem:[%s273 + $0x4] sm:$0x3]
      %v282 = vld [vmem:[%s273 + $0x8] sm:$0xf]
      %v283 = vld [vmem:[%s273 + $0xc] sm:$0x3]
      %v284 = vld [vmem:[%s273 + $0x10] sm:$0xf]
      %v285 = vld [vmem:[%s273 + $0x14] sm:$0x3]
      %v286 = vld [vmem:[%s273 + $0x18] sm:$0xf]
      %v287 = vld [vmem:[%s273 + $0x1c] sm:$0x3]
      %v288 = vld [vmem:[%s273 + $0x20] sm:$0xf]
      %v289 = vld [vmem:[%s273 + $0x24] sm:$0x3]
      %v290 = vld [vmem:[%s273 + $0x28] sm:$0xf]
      %v291 = vld [vmem:[%s273 + $0x2c] sm:$0x3]
      %v292 = vld [vmem:[%s273 + $0x30] sm:$0xf]
      %v293 = vld [vmem:[%s273 + $0x34] sm:$0x3]
      %v294 = vld [vmem:[%s273 + $0x38] sm:$0xf]
      %v295 = vld [vmem:[%s273 + $0x3c] sm:$0x3]
      %v296 = vld [vmem:[%s273 + $0x40] sm:$0xf]
      %v297 = vld [vmem:[%s273 + $0x44] sm:$0x3]
      %v298 = vld [vmem:[%s273 + $0x48] sm:$0xf]
      %v299 = vld [vmem:[%s273 + $0x4c] sm:$0x3]
      %v300 = vld [vmem:[%s273 + $0x50] sm:$0xf]
      %v301 = vld [vmem:[%s273 + $0x54] sm:$0x3]
      %v302 = vld [vmem:[%s273 + $0x58] sm:$0xf]
      %v303 = vld [vmem:[%s273 + $0x5c] sm:$0x3]
      %v328 = vrot.slane %v280, 2
      %v329 = vrot.slane %v281, 2
      %v330 = vrot.slane %v282, 2
      %v331 = vrot.slane %v283, 2
      %v332 = vrot.slane %v284, 2
      %v333 = vrot.slane %v285, 2
      %v334 = vrot.slane %v286, 2
      %v335 = vrot.slane %v287, 2
      %v336 = vrot.slane %v288, 2
      %v337 = vrot.slane %v289, 2
      %v338 = vrot.slane %v290, 2
      %v339 = vrot.slane %v291, 2
      %v340 = vrot.slane %v292, 2
      %v341 = vrot.slane %v293, 2
      %v342 = vrot.slane %v294, 2
      %v343 = vrot.slane %v295, 2
      %v344 = vrot.slane %v296, 2
      %v345 = vrot.slane %v297, 2
      %v346 = vrot.slane %v298, 2
      %v347 = vrot.slane %v299, 2
      %v348 = vrot.slane %v300, 2
      %v349 = vrot.slane %v301, 2
      %v350 = vrot.slane %v302, 2
      %v351 = vrot.slane %v303, 2
      %vm352 = vcmask 1041408
      %v355 = vsel %vm352, %v280, %v328
      %vm356 = vcmask 1043458
      %v357 = vsel %vm356, %v280, %v328
      %v359 = vrot.slane %v357, 2
      %v362 = vsel %vm352, %v281, %v329
      %v365 = vsel %vm352, %v282, %v330
      %v366 = vsel %vm356, %v282, %v330
      %v368 = vrot.slane %v366, 2
      %v371 = vsel %vm352, %v283, %v331
      %v374 = vsel %vm352, %v284, %v332
      %v375 = vsel %vm356, %v284, %v332
      %v377 = vrot.slane %v375, 2
      %v380 = vsel %vm352, %v285, %v333
      %v383 = vsel %vm352, %v286, %v334
      %v384 = vsel %vm356, %v286, %v334
      %v386 = vrot.slane %v384, 2
      %v389 = vsel %vm352, %v287, %v335
      %v392 = vsel %vm352, %v288, %v336
      %v393 = vsel %vm356, %v288, %v336
      %v395 = vrot.slane %v393, 2
      %v398 = vsel %vm352, %v289, %v337
      %v401 = vsel %vm352, %v290, %v338
      %v402 = vsel %vm356, %v290, %v338
      %v404 = vrot.slane %v402, 2
      %v407 = vsel %vm352, %v291, %v339
      %v410 = vsel %vm352, %v292, %v340
      %v411 = vsel %vm356, %v292, %v340
      %v413 = vrot.slane %v411, 2
      %v416 = vsel %vm352, %v293, %v341
      %v419 = vsel %vm352, %v294, %v342
      %v420 = vsel %vm356, %v294, %v342
      %v422 = vrot.slane %v420, 2
      %v425 = vsel %vm352, %v295, %v343
      %v428 = vsel %vm352, %v296, %v344
      %v429 = vsel %vm356, %v296, %v344
      %v431 = vrot.slane %v429, 2
      %v434 = vsel %vm352, %v297, %v345
      %v437 = vsel %vm352, %v298, %v346
      %v438 = vsel %vm356, %v298, %v346
      %v440 = vrot.slane %v438, 2
      %v443 = vsel %vm352, %v299, %v347
      %v446 = vsel %vm352, %v300, %v348
      %v447 = vsel %vm356, %v300, %v348
      %v449 = vrot.slane %v447, 2
      %v452 = vsel %vm352, %v301, %v349
      %v455 = vsel %vm352, %v302, %v350
      %v456 = vsel %vm356, %v302, %v350
      %v458 = vrot.slane %v456, 2
      %v461 = vsel %vm352, %v303, %v351
      %v462 = vld [vmem:[%s1] sm:$0xf]
      %v463 = vld [vmem:[%s1 + $0x4] sm:$0xf]
      %v464 = vld [vmem:[%s1 + $0x8] sm:$0xf]
      %v465 = vld [vmem:[%s1 + $0xc] sm:$0xf]
      %v466 = vld [vmem:[%s1 + $0x10] sm:$0xf]
      %v467 = vld [vmem:[%s1 + $0x14] sm:$0xf]
      %v468 = vld [vmem:[%s1 + $0x18] sm:$0xf]
      %v469 = vld [vmem:[%s1 + $0x1c] sm:$0xf]
      %v470 = vld [vmem:[%s273 + $0x4] sm:$0x7]
      %v471 = vld [vmem:[%s273 + $0xc] sm:$0x7]
      %v472 = vld [vmem:[%s273 + $0x14] sm:$0x7]
      %v473 = vld [vmem:[%s273 + $0x1c] sm:$0x7]
      %v474 = vld [vmem:[%s273 + $0x24] sm:$0x7]
      %v475 = vld [vmem:[%s273 + $0x2c] sm:$0x7]
      %v476 = vld [vmem:[%s273 + $0x34] sm:$0x7]
      %v477 = vld [vmem:[%s273 + $0x3c] sm:$0x7]
      %v478 = vld [vmem:[%s273 + $0x44] sm:$0x7]
      %v479 = vld [vmem:[%s273 + $0x4c] sm:$0x7]
      %v480 = vld [vmem:[%s273 + $0x54] sm:$0x7]
      %v481 = vld [vmem:[%s273 + $0x5c] sm:$0x7]
      %v494 = vrot.slane %v470, 2
      %v495 = vrot.slane %v471, 2
      %v496 = vrot.slane %v472, 2
      %v497 = vrot.slane %v473, 2
      %v498 = vrot.slane %v474, 2
      %v499 = vrot.slane %v475, 2
      %v500 = vrot.slane %v476, 2
      %v501 = vrot.slane %v477, 2
      %v502 = vrot.slane %v478, 2
      %v503 = vrot.slane %v479, 2
      %v504 = vrot.slane %v480, 2
      %v505 = vrot.slane %v481, 2
      %v508 = vsel %vm352, %v470, %v494
      %v509 = vsel %vm356, %v470, %v494
      %v511 = vrot.slane %v509, 2
      %v514 = vsel %vm352, %v471, %v495
      %v515 = vsel %vm356, %v471, %v495
      %v517 = vrot.slane %v515, 2
      %v520 = vsel %vm352, %v472, %v496
      %v521 = vsel %vm356, %v472, %v496
      %v523 = vrot.slane %v521, 2
      %v526 = vsel %vm352, %v473, %v497
      %v527 = vsel %vm356, %v473, %v497
      %v529 = vrot.slane %v527, 2
      %v532 = vsel %vm352, %v474, %v498
      %v533 = vsel %vm356, %v474, %v498
      %v535 = vrot.slane %v533, 2
      %v538 = vsel %vm352, %v475, %v499
      %v539 = vsel %vm356, %v475, %v499
      %v541 = vrot.slane %v539, 2
      %v544 = vsel %vm352, %v476, %v500
      %v545 = vsel %vm356, %v476, %v500
      %v547 = vrot.slane %v545, 2
      %v550 = vsel %vm352, %v477, %v501
      %v551 = vsel %vm356, %v477, %v501
      %v553 = vrot.slane %v551, 2
      %v556 = vsel %vm352, %v478, %v502
      %v557 = vsel %vm356, %v478, %v502
      %v559 = vrot.slane %v557, 2
      %v562 = vsel %vm352, %v479, %v503
      %v563 = vsel %vm356, %v479, %v503
      %v565 = vrot.slane %v563, 2
      %v568 = vsel %vm352, %v480, %v504
      %v569 = vsel %vm356, %v480, %v504
      %v571 = vrot.slane %v569, 2
      %v574 = vsel %vm352, %v481, %v505
      %v575 = vsel %vm356, %v481, %v505
      %v577 = vrot.slane %v575, 2
      %vm578 = vsmask.f32 1280
      %vm579 = vsmask.f32 3336
      %vm580 = vmor %vm578, %vm579
      %vm581 = vsmask.f32 5392
      %vm582 = vmor %vm580, %vm581
      %vm583 = vsmask.f32 7448
      %vm584 = vmor %vm582, %vm583
      %v585 = vshrl.u32 %v355, 16
      %v587 = vrot.slane %v585, 6
      %v588 = vshll.u32 %v355, 16
      %v590 = vrot.slane %v588, 7
      %v591 = vor.u32 %v587, %v590
      %v592 = vrot.slane %v591, 2
      %v594 = vshll.u32 %v359, 16
      %v596 = vrot.slane %v594, 7
      %v597 = vsel %vm584, %v592, %v596
      %v598 = vshrl.u32 %v359, 16
      %v600 = vrot.slane %v598, 6
      %v601 = vor.u32 %v600, %v596
      %v602 = vrot.slane %v601, 2
      %v603 = vshll.u32 %v508, 16
      %v605 = vrot.slane %v603, 7
      %v606 = vsel %vm584, %v602, %v605
      %v607 = vshrl.u32 %v508, 16
      %v609 = vrot.slane %v607, 6
      %v610 = vor.u32 %v609, %v605
      %v611 = vrot.slane %v610, 2
      %v613 = vshll.u32 %v511, 16
      %v615 = vrot.slane %v613, 7
      %v616 = vsel %vm584, %v611, %v615
      %v617 = vshrl.u32 %v365, 16
      %v619 = vrot.slane %v617, 6
      %v620 = vshll.u32 %v365, 16
      %v622 = vrot.slane %v620, 7
      %v623 = vor.u32 %v619, %v622
      %v624 = vrot.slane %v623, 2
      %v626 = vshll.u32 %v368, 16
      %v628 = vrot.slane %v626, 7
      %v629 = vsel %vm584, %v624, %v628
      %v630 = vshrl.u32 %v368, 16
      %v632 = vrot.slane %v630, 6
      %v633 = vor.u32 %v632, %v628
      %v634 = vrot.slane %v633, 2
      %v635 = vshll.u32 %v514, 16
      %v637 = vrot.slane %v635, 7
      %v638 = vsel %vm584, %v634, %v637
      %v639 = vshrl.u32 %v514, 16
      %v641 = vrot.slane %v639, 6
      %v642 = vor.u32 %v641, %v637
      %v643 = vrot.slane %v642, 2
      %v645 = vshll.u32 %v517, 16
      %v647 = vrot.slane %v645, 7
      %v648 = vsel %vm584, %v643, %v647
      %v649 = vshrl.u32 %v374, 16
      %v651 = vrot.slane %v649, 6
      %v652 = vshll.u32 %v374, 16
      %v654 = vrot.slane %v652, 7
      %v655 = vor.u32 %v651, %v654
      %v656 = vrot.slane %v655, 2
      %v658 = vshll.u32 %v377, 16
      %v660 = vrot.slane %v658, 7
      %v661 = vsel %vm584, %v656, %v660
      %v662 = vshrl.u32 %v377, 16
      %v664 = vrot.slane %v662, 6
      %v665 = vor.u32 %v664, %v660
      %v666 = vrot.slane %v665, 2
      %v667 = vshll.u32 %v520, 16
      %v669 = vrot.slane %v667, 7
      %v670 = vsel %vm584, %v666, %v669
      %v671 = vshrl.u32 %v520, 16
      %v673 = vrot.slane %v671, 6
      %v674 = vor.u32 %v673, %v669
      %v675 = vrot.slane %v674, 2
      %v677 = vshll.u32 %v523, 16
      %v679 = vrot.slane %v677, 7
      %v680 = vsel %vm584, %v675, %v679
      %v681 = vshrl.u32 %v383, 16
      %v683 = vrot.slane %v681, 6
      %v684 = vshll.u32 %v383, 16
      %v686 = vrot.slane %v684, 7
      %v687 = vor.u32 %v683, %v686
      %v688 = vrot.slane %v687, 2
      %v690 = vshll.u32 %v386, 16
      %v692 = vrot.slane %v690, 7
      %v693 = vsel %vm584, %v688, %v692
      %v694 = vshrl.u32 %v386, 16
      %v696 = vrot.slane %v694, 6
      %v697 = vor.u32 %v696, %v692
      %v698 = vrot.slane %v697, 2
      %v699 = vshll.u32 %v526, 16
      %v701 = vrot.slane %v699, 7
      %v702 = vsel %vm584, %v698, %v701
      %v703 = vshrl.u32 %v526, 16
      %v705 = vrot.slane %v703, 6
      %v706 = vor.u32 %v705, %v701
      %v707 = vrot.slane %v706, 2
      %v709 = vshll.u32 %v529, 16
      %v711 = vrot.slane %v709, 7
      %v712 = vsel %vm584, %v707, %v711
      %v713 = vshrl.u32 %v392, 16
      %v715 = vrot.slane %v713, 6
      %v716 = vshll.u32 %v392, 16
      %v718 = vrot.slane %v716, 7
      %v719 = vor.u32 %v715, %v718
      %v720 = vrot.slane %v719, 2
      %v722 = vshll.u32 %v395, 16
      %v724 = vrot.slane %v722, 7
      %v725 = vsel %vm584, %v720, %v724
      %v726 = vshrl.u32 %v395, 16
      %v728 = vrot.slane %v726, 6
      %v729 = vor.u32 %v728, %v724
      %v730 = vrot.slane %v729, 2
      %v731 = vshll.u32 %v532, 16
      %v733 = vrot.slane %v731, 7
      %v734 = vsel %vm584, %v730, %v733
      %v735 = vshrl.u32 %v532, 16
      %v737 = vrot.slane %v735, 6
      %v738 = vor.u32 %v737, %v733
      %v739 = vrot.slane %v738, 2
      %v741 = vshll.u32 %v535, 16
      %v743 = vrot.slane %v741, 7
      %v744 = vsel %vm584, %v739, %v743
      %v745 = vshrl.u32 %v401, 16
      %v747 = vrot.slane %v745, 6
      %v748 = vshll.u32 %v401, 16
      %v750 = vrot.slane %v748, 7
      %v751 = vor.u32 %v747, %v750
      %v752 = vrot.slane %v751, 2
      %v754 = vshll.u32 %v404, 16
      %v756 = vrot.slane %v754, 7
      %v757 = vsel %vm584, %v752, %v756
      %v758 = vshrl.u32 %v404, 16
      %v760 = vrot.slane %v758, 6
      %v761 = vor.u32 %v760, %v756
      %v762 = vrot.slane %v761, 2
      %v763 = vshll.u32 %v538, 16
      %v765 = vrot.slane %v763, 7
      %v766 = vsel %vm584, %v762, %v765
      %v767 = vshrl.u32 %v538, 16
      %v769 = vrot.slane %v767, 6
      %v770 = vor.u32 %v769, %v765
      %v771 = vrot.slane %v770, 2
      %v773 = vshll.u32 %v541, 16
      %v775 = vrot.slane %v773, 7
      %v776 = vsel %vm584, %v771, %v775
      %v777 = vshrl.u32 %v410, 16
      %v779 = vrot.slane %v777, 6
      %v780 = vshll.u32 %v410, 16
      %v782 = vrot.slane %v780, 7
      %v783 = vor.u32 %v779, %v782
      %v784 = vrot.slane %v783, 2
      %v786 = vshll.u32 %v413, 16
      %v788 = vrot.slane %v786, 7
      %v789 = vsel %vm584, %v784, %v788
      %v790 = vshrl.u32 %v413, 16
      %v792 = vrot.slane %v790, 6
      %v793 = vor.u32 %v792, %v788
      %v794 = vrot.slane %v793, 2
      %v795 = vshll.u32 %v544, 16
      %v797 = vrot.slane %v795, 7
      %v798 = vsel %vm584, %v794, %v797
      %v799 = vshrl.u32 %v544, 16
      %v801 = vrot.slane %v799, 6
      %v802 = vor.u32 %v801, %v797
      %v803 = vrot.slane %v802, 2
      %v805 = vshll.u32 %v547, 16
      %v807 = vrot.slane %v805, 7
      %v808 = vsel %vm584, %v803, %v807
      %v809 = vshrl.u32 %v419, 16
      %v811 = vrot.slane %v809, 6
      %v812 = vshll.u32 %v419, 16
      %v814 = vrot.slane %v812, 7
      %v815 = vor.u32 %v811, %v814
      %v816 = vrot.slane %v815, 2
      %v818 = vshll.u32 %v422, 16
      %v820 = vrot.slane %v818, 7
      %v821 = vsel %vm584, %v816, %v820
      %v822 = vshrl.u32 %v422, 16
      %v824 = vrot.slane %v822, 6
      %v825 = vor.u32 %v824, %v820
      %v826 = vrot.slane %v825, 2
      %v827 = vshll.u32 %v550, 16
      %v829 = vrot.slane %v827, 7
      %v830 = vsel %vm584, %v826, %v829
      %v831 = vshrl.u32 %v550, 16
      %v833 = vrot.slane %v831, 6
      %v834 = vor.u32 %v833, %v829
      %v835 = vrot.slane %v834, 2
      %v837 = vshll.u32 %v553, 16
      %v839 = vrot.slane %v837, 7
      %v840 = vsel %vm584, %v835, %v839
      %v841 = vshrl.u32 %v428, 16
      %v843 = vrot.slane %v841, 6
      %v844 = vshll.u32 %v428, 16
      %v846 = vrot.slane %v844, 7
      %v847 = vor.u32 %v843, %v846
      %v848 = vrot.slane %v847, 2
      %v850 = vshll.u32 %v431, 16
      %v852 = vrot.slane %v850, 7
      %v853 = vsel %vm584, %v848, %v852
      %v854 = vshrl.u32 %v431, 16
      %v856 = vrot.slane %v854, 6
      %v857 = vor.u32 %v856, %v852
      %v858 = vrot.slane %v857, 2
      %v859 = vshll.u32 %v556, 16
      %v861 = vrot.slane %v859, 7
      %v862 = vsel %vm584, %v858, %v861
      %v863 = vshrl.u32 %v556, 16
      %v865 = vrot.slane %v863, 6
      %v866 = vor.u32 %v865, %v861
      %v867 = vrot.slane %v866, 2
      %v869 = vshll.u32 %v559, 16
      %v871 = vrot.slane %v869, 7
      %v872 = vsel %vm584, %v867, %v871
      %v873 = vshrl.u32 %v437, 16
      %v875 = vrot.slane %v873, 6
      %v876 = vshll.u32 %v437, 16
      %v878 = vrot.slane %v876, 7
      %v879 = vor.u32 %v875, %v878
      %v880 = vrot.slane %v879, 2
      %v882 = vshll.u32 %v440, 16
      %v884 = vrot.slane %v882, 7
      %v885 = vsel %vm584, %v880, %v884
      %v886 = vshrl.u32 %v440, 16
      %v888 = vrot.slane %v886, 6
      %v889 = vor.u32 %v888, %v884
      %v890 = vrot.slane %v889, 2
      %v891 = vshll.u32 %v562, 16
      %v893 = vrot.slane %v891, 7
      %v894 = vsel %vm584, %v890, %v893
      %v895 = vshrl.u32 %v562, 16
      %v897 = vrot.slane %v895, 6
      %v898 = vor.u32 %v897, %v893
      %v899 = vrot.slane %v898, 2
      %v901 = vshll.u32 %v565, 16
      %v903 = vrot.slane %v901, 7
      %v904 = vsel %vm584, %v899, %v903
      %v905 = vshrl.u32 %v446, 16
      %v907 = vrot.slane %v905, 6
      %v908 = vshll.u32 %v446, 16
      %v910 = vrot.slane %v908, 7
      %v911 = vor.u32 %v907, %v910
      %v912 = vrot.slane %v911, 2
      %v914 = vshll.u32 %v449, 16
      %v916 = vrot.slane %v914, 7
      %v917 = vsel %vm584, %v912, %v916
      %v918 = vshrl.u32 %v449, 16
      %v920 = vrot.slane %v918, 6
      %v921 = vor.u32 %v920, %v916
      %v922 = vrot.slane %v921, 2
      %v923 = vshll.u32 %v568, 16
      %v925 = vrot.slane %v923, 7
      %v926 = vsel %vm584, %v922, %v925
      %v927 = vshrl.u32 %v568, 16
      %v929 = vrot.slane %v927, 6
      %v930 = vor.u32 %v929, %v925
      %v931 = vrot.slane %v930, 2
      %v933 = vshll.u32 %v571, 16
      %v935 = vrot.slane %v933, 7
      %v936 = vsel %vm584, %v931, %v935
      %v937 = vshrl.u32 %v455, 16
      %v939 = vrot.slane %v937, 6
      %v940 = vshll.u32 %v455, 16
      %v942 = vrot.slane %v940, 7
      %v943 = vor.u32 %v939, %v942
      %v944 = vrot.slane %v943, 2
      %v946 = vshll.u32 %v458, 16
      %v948 = vrot.slane %v946, 7
      %v949 = vsel %vm584, %v944, %v948
      %v950 = vshrl.u32 %v458, 16
      %v952 = vrot.slane %v950, 6
      %v953 = vor.u32 %v952, %v948
      %v954 = vrot.slane %v953, 2
      %v955 = vshll.u32 %v574, 16
      %v957 = vrot.slane %v955, 7
      %v958 = vsel %vm584, %v954, %v957
      %v959 = vshrl.u32 %v574, 16
      %v961 = vrot.slane %v959, 6
      %v962 = vor.u32 %v961, %v957
      %v963 = vrot.slane %v962, 2
      %v965 = vshll.u32 %v577, 16
      %v967 = vrot.slane %v965, 7
      %v968 = vsel %vm584, %v963, %v967
      %v969 = vld [vmem:[%s1 + $0x20] sm:$0xf]
      %v970 = vld [vmem:[%s1 + $0x24] sm:$0xf]
      %v971 = vld [vmem:[%s1 + $0x28] sm:$0xf]
      %v972 = vld [vmem:[%s1 + $0x2c] sm:$0xf]
      %v973 = vld [vmem:[%s1 + $0x30] sm:$0xf]
      %v974 = vld [vmem:[%s1 + $0x34] sm:$0xf]
      %v975 = vld [vmem:[%s1 + $0x38] sm:$0xf]
      %v976 = vld [vmem:[%s1 + $0x3c] sm:$0xf]
      %978 = vst [vmem:[#allocation1] ss:$4 sm:$0xff] %v597
      %s980 = scalar_lea.vmem [#allocation1], 1
      %981 = vst [vmem:[%s980] ss:$4 sm:$0xff] %v606
      %s983 = scalar_lea.vmem [#allocation1], 2
      %984 = vst [vmem:[%s983] ss:$4 sm:$0xff] %v616
      %s986 = scalar_lea.vmem [#allocation1], 3
      %987 = vst [vmem:[%s986] ss:$4 sm:$0xff] %v629
      %s989 = scalar_lea.vmem [#allocation1], 32
      %990 = vst [vmem:[%s989] ss:$4 sm:$0xff] %v638
      %s992 = scalar_lea.vmem [#allocation1], 33
      %993 = vst [vmem:[%s992] ss:$4 sm:$0xff] %v648
      %s995 = scalar_lea.vmem [#allocation1], 34
      %996 = vst [vmem:[%s995] ss:$4 sm:$0xff] %v661
      %s998 = scalar_lea.vmem [#allocation1], 35
      %999 = vst [vmem:[%s998] ss:$4 sm:$0xff] %v670
      %v1000 = vld.sshfl [vmem:[#allocation1] sm:$0xff pattern:$0x73625140]
      %v1001 = vld.sshfl [vmem:[#allocation1 + $0x20] sm:$0xff pattern:$0x73625140]
      %1003 = vst [vmem:[#allocation1] ss:$4 sm:$0xff] %v680
      %1005 = vst [vmem:[%s980] ss:$4 sm:$0xff] %v693
      %1007 = vst [vmem:[%s983] ss:$4 sm:$0xff] %v702
      %1009 = vst [vmem:[%s986] ss:$4 sm:$0xff] %v712
      %1011 = vst [vmem:[%s989] ss:$4 sm:$0xff] %v725
      %1013 = vst [vmem:[%s992] ss:$4 sm:$0xff] %v734
      %1015 = vst [vmem:[%s995] ss:$4 sm:$0xff] %v744
      %1017 = vst [vmem:[%s998] ss:$4 sm:$0xff] %v757
      %v1018 = vld.sshfl [vmem:[#allocation1] sm:$0xff pattern:$0x73625140]
      %v1019 = vld.sshfl [vmem:[#allocation1 + $0x20] sm:$0xff pattern:$0x73625140]
      %1021 = vst [vmem:[#allocation1] ss:$4 sm:$0xff] %v766
      %1023 = vst [vmem:[%s980] ss:$4 sm:$0xff] %v776
      %1025 = vst [vmem:[%s983] ss:$4 sm:$0xff] %v789
      %1027 = vst [vmem:[%s986] ss:$4 sm:$0xff] %v798
      %1029 = vst [vmem:[%s989] ss:$4 sm:$0xff] %v808
      %1031 = vst [vmem:[%s992] ss:$4 sm:$0xff] %v821
      %1033 = vst [vmem:[%s995] ss:$4 sm:$0xff] %v830
      %1035 = vst [vmem:[%s998] ss:$4 sm:$0xff] %v840
      %v1036 = vld.sshfl [vmem:[#allocation1] sm:$0xff pattern:$0x73625140]
      %v1037 = vld.sshfl [vmem:[#allocation1 + $0x20] sm:$0xff pattern:$0x73625140]
      %1039 = vst [vmem:[#allocation1] ss:$4 sm:$0xff] %v853
      %1041 = vst [vmem:[%s980] ss:$4 sm:$0xff] %v862
      %1043 = vst [vmem:[%s983] ss:$4 sm:$0xff] %v872
      %1045 = vst [vmem:[%s986] ss:$4 sm:$0xff] %v885
      %1047 = vst [vmem:[%s989] ss:$4 sm:$0xff] %v894
      %1049 = vst [vmem:[%s992] ss:$4 sm:$0xff] %v904
      %1051 = vst [vmem:[%s995] ss:$4 sm:$0xff] %v917
      %1053 = vst [vmem:[%s998] ss:$4 sm:$0xff] %v926
      %v1054 = vld.sshfl [vmem:[#allocation1] sm:$0xff pattern:$0x73625140]
      %v1055 = vld.sshfl [vmem:[#allocation1 + $0x20] sm:$0xff pattern:$0x73625140]
      %1057 = vst [vmem:[#allocation1] ss:$4 sm:$0xff] %v936
      %1059 = vst [vmem:[%s980] ss:$4 sm:$0xff] %v949
      %1061 = vst [vmem:[%s983] ss:$4 sm:$0xff] %v958
      %1063 = vst [vmem:[%s986] ss:$4 sm:$0xff] %v968
      %v1064 = vld.sshfl [vmem:[#allocation1] sm:$0xff pattern:$0x73625140]
      %v1073 = vunpack.c.l.b16 %v969
      %v1074 = vunpack.c.l.b16 %v970
      %v1075 = vunpack.c.l.b16 %v971
      %v1076 = vunpack.c.l.b16 %v972
      %v1077 = vunpack.c.l.b16 %v973
      %v1078 = vunpack.c.l.b16 %v974
      %v1079 = vunpack.c.l.b16 %v975
      %v1080 = vunpack.c.l.b16 %v976
      %v1081 = vpack.c.b16 %v1074, %v1073
      %v1082 = vpack.c.b16 %v1076, %v1075
      %v1083 = vpack.c.b16 %v1078, %v1077
      %v1084 = vpack.c.b16 %v1080, %v1079
      %vm1089 = vcmask 523264
      %v1090 = vsel %vm1089, %v1000, 0
      %v1092 = vsel %vm1089, %v1001, 0
      %v1094 = vsel %vm1089, %v1018, 0
      %v1096 = vsel %vm1089, %v1019, 0
      %v1098 = vsel %vm1089, %v1036, 0
      %v1100 = vsel %vm1089, %v1037, 0
      %v1102 = vsel %vm1089, %v1054, 0
      %v1104 = vsel %vm1089, %v1055, 0
      %v1106 = vsel %vm1089, %v1064, 0
      %1108 = vmatpush.bf16.msra.mxu0 0
      %1109 = vmatpush.bf16.msra.mxu0 0
      %1110 = vmatpush.bf16.msra.mxu0 0
      %1111 = vmatpush.bf16.msra.mxu0 0
      %1112 = vmatpush.bf16.msra.mxu0 %v1084
      %1113 = vmatpush.bf16.msra.mxu0 %v1083
      %1114 = vmatpush.bf16.msra.mxu0 %v1082
      %1115 = vmatpush.bf16.msra.mxu0 %v1081
      %1116 = vmatmul.bf16.gmra.mxu0 %v1090
      %v1117 = vpop.f32.mrf.mxu0
      %v1118 = vadd.f32 0.0, %v1117
      %v1119 = vpop.f32.mrf.mxu0
      %v1120 = vadd.f32 0.0, %v1119
      %1121 = vmatmul.bf16.gmra.mxu0 %v1092
      %v1122 = vpop.f32.mrf.mxu0
      %v1123 = vadd.f32 0.0, %v1122
      %v1124 = vpop.f32.mrf.mxu0
      %v1125 = vadd.f32 0.0, %v1124
      %1126 = vmatmul.bf16.gmra.mxu0 %v1094
      %v1127 = vpop.f32.mrf.mxu0
      %v1128 = vadd.f32 0.0, %v1127
      %v1129 = vpop.f32.mrf.mxu0
      %v1130 = vadd.f32 0.0, %v1129
      %1131 = vmatmul.bf16.gmra.mxu0 %v1096
      %v1132 = vpop.f32.mrf.mxu0
      %v1133 = vadd.f32 0.0, %v1132
      %v1134 = vpop.f32.mrf.mxu0
      %v1135 = vadd.f32 0.0, %v1134
      %1136 = vmatmul.bf16.gmra.mxu0 %v1098
      %v1137 = vpop.f32.mrf.mxu0
      %v1138 = vadd.f32 0.0, %v1137
      %v1139 = vpop.f32.mrf.mxu0
      %v1140 = vadd.f32 0.0, %v1139
      %1141 = vmatmul.bf16.gmra.mxu0 %v1100
      %v1142 = vpop.f32.mrf.mxu0
      %v1143 = vadd.f32 0.0, %v1142
      %v1144 = vpop.f32.mrf.mxu0
      %v1145 = vadd.f32 0.0, %v1144
      %1146 = vmatmul.bf16.gmra.mxu0 %v1102
      %v1147 = vpop.f32.mrf.mxu0
      %v1148 = vadd.f32 0.0, %v1147
      %v1149 = vpop.f32.mrf.mxu0
      %v1150 = vadd.f32 0.0, %v1149
      %1151 = vmatmul.bf16.gmra.mxu0 %v1104
      %v1152 = vpop.f32.mrf.mxu0
      %v1153 = vadd.f32 0.0, %v1152
      %v1154 = vpop.f32.mrf.mxu0
      %v1155 = vadd.f32 0.0, %v1154
      %1156 = vmatmul.bf16.gmra.mxu0 %v1106
      %v1157 = vpop.f32.mrf.mxu0
      %v1158 = vadd.f32 0.0, %v1157
      %v1159 = vpop.f32.mrf.mxu0
      %v1160 = vadd.f32 0.0, %v1159
      %1161 = vdwg.mxu0
      %1162 = vst [vmem:[#allocation1] ss:$4 sm:$0xff] %v355
      %s1163 = scalar_lea.vmem [#allocation1], 1
      %1164 = vst [vmem:[%s1163] ss:$4 sm:$0xff] %v359
      %s1165 = scalar_lea.vmem [#allocation1], 2
      %1166 = vst [vmem:[%s1165] ss:$4 sm:$0xff] %v362
      %s1167 = scalar_lea.vmem [#allocation1], 3
      %1168 = vst [vmem:[%s1167] ss:$4 sm:$0xff] %v365
      %s1169 = scalar_lea.vmem [#allocation1], 32
      %1170 = vst [vmem:[%s1169] ss:$4 sm:$0xff] %v368
      %s1171 = scalar_lea.vmem [#allocation1], 33
      %1172 = vst [vmem:[%s1171] ss:$4 sm:$0xff] %v371
      %s1173 = scalar_lea.vmem [#allocation1], 34
      %1174 = vst [vmem:[%s1173] ss:$4 sm:$0xff] %v374
      %s1175 = scalar_lea.vmem [#allocation1], 35
      %1176 = vst [vmem:[%s1175] ss:$4 sm:$0xff] %v377
      %v1177 = vld.sshfl [vmem:[#allocation1] sm:$0xff pattern:$0x73625140]
      %v1178 = vld.sshfl [vmem:[#allocation1 + $0x20] sm:$0xff pattern:$0x73625140]
      %1179 = vst [vmem:[#allocation1] ss:$4 sm:$0xff] %v380
      %1180 = vst [vmem:[%s1163] ss:$4 sm:$0xff] %v383
      %1181 = vst [vmem:[%s1165] ss:$4 sm:$0xff] %v386
      %1182 = vst [vmem:[%s1167] ss:$4 sm:$0xff] %v389
      %1183 = vst [vmem:[%s1169] ss:$4 sm:$0xff] %v392
      %1184 = vst [vmem:[%s1171] ss:$4 sm:$0xff] %v395
      %1185 = vst [vmem:[%s1173] ss:$4 sm:$0xff] %v398
      %1186 = vst [vmem:[%s1175] ss:$4 sm:$0xff] %v401
      %v1187 = vld.sshfl [vmem:[#allocation1] sm:$0xff pattern:$0x73625140]
      %v1188 = vld.sshfl [vmem:[#allocation1 + $0x20] sm:$0xff pattern:$0x73625140]
      %1189 = vst [vmem:[#allocation1] ss:$4 sm:$0xff] %v404
      %1190 = vst [vmem:[%s1163] ss:$4 sm:$0xff] %v407
      %1191 = vst [vmem:[%s1165] ss:$4 sm:$0xff] %v410
      %1192 = vst [vmem:[%s1167] ss:$4 sm:$0xff] %v413
      %1193 = vst [vmem:[%s1169] ss:$4 sm:$0xff] %v416
      %1194 = vst [vmem:[%s1171] ss:$4 sm:$0xff] %v419
      %1195 = vst [vmem:[%s1173] ss:$4 sm:$0xff] %v422
      %1196 = vst [vmem:[%s1175] ss:$4 sm:$0xff] %v425
      %v1197 = vld.sshfl [vmem:[#allocation1] sm:$0xff pattern:$0x73625140]
      %v1198 = vld.sshfl [vmem:[#allocation1 + $0x20] sm:$0xff pattern:$0x73625140]
      %1199 = vst [vmem:[#allocation1] ss:$4 sm:$0xff] %v428
      %1200 = vst [vmem:[%s1163] ss:$4 sm:$0xff] %v431
      %1201 = vst [vmem:[%s1165] ss:$4 sm:$0xff] %v434
      %1202 = vst [vmem:[%s1167] ss:$4 sm:$0xff] %v437
      %1203 = vst [vmem:[%s1169] ss:$4 sm:$0xff] %v440
      %1204 = vst [vmem:[%s1171] ss:$4 sm:$0xff] %v443
      %1205 = vst [vmem:[%s1173] ss:$4 sm:$0xff] %v446
      %1206 = vst [vmem:[%s1175] ss:$4 sm:$0xff] %v449
      %v1207 = vld.sshfl [vmem:[#allocation1] sm:$0xff pattern:$0x73625140]
      %v1208 = vld.sshfl [vmem:[#allocation1 + $0x20] sm:$0xff pattern:$0x73625140]
      %1209 = vst [vmem:[#allocation1] ss:$4 sm:$0xff] %v452
      %1210 = vst [vmem:[%s1163] ss:$4 sm:$0xff] %v455
      %1211 = vst [vmem:[%s1165] ss:$4 sm:$0xff] %v458
      %1212 = vst [vmem:[%s1167] ss:$4 sm:$0xff] %v461
      %v1213 = vld.sshfl [vmem:[#allocation1] sm:$0xff pattern:$0x73625140]
      %v1222 = vunpack.c.l.b16 %v462
      %v1223 = vunpack.c.l.b16 %v463
      %v1224 = vunpack.c.l.b16 %v464
      %v1225 = vunpack.c.l.b16 %v465
      %v1226 = vunpack.c.l.b16 %v466
      %v1227 = vunpack.c.l.b16 %v467
      %v1228 = vunpack.c.l.b16 %v468
      %v1229 = vunpack.c.l.b16 %v469
      %v1230 = vpack.c.b16 %v1223, %v1222
      %v1231 = vpack.c.b16 %v1225, %v1224
      %v1232 = vpack.c.b16 %v1227, %v1226
      %v1233 = vpack.c.b16 %v1229, %v1228
      %v1238 = vsel %vm1089, %v1177, 0
      %v1240 = vsel %vm1089, %v1178, 0
      %v1242 = vsel %vm1089, %v1187, 0
      %v1244 = vsel %vm1089, %v1188, 0
      %v1246 = vsel %vm1089, %v1197, 0
      %v1248 = vsel %vm1089, %v1198, 0
      %v1250 = vsel %vm1089, %v1207, 0
      %v1252 = vsel %vm1089, %v1208, 0
      %v1254 = vsel %vm1089, %v1213, 0
      %1256 = vmatpush.bf16.msra.mxu0 0
      %1257 = vmatpush.bf16.msra.mxu0 0
      %1258 = vmatpush.bf16.msra.mxu0 0
      %1259 = vmatpush.bf16.msra.mxu0 0
      %1260 = vmatpush.bf16.msra.mxu0 %v1233
      %1261 = vmatpush.bf16.msra.mxu0 %v1232
      %1262 = vmatpush.bf16.msra.mxu0 %v1231
      %1263 = vmatpush.bf16.msra.mxu0 %v1230
      %1264 = vmatmul.bf16.gmra.mxu0 %v1238
      %v1265 = vpop.f32.mrf.mxu0
      %v1266 = vadd.f32 %v1118, %v1265
      %v1267 = vpop.f32.mrf.mxu0
      %v1268 = vadd.f32 %v1120, %v1267
      %1269 = vmatmul.bf16.gmra.mxu0 %v1240
      %v1270 = vpop.f32.mrf.mxu0
      %v1271 = vadd.f32 %v1123, %v1270
      %v1272 = vpop.f32.mrf.mxu0
      %v1273 = vadd.f32 %v1125, %v1272
      %1274 = vmatmul.bf16.gmra.mxu0 %v1242
      %v1275 = vpop.f32.mrf.mxu0
      %v1276 = vadd.f32 %v1128, %v1275
      %v1277 = vpop.f32.mrf.mxu0
      %v1278 = vadd.f32 %v1130, %v1277
      %1279 = vmatmul.bf16.gmra.mxu0 %v1244
      %v1280 = vpop.f32.mrf.mxu0
      %v1281 = vadd.f32 %v1133, %v1280
      %v1282 = vpop.f32.mrf.mxu0
      %v1283 = vadd.f32 %v1135, %v1282
      %1284 = vmatmul.bf16.gmra.mxu0 %v1246
      %v1285 = vpop.f32.mrf.mxu0
      %v1286 = vadd.f32 %v1138, %v1285
      %v1287 = vpop.f32.mrf.mxu0
      %v1288 = vadd.f32 %v1140, %v1287
      %1289 = vmatmul.bf16.gmra.mxu0 %v1248
      %v1290 = vpop.f32.mrf.mxu0
      %v1291 = vadd.f32 %v1143, %v1290
      %v1292 = vpop.f32.mrf.mxu0
      %v1293 = vadd.f32 %v1145, %v1292
      %1294 = vmatmul.bf16.gmra.mxu0 %v1250
      %v1295 = vpop.f32.mrf.mxu0
      %v1296 = vadd.f32 %v1148, %v1295
      %v1297 = vpop.f32.mrf.mxu0
      %v1298 = vadd.f32 %v1150, %v1297
      %1299 = vmatmul.bf16.gmra.mxu0 %v1252
      %v1300 = vpop.f32.mrf.mxu0
      %v1301 = vadd.f32 %v1153, %v1300
      %v1302 = vpop.f32.mrf.mxu0
      %v1303 = vadd.f32 %v1155, %v1302
      %1304 = vmatmul.bf16.gmra.mxu0 %v1254
      %v1305 = vpop.f32.mrf.mxu0
      %v1306 = vadd.f32 %v1158, %v1305
      %v1307 = vpop.f32.mrf.mxu0
      %v1308 = vadd.f32 %v1160, %v1307
      %1309 = vdwg.mxu0
      %s1310 = scalar_lea.vmem %s273, 8
      %v1311 = vld [vmem:[%s1310] sm:$0xf]
      %v1312 = vld [vmem:[%s1310 + $0x4] sm:$0x3]
      %v1313 = vld [vmem:[%s1310 + $0x8] sm:$0xf]
      %v1314 = vld [vmem:[%s1310 + $0xc] sm:$0x3]
      %v1315 = vld [vmem:[%s1310 + $0x10] sm:$0xf]
      %v1316 = vld [vmem:[%s1310 + $0x14] sm:$0x3]
      %v1317 = vld [vmem:[%s1310 + $0x18] sm:$0xf]
      %v1318 = vld [vmem:[%s1310 + $0x1c] sm:$0x3]
      %v1319 = vld [vmem:[%s1310 + $0x20] sm:$0xf]
      %v1320 = vld [vmem:[%s1310 + $0x24] sm:$0x3]
      %v1321 = vld [vmem:[%s1310 + $0x28] sm:$0xf]
      %v1322 = vld [vmem:[%s1310 + $0x2c] sm:$0x3]
      %v1323 = vld [vmem:[%s1310 + $0x30] sm:$0xf]
      %v1324 = vld [vmem:[%s1310 + $0x34] sm:$0x3]
      %v1325 = vld [vmem:[%s1310 + $0x38] sm:$0xf]
      %v1326 = vld [vmem:[%s1310 + $0x3c] sm:$0x3]
      %v1327 = vld [vmem:[%s1310 + $0x40] sm:$0xf]
      %v1328 = vld [vmem:[%s1310 + $0x44] sm:$0x3]
      %v1329 = vld [vmem:[%s1310 + $0x48] sm:$0xf]
      %v1330 = vld [vmem:[%s1310 + $0x4c] sm:$0x3]
      %v1331 = vld [vmem:[%s1310 + $0x50] sm:$0xf]
      %v1332 = vld [vmem:[%s1310 + $0x54] sm:$0x3]
      %v1333 = vld [vmem:[%s1310 + $0x58] sm:$0xf]
      %v1334 = vld [vmem:[%s1310 + $0x5c] sm:$0x3]
      %v1359 = vrot.slane %v1311, 2
      %v1360 = vrot.slane %v1312, 2
      %v1361 = vrot.slane %v1313, 2
      %v1362 = vrot.slane %v1314, 2
      %v1363 = vrot.slane %v1315, 2
      %v1364 = vrot.slane %v1316, 2
      %v1365 = vrot.slane %v1317, 2
      %v1366 = vrot.slane %v1318, 2
      %v1367 = vrot.slane %v1319, 2
      %v1368 = vrot.slane %v1320, 2
      %v1369 = vrot.slane %v1321, 2
      %v1370 = vrot.slane %v1322, 2
      %v1371 = vrot.slane %v1323, 2
      %v1372 = vrot.slane %v1324, 2
      %v1373 = vrot.slane %v1325, 2
      %v1374 = vrot.slane %v1326, 2
      %v1375 = vrot.slane %v1327, 2
      %v1376 = vrot.slane %v1328, 2
      %v1377 = vrot.slane %v1329, 2
      %v1378 = vrot.slane %v1330, 2
      %v1379 = vrot.slane %v1331, 2
      %v1380 = vrot.slane %v1332, 2
      %v1381 = vrot.slane %v1333, 2
      %v1382 = vrot.slane %v1334, 2
      %v1385 = vsel %vm352, %v1311, %v1359
      %v1386 = vsel %vm356, %v1311, %v1359
      %v1388 = vrot.slane %v1386, 2
      %v1391 = vsel %vm352, %v1312, %v1360
      %v1394 = vsel %vm352, %v1313, %v1361
      %v1395 = vsel %vm356, %v1313, %v1361
      %v1397 = vrot.slane %v1395, 2
      %v1400 = vsel %vm352, %v1314, %v1362
      %v1403 = vsel %vm352, %v1315, %v1363
      %v1404 = vsel %vm356, %v1315, %v1363
      %v1406 = vrot.slane %v1404, 2
      %v1409 = vsel %vm352, %v1316, %v1364
      %v1412 = vsel %vm352, %v1317, %v1365
      %v1413 = vsel %vm356, %v1317, %v1365
      %v1415 = vrot.slane %v1413, 2
      %v1418 = vsel %vm352, %v1318, %v1366
      %v1421 = vsel %vm352, %v1319, %v1367
      %v1422 = vsel %vm356, %v1319, %v1367
      %v1424 = vrot.slane %v1422, 2
      %v1427 = vsel %vm352, %v1320, %v1368
      %v1430 = vsel %vm352, %v1321, %v1369
      %v1431 = vsel %vm356, %v1321, %v1369
      %v1433 = vrot.slane %v1431, 2
      %v1436 = vsel %vm352, %v1322, %v1370
      %v1439 = vsel %vm352, %v1323, %v1371
      %v1440 = vsel %vm356, %v1323, %v1371
      %v1442 = vrot.slane %v1440, 2
      %v1445 = vsel %vm352, %v1324, %v1372
      %v1448 = vsel %vm352, %v1325, %v1373
      %v1449 = vsel %vm356, %v1325, %v1373
      %v1451 = vrot.slane %v1449, 2
      %v1454 = vsel %vm352, %v1326, %v1374
      %v1457 = vsel %vm352, %v1327, %v1375
      %v1458 = vsel %vm356, %v1327, %v1375
      %v1460 = vrot.slane %v1458, 2
      %v1463 = vsel %vm352, %v1328, %v1376
      %v1466 = vsel %vm352, %v1329, %v1377
      %v1467 = vsel %vm356, %v1329, %v1377
      %v1469 = vrot.slane %v1467, 2
      %v1472 = vsel %vm352, %v1330, %v1378
      %v1475 = vsel %vm352, %v1331, %v1379
      %v1476 = vsel %vm356, %v1331, %v1379
      %v1478 = vrot.slane %v1476, 2
      %v1481 = vsel %vm352, %v1332, %v1380
      %v1484 = vsel %vm352, %v1333, %v1381
      %v1485 = vsel %vm356, %v1333, %v1381
      %v1487 = vrot.slane %v1485, 2
      %v1490 = vsel %vm352, %v1334, %v1382
      %v1491 = vld [vmem:[%s1 + $0x40] sm:$0xf]
      %v1492 = vld [vmem:[%s1 + $0x44] sm:$0xf]
      %v1493 = vld [vmem:[%s1 + $0x48] sm:$0xf]
      %v1494 = vld [vmem:[%s1 + $0x4c] sm:$0xf]
      %v1495 = vld [vmem:[%s1 + $0x50] sm:$0xf]
      %v1496 = vld [vmem:[%s1 + $0x54] sm:$0xf]
      %v1497 = vld [vmem:[%s1 + $0x58] sm:$0xf]
      %v1498 = vld [vmem:[%s1 + $0x5c] sm:$0xf]
      %1499 = vst [vmem:[#allocation1] ss:$4 sm:$0xff] %v1385
      %s1501 = scalar_lea.vmem [#allocation1], 1
      %1502 = vst [vmem:[%s1501] ss:$4 sm:$0xff] %v1388
      %s1503 = scalar_lea.vmem [#allocation1], 2
      %1504 = vst [vmem:[%s1503] ss:$4 sm:$0xff] %v1391
      %s1505 = scalar_lea.vmem [#allocation1], 3
      %1506 = vst [vmem:[%s1505] ss:$4 sm:$0xff] %v1394
      %s1508 = scalar_lea.vmem [#allocation1], 32
      %1509 = vst [vmem:[%s1508] ss:$4 sm:$0xff] %v1397
      %s1510 = scalar_lea.vmem [#allocation1], 33
      %1511 = vst [vmem:[%s1510] ss:$4 sm:$0xff] %v1400
      %s1512 = scalar_lea.vmem [#allocation1], 34
      %1513 = vst [vmem:[%s1512] ss:$4 sm:$0xff] %v1403
      %s1515 = scalar_lea.vmem [#allocation1], 35
      %1516 = vst [vmem:[%s1515] ss:$4 sm:$0xff] %v1406
      %v1517 = vld.sshfl [vmem:[#allocation1] sm:$0xff pattern:$0x73625140]
      %v1518 = vld.sshfl [vmem:[#allocation1 + $0x20] sm:$0xff pattern:$0x73625140]
      %1519 = vst [vmem:[#allocation1] ss:$4 sm:$0xff] %v1409
      %1520 = vst [vmem:[%s1501] ss:$4 sm:$0xff] %v1412
      %1522 = vst [vmem:[%s1503] ss:$4 sm:$0xff] %v1415
      %1523 = vst [vmem:[%s1505] ss:$4 sm:$0xff] %v1418
      %1524 = vst [vmem:[%s1508] ss:$4 sm:$0xff] %v1421
      %1526 = vst [vmem:[%s1510] ss:$4 sm:$0xff] %v1424
      %1527 = vst [vmem:[%s1512] ss:$4 sm:$0xff] %v1427
      %1528 = vst [vmem:[%s1515] ss:$4 sm:$0xff] %v1430
      %v1529 = vld.sshfl [vmem:[#allocation1] sm:$0xff pattern:$0x73625140]
      %v1530 = vld.sshfl [vmem:[#allocation1 + $0x20] sm:$0xff pattern:$0x73625140]
      %1532 = vst [vmem:[#allocation1] ss:$4 sm:$0xff] %v1433
      %1533 = vst [vmem:[%s1501] ss:$4 sm:$0xff] %v1436
      %1534 = vst [vmem:[%s1503] ss:$4 sm:$0xff] %v1439
      %1536 = vst [vmem:[%s1505] ss:$4 sm:$0xff] %v1442
      %1537 = vst [vmem:[%s1508] ss:$4 sm:$0xff] %v1445
      %1538 = vst [vmem:[%s1510] ss:$4 sm:$0xff] %v1448
      %1540 = vst [vmem:[%s1512] ss:$4 sm:$0xff] %v1451
      %1541 = vst [vmem:[%s1515] ss:$4 sm:$0xff] %v1454
      %v1542 = vld.sshfl [vmem:[#allocation1] sm:$0xff pattern:$0x73625140]
      %v1543 = vld.sshfl [vmem:[#allocation1 + $0x20] sm:$0xff pattern:$0x73625140]
      %1544 = vst [vmem:[#allocation1] ss:$4 sm:$0xff] %v1457
      %1546 = vst [vmem:[%s1501] ss:$4 sm:$0xff] %v1460
      %1547 = vst [vmem:[%s1503] ss:$4 sm:$0xff] %v1463
      %1548 = vst [vmem:[%s1505] ss:$4 sm:$0xff] %v1466
      %1550 = vst [vmem:[%s1508] ss:$4 sm:$0xff] %v1469
      %1551 = vst [vmem:[%s1510] ss:$4 sm:$0xff] %v1472
      %1552 = vst [vmem:[%s1512] ss:$4 sm:$0xff] %v1475
      %1554 = vst [vmem:[%s1515] ss:$4 sm:$0xff] %v1478
      %v1555 = vld.sshfl [vmem:[#allocation1] sm:$0xff pattern:$0x73625140]
      %v1556 = vld.sshfl [vmem:[#allocation1 + $0x20] sm:$0xff pattern:$0x73625140]
      %1557 = vst [vmem:[#allocation1] ss:$4 sm:$0xff] %v1481
      %1558 = vst [vmem:[%s1501] ss:$4 sm:$0xff] %v1484
      %1560 = vst [vmem:[%s1503] ss:$4 sm:$0xff] %v1487
      %1561 = vst [vmem:[%s1505] ss:$4 sm:$0xff] %v1490
      %v1562 = vld.sshfl [vmem:[#allocation1] sm:$0xff pattern:$0x73625140]
      %v1571 = vunpack.c.l.b16 %v1491
      %v1572 = vunpack.c.l.b16 %v1492
      %v1573 = vunpack.c.l.b16 %v1493
      %v1574 = vunpack.c.l.b16 %v1494
      %v1575 = vunpack.c.l.b16 %v1495
      %v1576 = vunpack.c.l.b16 %v1496
      %v1577 = vunpack.c.l.b16 %v1497
      %v1578 = vunpack.c.l.b16 %v1498
      %v1579 = vpack.c.b16 %v1572, %v1571
      %v1580 = vpack.c.b16 %v1574, %v1573
      %v1581 = vpack.c.b16 %v1576, %v1575
      %v1582 = vpack.c.b16 %v1578, %v1577
      %v1587 = vsel %vm1089, %v1517, 0
      %v1589 = vsel %vm1089, %v1518, 0
      %v1591 = vsel %vm1089, %v1529, 0
      %v1593 = vsel %vm1089, %v1530, 0
      %v1595 = vsel %vm1089, %v1542, 0
      %v1597 = vsel %vm1089, %v1543, 0
      %v1599 = vsel %vm1089, %v1555, 0
      %v1601 = vsel %vm1089, %v1556, 0
      %v1603 = vsel %vm1089, %v1562, 0
      %1605 = vmatpush.bf16.msra.mxu0 0
      %1606 = vmatpush.bf16.msra.mxu0 0
      %1607 = vmatpush.bf16.msra.mxu0 0
      %1608 = vmatpush.bf16.msra.mxu0 0
      %1609 = vmatpush.bf16.msra.mxu0 %v1582
      %1610 = vmatpush.bf16.msra.mxu0 %v1581
      %1611 = vmatpush.bf16.msra.mxu0 %v1580
      %1612 = vmatpush.bf16.msra.mxu0 %v1579
      %1613 = vmatmul.bf16.gmra.mxu0 %v1587
      %v1614 = vpop.f32.mrf.mxu0
      %v1615 = vadd.f32 0.0, %v1614
      %v1616 = vpop.f32.mrf.mxu0
      %v1617 = vadd.f32 0.0, %v1616
      %1618 = vmatmul.bf16.gmra.mxu0 %v1589
      %v1619 = vpop.f32.mrf.mxu0
      %v1620 = vadd.f32 0.0, %v1619
      %v1621 = vpop.f32.mrf.mxu0
      %v1622 = vadd.f32 0.0, %v1621
      %1623 = vmatmul.bf16.gmra.mxu0 %v1591
      %v1624 = vpop.f32.mrf.mxu0
      %v1625 = vadd.f32 0.0, %v1624
      %v1626 = vpop.f32.mrf.mxu0
      %v1627 = vadd.f32 0.0, %v1626
      %1628 = vmatmul.bf16.gmra.mxu0 %v1593
      %v1629 = vpop.f32.mrf.mxu0
      %v1630 = vadd.f32 0.0, %v1629
      %v1631 = vpop.f32.mrf.mxu0
      %v1632 = vadd.f32 0.0, %v1631
      %1633 = vmatmul.bf16.gmra.mxu0 %v1595
      %v1634 = vpop.f32.mrf.mxu0
      %v1635 = vadd.f32 0.0, %v1634
      %v1636 = vpop.f32.mrf.mxu0
      %v1637 = vadd.f32 0.0, %v1636
      %1638 = vmatmul.bf16.gmra.mxu0 %v1597
      %v1639 = vpop.f32.mrf.mxu0
      %v1640 = vadd.f32 0.0, %v1639
      %v1641 = vpop.f32.mrf.mxu0
      %v1642 = vadd.f32 0.0, %v1641
      %1643 = vmatmul.bf16.gmra.mxu0 %v1599
      %v1644 = vpop.f32.mrf.mxu0
      %v1645 = vadd.f32 0.0, %v1644
      %v1646 = vpop.f32.mrf.mxu0
      %v1647 = vadd.f32 0.0, %v1646
      %1648 = vmatmul.bf16.gmra.mxu0 %v1601
      %v1649 = vpop.f32.mrf.mxu0
      %v1650 = vadd.f32 0.0, %v1649
      %v1651 = vpop.f32.mrf.mxu0
      %v1652 = vadd.f32 0.0, %v1651
      %1653 = vmatmul.bf16.gmra.mxu0 %v1603
      %v1654 = vpop.f32.mrf.mxu0
      %v1655 = vadd.f32 0.0, %v1654
      %v1656 = vpop.f32.mrf.mxu0
      %v1657 = vadd.f32 0.0, %v1656
      %1658 = vdwg.mxu0
      %v1659 = vadd.f32 %v1266, %v1615
      %v1660 = vadd.f32 %v1268, %v1617
      %v1661 = vadd.f32 %v1271, %v1620
      %v1662 = vadd.f32 %v1273, %v1622
      %v1663 = vadd.f32 %v1276, %v1625
      %v1664 = vadd.f32 %v1278, %v1627
      %v1665 = vadd.f32 %v1281, %v1630
      %v1666 = vadd.f32 %v1283, %v1632
      %v1667 = vadd.f32 %v1286, %v1635
      %v1668 = vadd.f32 %v1288, %v1637
      %v1669 = vadd.f32 %v1291, %v1640
      %v1670 = vadd.f32 %v1293, %v1642
      %v1671 = vadd.f32 %v1296, %v1645
      %v1672 = vadd.f32 %v1298, %v1647
      %v1673 = vadd.f32 %v1301, %v1650
      %v1674 = vadd.f32 %v1303, %v1652
      %v1675 = vadd.f32 %v1306, %v1655
      %v1676 = vadd.f32 %v1308, %v1657
      %v1677 = vld [vmem:[%s1310] sm:$0xf]
      %v1678 = vld [vmem:[%s1310 + $0x4] sm:$0x7]
      %v1679 = vld [vmem:[%s1310 + $0x8] sm:$0xf]
      %v1680 = vld [vmem:[%s1310 + $0xc] sm:$0x7]
      %v1681 = vld [vmem:[%s1310 + $0x10] sm:$0xf]
      %v1682 = vld [vmem:[%s1310 + $0x14] sm:$0x7]
      %v1683 = vld [vmem:[%s1310 + $0x18] sm:$0xf]
      %v1684 = vld [vmem:[%s1310 + $0x1c] sm:$0x7]
      %v1685 = vld [vmem:[%s1310 + $0x20] sm:$0xf]
      %v1686 = vld [vmem:[%s1310 + $0x24] sm:$0x7]
      %v1687 = vld [vmem:[%s1310 + $0x28] sm:$0xf]
      %v1688 = vld [vmem:[%s1310 + $0x2c] sm:$0x7]
      %v1689 = vld [vmem:[%s1310 + $0x30] sm:$0xf]
      %v1690 = vld [vmem:[%s1310 + $0x34] sm:$0x7]
      %v1691 = vld [vmem:[%s1310 + $0x38] sm:$0xf]
      %v1692 = vld [vmem:[%s1310 + $0x3c] sm:$0x7]
      %v1693 = vld [vmem:[%s1310 + $0x40] sm:$0xf]
      %v1694 = vld [vmem:[%s1310 + $0x44] sm:$0x7]
      %v1695 = vld [vmem:[%s1310 + $0x48] sm:$0xf]
      %v1696 = vld [vmem:[%s1310 + $0x4c] sm:$0x7]
      %v1697 = vld [vmem:[%s1310 + $0x50] sm:$0xf]
      %v1698 = vld [vmem:[%s1310 + $0x54] sm:$0x7]
      %v1699 = vld [vmem:[%s1310 + $0x58] sm:$0xf]
      %v1700 = vld [vmem:[%s1310 + $0x5c] sm:$0x7]
      %v1725 = vrot.slane %v1677, 2
      %v1726 = vrot.slane %v1678, 2
      %v1727 = vrot.slane %v1679, 2
      %v1728 = vrot.slane %v1680, 2
      %v1729 = vrot.slane %v1681, 2
      %v1730 = vrot.slane %v1682, 2
      %v1731 = vrot.slane %v1683, 2
      %v1732 = vrot.slane %v1684, 2
      %v1733 = vrot.slane %v1685, 2
      %v1734 = vrot.slane %v1686, 2
      %v1735 = vrot.slane %v1687, 2
      %v1736 = vrot.slane %v1688, 2
      %v1737 = vrot.slane %v1689, 2
      %v1738 = vrot.slane %v1690, 2
      %v1739 = vrot.slane %v1691, 2
      %v1740 = vrot.slane %v1692, 2
      %v1741 = vrot.slane %v1693, 2
      %v1742 = vrot.slane %v1694, 2
      %v1743 = vrot.slane %v1695, 2
      %v1744 = vrot.slane %v1696, 2
      %v1745 = vrot.slane %v1697, 2
      %v1746 = vrot.slane %v1698, 2
      %v1747 = vrot.slane %v1699, 2
      %v1748 = vrot.slane %v1700, 2
      %v1751 = vsel %vm352, %v1677, %v1725
      %v1752 = vsel %vm356, %v1677, %v1725
      %v1754 = vrot.slane %v1752, 2
      %v1757 = vsel %vm352, %v1678, %v1726
      %v1758 = vsel %vm356, %v1678, %v1726
      %v1760 = vrot.slane %v1758, 2
      %v1763 = vsel %vm352, %v1679, %v1727
      %v1764 = vsel %vm356, %v1679, %v1727
      %v1766 = vrot.slane %v1764, 2
      %v1769 = vsel %vm352, %v1680, %v1728
      %v1770 = vsel %vm356, %v1680, %v1728
      %v1772 = vrot.slane %v1770, 2
      %v1775 = vsel %vm352, %v1681, %v1729
      %v1776 = vsel %vm356, %v1681, %v1729
      %v1778 = vrot.slane %v1776, 2
      %v1781 = vsel %vm352, %v1682, %v1730
      %v1782 = vsel %vm356, %v1682, %v1730
      %v1784 = vrot.slane %v1782, 2
      %v1787 = vsel %vm352, %v1683, %v1731
      %v1788 = vsel %vm356, %v1683, %v1731
      %v1790 = vrot.slane %v1788, 2
      %v1793 = vsel %vm352, %v1684, %v1732
      %v1794 = vsel %vm356, %v1684, %v1732
      %v1796 = vrot.slane %v1794, 2
      %v1799 = vsel %vm352, %v1685, %v1733
      %v1800 = vsel %vm356, %v1685, %v1733
      %v1802 = vrot.slane %v1800, 2
      %v1805 = vsel %vm352, %v1686, %v1734
      %v1806 = vsel %vm356, %v1686, %v1734
      %v1808 = vrot.slane %v1806, 2
      %v1811 = vsel %vm352, %v1687, %v1735
      %v1812 = vsel %vm356, %v1687, %v1735
      %v1814 = vrot.slane %v1812, 2
      %v1817 = vsel %vm352, %v1688, %v1736
      %v1818 = vsel %vm356, %v1688, %v1736
      %v1820 = vrot.slane %v1818, 2
      %v1823 = vsel %vm352, %v1689, %v1737
      %v1824 = vsel %vm356, %v1689, %v1737
      %v1826 = vrot.slane %v1824, 2
      %v1829 = vsel %vm352, %v1690, %v1738
      %v1830 = vsel %vm356, %v1690, %v1738
      %v1832 = vrot.slane %v1830, 2
      %v1835 = vsel %vm352, %v1691, %v1739
      %v1836 = vsel %vm356, %v1691, %v1739
      %v1838 = vrot.slane %v1836, 2
      %v1841 = vsel %vm352, %v1692, %v1740
      %v1842 = vsel %vm356, %v1692, %v1740
      %v1844 = vrot.slane %v1842, 2
      %v1847 = vsel %vm352, %v1693, %v1741
      %v1848 = vsel %vm356, %v1693, %v1741
      %v1850 = vrot.slane %v1848, 2
      %v1853 = vsel %vm352, %v1694, %v1742
      %v1854 = vsel %vm356, %v1694, %v1742
      %v1856 = vrot.slane %v1854, 2
      %v1859 = vsel %vm352, %v1695, %v1743
      %v1860 = vsel %vm356, %v1695, %v1743
      %v1862 = vrot.slane %v1860, 2
      %v1865 = vsel %vm352, %v1696, %v1744
      %v1866 = vsel %vm356, %v1696, %v1744
      %v1868 = vrot.slane %v1866, 2
      %v1871 = vsel %vm352, %v1697, %v1745
      %v1872 = vsel %vm356, %v1697, %v1745
      %v1874 = vrot.slane %v1872, 2
      %v1877 = vsel %vm352, %v1698, %v1746
      %v1878 = vsel %vm356, %v1698, %v1746
      %v1880 = vrot.slane %v1878, 2
      %v1883 = vsel %vm352, %v1699, %v1747
      %v1884 = vsel %vm356, %v1699, %v1747
      %v1886 = vrot.slane %v1884, 2
      %v1889 = vsel %vm352, %v1700, %v1748
      %v1890 = vsel %vm356, %v1700, %v1748
      %v1892 = vrot.slane %v1890, 2
      %v1893 = vshrl.u32 %v1751, 16
      %v1895 = vrot.slane %v1893, 6
      %v1896 = vshll.u32 %v1751, 16
      %v1898 = vrot.slane %v1896, 7
      %v1899 = vor.u32 %v1895, %v1898
      %v1900 = vrot.slane %v1899, 2
      %v1902 = vshll.u32 %v1754, 16
      %v1904 = vrot.slane %v1902, 7
      %v1905 = vsel %vm584, %v1900, %v1904
      %v1906 = vshrl.u32 %v1754, 16
      %v1908 = vrot.slane %v1906, 6
      %v1909 = vor.u32 %v1908, %v1904
      %v1910 = vrot.slane %v1909, 2
      %v1911 = vshll.u32 %v1757, 16
      %v1913 = vrot.slane %v1911, 7
      %v1914 = vsel %vm584, %v1910, %v1913
      %v1915 = vshrl.u32 %v1757, 16
      %v1917 = vrot.slane %v1915, 6
      %v1918 = vor.u32 %v1917, %v1913
      %v1919 = vrot.slane %v1918, 2
      %v1921 = vshll.u32 %v1760, 16
      %v1923 = vrot.slane %v1921, 7
      %v1924 = vsel %vm584, %v1919, %v1923
      %v1925 = vshrl.u32 %v1763, 16
      %v1927 = vrot.slane %v1925, 6
      %v1928 = vshll.u32 %v1763, 16
      %v1930 = vrot.slane %v1928, 7
      %v1931 = vor.u32 %v1927, %v1930
      %v1932 = vrot.slane %v1931, 2
      %v1934 = vshll.u32 %v1766, 16
      %v1936 = vrot.slane %v1934, 7
      %v1937 = vsel %vm584, %v1932, %v1936
      %v1938 = vshrl.u32 %v1766, 16
      %v1940 = vrot.slane %v1938, 6
      %v1941 = vor.u32 %v1940, %v1936
      %v1942 = vrot.slane %v1941, 2
      %v1943 = vshll.u32 %v1769, 16
      %v1945 = vrot.slane %v1943, 7
      %v1946 = vsel %vm584, %v1942, %v1945
      %v1947 = vshrl.u32 %v1769, 16
      %v1949 = vrot.slane %v1947, 6
      %v1950 = vor.u32 %v1949, %v1945
      %v1951 = vrot.slane %v1950, 2
      %v1953 = vshll.u32 %v1772, 16
      %v1955 = vrot.slane %v1953, 7
      %v1956 = vsel %vm584, %v1951, %v1955
      %v1957 = vshrl.u32 %v1775, 16
      %v1959 = vrot.slane %v1957, 6
      %v1960 = vshll.u32 %v1775, 16
      %v1962 = vrot.slane %v1960, 7
      %v1963 = vor.u32 %v1959, %v1962
      %v1964 = vrot.slane %v1963, 2
      %v1966 = vshll.u32 %v1778, 16
      %v1968 = vrot.slane %v1966, 7
      %v1969 = vsel %vm584, %v1964, %v1968
      %v1970 = vshrl.u32 %v1778, 16
      %v1972 = vrot.slane %v1970, 6
      %v1973 = vor.u32 %v1972, %v1968
      %v1974 = vrot.slane %v1973, 2
      %v1975 = vshll.u32 %v1781, 16
      %v1977 = vrot.slane %v1975, 7
      %v1978 = vsel %vm584, %v1974, %v1977
      %v1979 = vshrl.u32 %v1781, 16
      %v1981 = vrot.slane %v1979, 6
      %v1982 = vor.u32 %v1981, %v1977
      %v1983 = vrot.slane %v1982, 2
      %v1985 = vshll.u32 %v1784, 16
      %v1987 = vrot.slane %v1985, 7
      %v1988 = vsel %vm584, %v1983, %v1987
      %v1989 = vshrl.u32 %v1787, 16
      %v1991 = vrot.slane %v1989, 6
      %v1992 = vshll.u32 %v1787, 16
      %v1994 = vrot.slane %v1992, 7
      %v1995 = vor.u32 %v1991, %v1994
      %v1996 = vrot.slane %v1995, 2
      %v1998 = vshll.u32 %v1790, 16
      %v2000 = vrot.slane %v1998, 7
      %v2001 = vsel %vm584, %v1996, %v2000
      %v2002 = vshrl.u32 %v1790, 16
      %v2004 = vrot.slane %v2002, 6
      %v2005 = vor.u32 %v2004, %v2000
      %v2006 = vrot.slane %v2005, 2
      %v2007 = vshll.u32 %v1793, 16
      %v2009 = vrot.slane %v2007, 7
      %v2010 = vsel %vm584, %v2006, %v2009
      %v2011 = vshrl.u32 %v1793, 16
      %v2013 = vrot.slane %v2011, 6
      %v2014 = vor.u32 %v2013, %v2009
      %v2015 = vrot.slane %v2014, 2
      %v2017 = vshll.u32 %v1796, 16
      %v2019 = vrot.slane %v2017, 7
      %v2020 = vsel %vm584, %v2015, %v2019
      %v2021 = vshrl.u32 %v1799, 16
      %v2023 = vrot.slane %v2021, 6
      %v2024 = vshll.u32 %v1799, 16
      %v2026 = vrot.slane %v2024, 7
      %v2027 = vor.u32 %v2023, %v2026
      %v2028 = vrot.slane %v2027, 2
      %v2030 = vshll.u32 %v1802, 16
      %v2032 = vrot.slane %v2030, 7
      %v2033 = vsel %vm584, %v2028, %v2032
      %v2034 = vshrl.u32 %v1802, 16
      %v2036 = vrot.slane %v2034, 6
      %v2037 = vor.u32 %v2036, %v2032
      %v2038 = vrot.slane %v2037, 2
      %v2039 = vshll.u32 %v1805, 16
      %v2041 = vrot.slane %v2039, 7
      %v2042 = vsel %vm584, %v2038, %v2041
      %v2043 = vshrl.u32 %v1805, 16
      %v2045 = vrot.slane %v2043, 6
      %v2046 = vor.u32 %v2045, %v2041
      %v2047 = vrot.slane %v2046, 2
      %v2049 = vshll.u32 %v1808, 16
      %v2051 = vrot.slane %v2049, 7
      %v2052 = vsel %vm584, %v2047, %v2051
      %v2053 = vshrl.u32 %v1811, 16
      %v2055 = vrot.slane %v2053, 6
      %v2056 = vshll.u32 %v1811, 16
      %v2058 = vrot.slane %v2056, 7
      %v2059 = vor.u32 %v2055, %v2058
      %v2060 = vrot.slane %v2059, 2
      %v2062 = vshll.u32 %v1814, 16
      %v2064 = vrot.slane %v2062, 7
      %v2065 = vsel %vm584, %v2060, %v2064
      %v2066 = vshrl.u32 %v1814, 16
      %v2068 = vrot.slane %v2066, 6
      %v2069 = vor.u32 %v2068, %v2064
      %v2070 = vrot.slane %v2069, 2
      %v2071 = vshll.u32 %v1817, 16
      %v2073 = vrot.slane %v2071, 7
      %v2074 = vsel %vm584, %v2070, %v2073
      %v2075 = vshrl.u32 %v1817, 16
      %v2077 = vrot.slane %v2075, 6
      %v2078 = vor.u32 %v2077, %v2073
      %v2079 = vrot.slane %v2078, 2
      %v2081 = vshll.u32 %v1820, 16
      %v2083 = vrot.slane %v2081, 7
      %v2084 = vsel %vm584, %v2079, %v2083
      %v2085 = vshrl.u32 %v1823, 16
      %v2087 = vrot.slane %v2085, 6
      %v2088 = vshll.u32 %v1823, 16
      %v2090 = vrot.slane %v2088, 7
      %v2091 = vor.u32 %v2087, %v2090
      %v2092 = vrot.slane %v2091, 2
      %v2094 = vshll.u32 %v1826, 16
      %v2096 = vrot.slane %v2094, 7
      %v2097 = vsel %vm584, %v2092, %v2096
      %v2098 = vshrl.u32 %v1826, 16
      %v2100 = vrot.slane %v2098, 6
      %v2101 = vor.u32 %v2100, %v2096
      %v2102 = vrot.slane %v2101, 2
      %v2103 = vshll.u32 %v1829, 16
      %v2105 = vrot.slane %v2103, 7
      %v2106 = vsel %vm584, %v2102, %v2105
      %v2107 = vshrl.u32 %v1829, 16
      %v2109 = vrot.slane %v2107, 6
      %v2110 = vor.u32 %v2109, %v2105
      %v2111 = vrot.slane %v2110, 2
      %v2113 = vshll.u32 %v1832, 16
      %v2115 = vrot.slane %v2113, 7
      %v2116 = vsel %vm584, %v2111, %v2115
      %v2117 = vshrl.u32 %v1835, 16
      %v2119 = vrot.slane %v2117, 6
      %v2120 = vshll.u32 %v1835, 16
      %v2122 = vrot.slane %v2120, 7
      %v2123 = vor.u32 %v2119, %v2122
      %v2124 = vrot.slane %v2123, 2
      %v2126 = vshll.u32 %v1838, 16
      %v2128 = vrot.slane %v2126, 7
      %v2129 = vsel %vm584, %v2124, %v2128
      %v2130 = vshrl.u32 %v1838, 16
      %v2132 = vrot.slane %v2130, 6
      %v2133 = vor.u32 %v2132, %v2128
      %v2134 = vrot.slane %v2133, 2
      %v2135 = vshll.u32 %v1841, 16
      %v2137 = vrot.slane %v2135, 7
      %v2138 = vsel %vm584, %v2134, %v2137
      %v2139 = vshrl.u32 %v1841, 16
      %v2141 = vrot.slane %v2139, 6
      %v2142 = vor.u32 %v2141, %v2137
      %v2143 = vrot.slane %v2142, 2
      %v2145 = vshll.u32 %v1844, 16
      %v2147 = vrot.slane %v2145, 7
      %v2148 = vsel %vm584, %v2143, %v2147
      %v2149 = vshrl.u32 %v1847, 16
      %v2151 = vrot.slane %v2149, 6
      %v2152 = vshll.u32 %v1847, 16
      %v2154 = vrot.slane %v2152, 7
      %v2155 = vor.u32 %v2151, %v2154
      %v2156 = vrot.slane %v2155, 2
      %v2158 = vshll.u32 %v1850, 16
      %v2160 = vrot.slane %v2158, 7
      %v2161 = vsel %vm584, %v2156, %v2160
      %v2162 = vshrl.u32 %v1850, 16
      %v2164 = vrot.slane %v2162, 6
      %v2165 = vor.u32 %v2164, %v2160
      %v2166 = vrot.slane %v2165, 2
      %v2167 = vshll.u32 %v1853, 16
      %v2169 = vrot.slane %v2167, 7
      %v2170 = vsel %vm584, %v2166, %v2169
      %v2171 = vshrl.u32 %v1853, 16
      %v2173 = vrot.slane %v2171, 6
      %v2174 = vor.u32 %v2173, %v2169
      %v2175 = vrot.slane %v2174, 2
      %v2177 = vshll.u32 %v1856, 16
      %v2179 = vrot.slane %v2177, 7
      %v2180 = vsel %vm584, %v2175, %v2179
      %v2181 = vshrl.u32 %v1859, 16
      %v2183 = vrot.slane %v2181, 6
      %v2184 = vshll.u32 %v1859, 16
      %v2186 = vrot.slane %v2184, 7
      %v2187 = vor.u32 %v2183, %v2186
      %v2188 = vrot.slane %v2187, 2
      %v2190 = vshll.u32 %v1862, 16
      %v2192 = vrot.slane %v2190, 7
      %v2193 = vsel %vm584, %v2188, %v2192
      %v2194 = vshrl.u32 %v1862, 16
      %v2196 = vrot.slane %v2194, 6
      %v2197 = vor.u32 %v2196, %v2192
      %v2198 = vrot.slane %v2197, 2
      %v2199 = vshll.u32 %v1865, 16
      %v2201 = vrot.slane %v2199, 7
      %v2202 = vsel %vm584, %v2198, %v2201
      %v2203 = vshrl.u32 %v1865, 16
      %v2205 = vrot.slane %v2203, 6
      %v2206 = vor.u32 %v2205, %v2201
      %v2207 = vrot.slane %v2206, 2
      %v2209 = vshll.u32 %v1868, 16
      %v2211 = vrot.slane %v2209, 7
      %v2212 = vsel %vm584, %v2207, %v2211
      %v2213 = vshrl.u32 %v1871, 16
      %v2215 = vrot.slane %v2213, 6
      %v2216 = vshll.u32 %v1871, 16
      %v2218 = vrot.slane %v2216, 7
      %v2219 = vor.u32 %v2215, %v2218
      %v2220 = vrot.slane %v2219, 2
      %v2222 = vshll.u32 %v1874, 16
      %v2224 = vrot.slane %v2222, 7
      %v2225 = vsel %vm584, %v2220, %v2224
      %v2226 = vshrl.u32 %v1874, 16
      %v2228 = vrot.slane %v2226, 6
      %v2229 = vor.u32 %v2228, %v2224
      %v2230 = vrot.slane %v2229, 2
      %v2231 = vshll.u32 %v1877, 16
      %v2233 = vrot.slane %v2231, 7
      %v2234 = vsel %vm584, %v2230, %v2233
      %v2235 = vshrl.u32 %v1877, 16
      %v2237 = vrot.slane %v2235, 6
      %v2238 = vor.u32 %v2237, %v2233
      %v2239 = vrot.slane %v2238, 2
      %v2241 = vshll.u32 %v1880, 16
      %v2243 = vrot.slane %v2241, 7
      %v2244 = vsel %vm584, %v2239, %v2243
      %v2245 = vshrl.u32 %v1883, 16
      %v2247 = vrot.slane %v2245, 6
      %v2248 = vshll.u32 %v1883, 16
      %v2250 = vrot.slane %v2248, 7
      %v2251 = vor.u32 %v2247, %v2250
      %v2252 = vrot.slane %v2251, 2
      %v2254 = vshll.u32 %v1886, 16
      %v2256 = vrot.slane %v2254, 7
      %v2257 = vsel %vm584, %v2252, %v2256
      %v2258 = vshrl.u32 %v1886, 16
      %v2260 = vrot.slane %v2258, 6
      %v2261 = vor.u32 %v2260, %v2256
      %v2262 = vrot.slane %v2261, 2
      %v2263 = vshll.u32 %v1889, 16
      %v2265 = vrot.slane %v2263, 7
      %v2266 = vsel %vm584, %v2262, %v2265
      %v2267 = vshrl.u32 %v1889, 16
      %v2269 = vrot.slane %v2267, 6
      %v2270 = vor.u32 %v2269, %v2265
      %v2271 = vrot.slane %v2270, 2
      %v2273 = vshll.u32 %v1892, 16
      %v2275 = vrot.slane %v2273, 7
      %v2276 = vsel %vm584, %v2271, %v2275
      %v2277 = vld [vmem:[%s1 + $0x60] sm:$0xf]
      %v2278 = vld [vmem:[%s1 + $0x64] sm:$0xf]
      %v2279 = vld [vmem:[%s1 + $0x68] sm:$0xf]
      %v2280 = vld [vmem:[%s1 + $0x6c] sm:$0xf]
      %v2281 = vld [vmem:[%s1 + $0x70] sm:$0xf]
      %v2282 = vld [vmem:[%s1 + $0x74] sm:$0xf]
      %v2283 = vld [vmem:[%s1 + $0x78] sm:$0xf]
      %v2284 = vld [vmem:[%s1 + $0x7c] sm:$0xf]
      %2286 = vst [vmem:[#allocation1] ss:$4 sm:$0xff] %v1905
      %s2288 = scalar_lea.vmem [#allocation1], 1
      %2289 = vst [vmem:[%s2288] ss:$4 sm:$0xff] %v1914
      %s2291 = scalar_lea.vmem [#allocation1], 2
      %2292 = vst [vmem:[%s2291] ss:$4 sm:$0xff] %v1924
      %s2294 = scalar_lea.vmem [#allocation1], 3
      %2295 = vst [vmem:[%s2294] ss:$4 sm:$0xff] %v1937
      %s2297 = scalar_lea.vmem [#allocation1], 32
      %2298 = vst [vmem:[%s2297] ss:$4 sm:$0xff] %v1946
      %s2300 = scalar_lea.vmem [#allocation1], 33
      %2301 = vst [vmem:[%s2300] ss:$4 sm:$0xff] %v1956
      %s2303 = scalar_lea.vmem [#allocation1], 34
      %2304 = vst [vmem:[%s2303] ss:$4 sm:$0xff] %v1969
      %s2306 = scalar_lea.vmem [#allocation1], 35
      %2307 = vst [vmem:[%s2306] ss:$4 sm:$0xff] %v1978
      %v2308 = vld.sshfl [vmem:[#allocation1] sm:$0xff pattern:$0x73625140]
      %v2309 = vld.sshfl [vmem:[#allocation1 + $0x20] sm:$0xff pattern:$0x73625140]
      %2311 = vst [vmem:[#allocation1] ss:$4 sm:$0xff] %v1988
      %2313 = vst [vmem:[%s2288] ss:$4 sm:$0xff] %v2001
      %2315 = vst [vmem:[%s2291] ss:$4 sm:$0xff] %v2010
      %2317 = vst [vmem:[%s2294] ss:$4 sm:$0xff] %v2020
      %2319 = vst [vmem:[%s2297] ss:$4 sm:$0xff] %v2033
      %2321 = vst [vmem:[%s2300] ss:$4 sm:$0xff] %v2042
      %2323 = vst [vmem:[%s2303] ss:$4 sm:$0xff] %v2052
      %2325 = vst [vmem:[%s2306] ss:$4 sm:$0xff] %v2065
      %v2326 = vld.sshfl [vmem:[#allocation1] sm:$0xff pattern:$0x73625140]
      %v2327 = vld.sshfl [vmem:[#allocation1 + $0x20] sm:$0xff pattern:$0x73625140]
      %2329 = vst [vmem:[#allocation1] ss:$4 sm:$0xff] %v2074
      %2331 = vst [vmem:[%s2288] ss:$4 sm:$0xff] %v2084
      %2333 = vst [vmem:[%s2291] ss:$4 sm:$0xff] %v2097
      %2335 = vst [vmem:[%s2294] ss:$4 sm:$0xff] %v2106
      %2337 = vst [vmem:[%s2297] ss:$4 sm:$0xff] %v2116
      %2339 = vst [vmem:[%s2300] ss:$4 sm:$0xff] %v2129
      %2341 = vst [vmem:[%s2303] ss:$4 sm:$0xff] %v2138
      %2343 = vst [vmem:[%s2306] ss:$4 sm:$0xff] %v2148
      %v2344 = vld.sshfl [vmem:[#allocation1] sm:$0xff pattern:$0x73625140]
      %v2345 = vld.sshfl [vmem:[#allocation1 + $0x20] sm:$0xff pattern:$0x73625140]
      %2347 = vst [vmem:[#allocation1] ss:$4 sm:$0xff] %v2161
      %2349 = vst [vmem:[%s2288] ss:$4 sm:$0xff] %v2170
      %2351 = vst [vmem:[%s2291] ss:$4 sm:$0xff] %v2180
      %2353 = vst [vmem:[%s2294] ss:$4 sm:$0xff] %v2193
      %2355 = vst [vmem:[%s2297] ss:$4 sm:$0xff] %v2202
      %2357 = vst [vmem:[%s2300] ss:$4 sm:$0xff] %v2212
      %2359 = vst [vmem:[%s2303] ss:$4 sm:$0xff] %v2225
      %2361 = vst [vmem:[%s2306] ss:$4 sm:$0xff] %v2234
      %v2362 = vld.sshfl [vmem:[#allocation1] sm:$0xff pattern:$0x73625140]
      %v2363 = vld.sshfl [vmem:[#allocation1 + $0x20] sm:$0xff pattern:$0x73625140]
      %2365 = vst [vmem:[#allocation1] ss:$4 sm:$0xff] %v2244
      %2367 = vst [vmem:[%s2288] ss:$4 sm:$0xff] %v2257
      %2369 = vst [vmem:[%s2291] ss:$4 sm:$0xff] %v2266
      %2371 = vst [vmem:[%s2294] ss:$4 sm:$0xff] %v2276
      %v2372 = vld.sshfl [vmem:[#allocation1] sm:$0xff pattern:$0x73625140]
      %v2381 = vunpack.c.l.b16 %v2277
      %v2382 = vunpack.c.l.b16 %v2278
      %v2383 = vunpack.c.l.b16 %v2279
      %v2384 = vunpack.c.l.b16 %v2280
      %v2385 = vunpack.c.l.b16 %v2281
      %v2386 = vunpack.c.l.b16 %v2282
      %v2387 = vunpack.c.l.b16 %v2283
      %v2388 = vunpack.c.l.b16 %v2284
      %v2389 = vpack.c.b16 %v2382, %v2381
      %v2390 = vpack.c.b16 %v2384, %v2383
      %v2391 = vpack.c.b16 %v2386, %v2385
      %v2392 = vpack.c.b16 %v2388, %v2387
      %v2397 = vsel %vm1089, %v2308, 0
      %v2399 = vsel %vm1089, %v2309, 0
      %v2401 = vsel %vm1089, %v2326, 0
      %v2403 = vsel %vm1089, %v2327, 0
      %v2405 = vsel %vm1089, %v2344, 0
      %v2407 = vsel %vm1089, %v2345, 0
      %v2409 = vsel %vm1089, %v2362, 0
      %v2411 = vsel %vm1089, %v2363, 0
      %v2413 = vsel %vm1089, %v2372, 0
      %2415 = vmatpush.bf16.msra.mxu0 0
      %2416 = vmatpush.bf16.msra.mxu0 0
      %2417 = vmatpush.bf16.msra.mxu0 0
      %2418 = vmatpush.bf16.msra.mxu0 0
      %2419 = vmatpush.bf16.msra.mxu0 %v2392
      %2420 = vmatpush.bf16.msra.mxu0 %v2391
      %2421 = vmatpush.bf16.msra.mxu0 %v2390
      %2422 = vmatpush.bf16.msra.mxu0 %v2389
      %2423 = vmatmul.bf16.gmra.mxu0 %v2397
      %v2424 = vpop.f32.mrf.mxu0
      %v2425 = vadd.f32 0.0, %v2424
      %v2426 = vpop.f32.mrf.mxu0
      %v2427 = vadd.f32 0.0, %v2426
      %2428 = vmatmul.bf16.gmra.mxu0 %v2399
      %v2429 = vpop.f32.mrf.mxu0
      %v2430 = vadd.f32 0.0, %v2429
      %v2431 = vpop.f32.mrf.mxu0
      %v2432 = vadd.f32 0.0, %v2431
      %2433 = vmatmul.bf16.gmra.mxu0 %v2401
      %v2434 = vpop.f32.mrf.mxu0
      %v2435 = vadd.f32 0.0, %v2434
      %v2436 = vpop.f32.mrf.mxu0
      %v2437 = vadd.f32 0.0, %v2436
      %2438 = vmatmul.bf16.gmra.mxu0 %v2403
      %v2439 = vpop.f32.mrf.mxu0
      %v2440 = vadd.f32 0.0, %v2439
      %v2441 = vpop.f32.mrf.mxu0
      %v2442 = vadd.f32 0.0, %v2441
      %2443 = vmatmul.bf16.gmra.mxu0 %v2405
      %v2444 = vpop.f32.mrf.mxu0
      %v2445 = vadd.f32 0.0, %v2444
      %v2446 = vpop.f32.mrf.mxu0
      %v2447 = vadd.f32 0.0, %v2446
      %2448 = vmatmul.bf16.gmra.mxu0 %v2407
      %v2449 = vpop.f32.mrf.mxu0
      %v2450 = vadd.f32 0.0, %v2449
      %v2451 = vpop.f32.mrf.mxu0
      %v2452 = vadd.f32 0.0, %v2451
      %2453 = vmatmul.bf16.gmra.mxu0 %v2409
      %v2454 = vpop.f32.mrf.mxu0
      %v2455 = vadd.f32 0.0, %v2454
      %v2456 = vpop.f32.mrf.mxu0
      %v2457 = vadd.f32 0.0, %v2456
      %2458 = vmatmul.bf16.gmra.mxu0 %v2411
      %v2459 = vpop.f32.mrf.mxu0
      %v2460 = vadd.f32 0.0, %v2459
      %v2461 = vpop.f32.mrf.mxu0
      %v2462 = vadd.f32 0.0, %v2461
      %2463 = vmatmul.bf16.gmra.mxu0 %v2413
      %v2464 = vpop.f32.mrf.mxu0
      %v2465 = vadd.f32 0.0, %v2464
      %v2466 = vpop.f32.mrf.mxu0
      %v2467 = vadd.f32 0.0, %v2466
      %2468 = vdwg.mxu0
      %v2469 = vadd.f32 %v1659, %v2425
      %v2470 = vadd.f32 %v1660, %v2427
      %v2471 = vadd.f32 %v1661, %v2430
      %v2472 = vadd.f32 %v1662, %v2432
      %v2473 = vadd.f32 %v1663, %v2435
      %v2474 = vadd.f32 %v1664, %v2437
      %v2475 = vadd.f32 %v1665, %v2440
      %v2476 = vadd.f32 %v1666, %v2442
      %v2477 = vadd.f32 %v1667, %v2445
      %v2478 = vadd.f32 %v1668, %v2447
      %v2479 = vadd.f32 %v1669, %v2450
      %v2480 = vadd.f32 %v1670, %v2452
      %v2481 = vadd.f32 %v1671, %v2455
      %v2482 = vadd.f32 %v1672, %v2457
      %v2483 = vadd.f32 %v1673, %v2460
      %v2484 = vadd.f32 %v1674, %v2462
      %v2485 = vadd.f32 %v1675, %v2465
      %v2486 = vadd.f32 %v1676, %v2467
      %v2487 = vld [vmem:[%s4] sm:$0x1]
      %v2489 = vperm.slane %v2487, 0
      %v2491 = vadd.f32 %v2469, %v2489
      %v2492 = vadd.f32 %v2470, %v2489
      %v2493 = vadd.f32 %v2471, %v2489
      %v2494 = vadd.f32 %v2472, %v2489
      %v2495 = vadd.f32 %v2473, %v2489
      %v2496 = vadd.f32 %v2474, %v2489
      %v2497 = vadd.f32 %v2475, %v2489
      %v2498 = vadd.f32 %v2476, %v2489
      %v2499 = vadd.f32 %v2477, %v2489
      %v2500 = vadd.f32 %v2478, %v2489
      %v2501 = vadd.f32 %v2479, %v2489
      %v2502 = vadd.f32 %v2480, %v2489
      %v2503 = vadd.f32 %v2481, %v2489
      %v2504 = vadd.f32 %v2482, %v2489
      %v2505 = vadd.f32 %v2483, %v2489
      %v2506 = vadd.f32 %v2484, %v2489
      %v2507 = vadd.f32 %v2485, %v2489
      %v2508 = vadd.f32 %v2486, %v2489
      %v2527 = vrot.slane %v2491, 2
      %v2528 = vrot.slane %v2491, 4
      %v2529 = vrot.slane %v2491, 6
      %v2530 = vrot.slane %v2492, 2
      %v2531 = vrot.slane %v2492, 4
      %v2532 = vrot.slane %v2492, 6
      %v2533 = vrot.slane %v2493, 2
      %v2534 = vrot.slane %v2493, 4
      %v2535 = vrot.slane %v2493, 6
      %v2536 = vrot.slane %v2494, 2
      %v2537 = vrot.slane %v2494, 4
      %v2538 = vrot.slane %v2494, 6
      %v2539 = vrot.slane %v2495, 2
      %v2540 = vrot.slane %v2495, 4
      %v2541 = vrot.slane %v2495, 6
      %v2542 = vrot.slane %v2496, 2
      %v2543 = vrot.slane %v2496, 4
      %v2544 = vrot.slane %v2496, 6
      %v2545 = vrot.slane %v2497, 2
      %v2546 = vrot.slane %v2497, 4
      %v2547 = vrot.slane %v2497, 6
      %v2548 = vrot.slane %v2498, 2
      %v2549 = vrot.slane %v2498, 4
      %v2550 = vrot.slane %v2498, 6
      %v2551 = vrot.slane %v2499, 2
      %v2552 = vrot.slane %v2499, 4
      %v2553 = vrot.slane %v2499, 6
      %v2554 = vrot.slane %v2500, 2
      %v2555 = vrot.slane %v2500, 4
      %v2556 = vrot.slane %v2500, 6
      %v2557 = vrot.slane %v2501, 2
      %v2558 = vrot.slane %v2501, 4
      %v2559 = vrot.slane %v2501, 6
      %v2560 = vrot.slane %v2502, 2
      %v2561 = vrot.slane %v2502, 4
      %v2562 = vrot.slane %v2502, 6
      %v2563 = vrot.slane %v2503, 2
      %v2564 = vrot.slane %v2503, 4
      %v2565 = vrot.slane %v2503, 6
      %v2566 = vrot.slane %v2504, 2
      %v2567 = vrot.slane %v2504, 4
      %v2568 = vrot.slane %v2504, 6
      %v2569 = vrot.slane %v2505, 2
      %v2570 = vrot.slane %v2505, 4
      %v2571 = vrot.slane %v2505, 6
      %v2572 = vrot.slane %v2506, 2
      %v2573 = vrot.slane %v2506, 4
      %v2574 = vrot.slane %v2506, 6
      %v2575 = vrot.slane %v2507, 2
      %v2576 = vrot.slane %v2507, 4
      %v2577 = vrot.slane %v2507, 6
      %v2578 = vrot.slane %v2508, 2
      %v2579 = vrot.slane %v2508, 4
      %v2580 = vrot.slane %v2508, 6
      %v2635 = vpack.c.bf16 %v2491, %v2491
      %v2636 = vpack.c.bf16 %v2527, %v2527
      %v2637 = vpack.c.bf16 %v2528, %v2528
      %v2638 = vpack.c.bf16 %v2529, %v2529
      %v2639 = vpack.c.bf16 %v2492, %v2492
      %v2640 = vpack.c.bf16 %v2494, %v2494
      %v2641 = vpack.c.bf16 %v2536, %v2536
      %v2642 = vpack.c.bf16 %v2537, %v2537
      %v2643 = vpack.c.bf16 %v2538, %v2538
      %v2644 = vpack.c.bf16 %v2495, %v2495
      %v2645 = vpack.c.bf16 %v2497, %v2497
      %v2646 = vpack.c.bf16 %v2545, %v2545
      %v2647 = vpack.c.bf16 %v2546, %v2546
      %v2648 = vpack.c.bf16 %v2547, %v2547
      %v2649 = vpack.c.bf16 %v2498, %v2498
      %v2650 = vpack.c.bf16 %v2500, %v2500
      %v2651 = vpack.c.bf16 %v2554, %v2554
      %v2652 = vpack.c.bf16 %v2555, %v2555
      %v2653 = vpack.c.bf16 %v2556, %v2556
      %v2654 = vpack.c.bf16 %v2501, %v2501
      %v2655 = vpack.c.bf16 %v2503, %v2503
      %v2656 = vpack.c.bf16 %v2563, %v2563
      %v2657 = vpack.c.bf16 %v2564, %v2564
      %v2658 = vpack.c.bf16 %v2565, %v2565
      %v2659 = vpack.c.bf16 %v2504, %v2504
      %v2660 = vld [vmem:[%s2] sm:$0xf]
      %v2661 = vld [vmem:[%s2 + $0x4] sm:$0xf]
      %v2662 = vld [vmem:[%s2 + $0x8] sm:$0xf]
      %v2663 = vld [vmem:[%s2 + $0xc] sm:$0xf]
      %v2664 = vld [vmem:[%s2 + $0x10] sm:$0xf]
      %v2665 = vld [vmem:[%s2 + $0x14] sm:$0xf]
      %v2666 = vld [vmem:[%s2 + $0x18] sm:$0xf]
      %v2667 = vld [vmem:[%s2 + $0x1c] sm:$0xf]
      %v2693 = vunpack.c.l.b16 %v2635
      %v2694 = vunpack.c.l.b16 %v2636
      %v2695 = vunpack.c.l.b16 %v2637
      %v2696 = vunpack.c.l.b16 %v2638
      %v2697 = vunpack.c.l.b16 %v2639
      %v2698 = vunpack.c.l.b16 %v2640
      %v2699 = vunpack.c.l.b16 %v2641
      %v2700 = vunpack.c.l.b16 %v2642
      %v2701 = vunpack.c.l.b16 %v2643
      %v2702 = vunpack.c.l.b16 %v2644
      %v2703 = vunpack.c.l.b16 %v2645
      %v2704 = vunpack.c.l.b16 %v2646
      %v2705 = vunpack.c.l.b16 %v2647
      %v2706 = vunpack.c.l.b16 %v2648
      %v2707 = vunpack.c.l.b16 %v2649
      %v2708 = vunpack.c.l.b16 %v2650
      %v2709 = vunpack.c.l.b16 %v2651
      %v2710 = vunpack.c.l.b16 %v2652
      %v2711 = vunpack.c.l.b16 %v2653
      %v2712 = vunpack.c.l.b16 %v2654
      %v2713 = vunpack.c.l.b16 %v2655
      %v2714 = vunpack.c.l.b16 %v2656
      %v2715 = vunpack.c.l.b16 %v2657
      %v2716 = vunpack.c.l.b16 %v2658
      %v2717 = vunpack.c.l.b16 %v2659
      %v2718 = vrot.slane %v2693, 1
      %vm2719 = vcmask 1041409
      %v2720 = vsel %vm2719, %v2694, %v2718
      %v2721 = vrot.slane %v2695, 7
      %vm2722 = vcmask 1042434
      %v2723 = vsel %vm2722, %v2721, %v2720
      %v2724 = vrot.slane %v2696, 6
      %vm2725 = vcmask 1043459
      %v2726 = vsel %vm2725, %v2724, %v2723
      %v2727 = vrot.slane %v2697, 5
      %vm2728 = vcmask 1044484
      %v2729 = vsel %vm2728, %v2727, %v2726
      %v2730 = vrot.slane %v2698, 4
      %vm2731 = vcmask 1045509
      %v2732 = vsel %vm2731, %v2730, %v2729
      %v2733 = vrot.slane %v2699, 3
      %vm2734 = vcmask 1046534
      %v2735 = vsel %vm2734, %v2733, %v2732
      %v2736 = vrot.slane %v2700, 2
      %vm2737 = vcmask 1047559
      %v2738 = vsel %vm2737, %v2736, %v2735
      %v2739 = vrot.slane %v2701, 1
      %v2740 = vsel %vm2719, %v2702, %v2739
      %v2741 = vrot.slane %v2703, 7
      %v2742 = vsel %vm2722, %v2741, %v2740
      %v2743 = vrot.slane %v2704, 6
      %v2744 = vsel %vm2725, %v2743, %v2742
      %v2745 = vrot.slane %v2705, 5
      %v2746 = vsel %vm2728, %v2745, %v2744
      %v2747 = vrot.slane %v2706, 4
      %v2748 = vsel %vm2731, %v2747, %v2746
      %v2749 = vrot.slane %v2707, 3
      %v2750 = vsel %vm2734, %v2749, %v2748
      %v2751 = vrot.slane %v2708, 2
      %v2752 = vsel %vm2737, %v2751, %v2750
      %v2753 = vrot.slane %v2709, 1
      %v2754 = vsel %vm2719, %v2710, %v2753
      %v2755 = vrot.slane %v2711, 7
      %v2756 = vsel %vm2722, %v2755, %v2754
      %v2757 = vrot.slane %v2712, 6
      %v2758 = vsel %vm2725, %v2757, %v2756
      %v2759 = vrot.slane %v2713, 5
      %v2760 = vsel %vm2728, %v2759, %v2758
      %v2761 = vrot.slane %v2714, 4
      %v2762 = vsel %vm2731, %v2761, %v2760
      %v2763 = vrot.slane %v2715, 3
      %v2764 = vsel %vm2734, %v2763, %v2762
      %v2765 = vrot.slane %v2716, 2
      %v2766 = vsel %vm2737, %v2765, %v2764
      %v2767 = vrot.slane %v2717, 1
      %v2768 = vpack.c.b16 %v2752, %v2738
      %v2769 = vpack.c.b16 %v2767, %v2766
      %v2774 = vunpack.c.l.b16 %v2664
      %v2775 = vunpack.c.l.b16 %v2665
      %v2776 = vunpack.c.l.b16 %v2666
      %v2777 = vunpack.c.l.b16 %v2667
      %v2778 = vpack.c.b16 %v2775, %v2774
      %v2779 = vpack.c.b16 %v2777, %v2776
      %vm2782 = vcmask 261120
      %v2784 = vsel %vm2782, %v2768, 0
      %v2787 = vsel %vm2782, %v2769, 0
      %2789 = vmatpush.bf16.msra.mxu0 0
      %2790 = vmatpush.bf16.msra.mxu0 0
      %2791 = vmatpush.bf16.msra.mxu0 0
      %2792 = vmatpush.bf16.msra.mxu0 0
      %2793 = vmatpush.bf16.msra.mxu0 0
      %2794 = vmatpush.bf16.msra.mxu0 0
      %2795 = vmatpush.bf16.msra.mxu0 %v2779
      %2796 = vmatpush.bf16.msra.mxu0 %v2778
      %2797 = vmatmul.bf16.gmra.mxu0 %v2784
      %v2798 = vpop.f32.mrf.mxu0
      %v2799 = vadd.f32 0.0, %v2798
      %v2800 = vpop.f32.mrf.mxu0
      %v2801 = vadd.f32 0.0, %v2800
      %2802 = vmatmul.bf16.gmra.mxu0 %v2787
      %v2803 = vpop.f32.mrf.mxu0
      %v2804 = vadd.f32 0.0, %v2803
      %v2805 = vpop.f32.mrf.mxu0
      %v2806 = vadd.f32 0.0, %v2805
      %2807 = vdwg.mxu0
      %v2808 = vrot.slane %v2694, 7
      %v2809 = vsel %vm2719, %v2808, %v2693
      %v2810 = vrot.slane %v2695, 6
      %v2811 = vsel %vm2722, %v2810, %v2809
      %v2812 = vrot.slane %v2696, 5
      %v2813 = vsel %vm2725, %v2812, %v2811
      %v2814 = vrot.slane %v2697, 4
      %v2815 = vsel %vm2728, %v2814, %v2813
      %v2816 = vrot.slane %v2698, 3
      %v2817 = vsel %vm2731, %v2816, %v2815
      %v2818 = vrot.slane %v2699, 2
      %v2819 = vsel %vm2734, %v2818, %v2817
      %v2820 = vrot.slane %v2700, 1
      %v2821 = vsel %vm2737, %v2820, %v2819
      %v2822 = vrot.slane %v2702, 7
      %v2823 = vsel %vm2719, %v2822, %v2701
      %v2824 = vrot.slane %v2703, 6
      %v2825 = vsel %vm2722, %v2824, %v2823
      %v2826 = vrot.slane %v2704, 5
      %v2827 = vsel %vm2725, %v2826, %v2825
      %v2828 = vrot.slane %v2705, 4
      %v2829 = vsel %vm2728, %v2828, %v2827
      %v2830 = vrot.slane %v2706, 3
      %v2831 = vsel %vm2731, %v2830, %v2829
      %v2832 = vrot.slane %v2707, 2
      %v2833 = vsel %vm2734, %v2832, %v2831
      %v2834 = vrot.slane %v2708, 1
      %v2835 = vsel %vm2737, %v2834, %v2833
      %v2836 = vrot.slane %v2710, 7
      %v2837 = vsel %vm2719, %v2836, %v2709
      %v2838 = vrot.slane %v2711, 6
      %v2839 = vsel %vm2722, %v2838, %v2837
      %v2840 = vrot.slane %v2712, 5
      %v2841 = vsel %vm2725, %v2840, %v2839
      %v2842 = vrot.slane %v2713, 4
      %v2843 = vsel %vm2728, %v2842, %v2841
      %v2844 = vrot.slane %v2714, 3
      %v2845 = vsel %vm2731, %v2844, %v2843
      %v2846 = vrot.slane %v2715, 2
      %v2847 = vsel %vm2734, %v2846, %v2845
      %v2848 = vrot.slane %v2716, 1
      %v2849 = vsel %vm2737, %v2848, %v2847
      %v2850 = vpack.c.b16 %v2835, %v2821
      %v2851 = vpack.c.b16 %v2717, %v2849
      %v2856 = vunpack.c.l.b16 %v2660
      %v2857 = vunpack.c.l.b16 %v2661
      %v2858 = vunpack.c.l.b16 %v2662
      %v2859 = vunpack.c.l.b16 %v2663
      %v2860 = vpack.c.b16 %v2857, %v2856
      %v2861 = vpack.c.b16 %v2859, %v2858
      %v2865 = vsel %vm2782, %v2850, 0
      %v2868 = vsel %vm2782, %v2851, 0
      %2870 = vmatpush.bf16.msra.mxu0 0
      %2871 = vmatpush.bf16.msra.mxu0 0
      %2872 = vmatpush.bf16.msra.mxu0 0
      %2873 = vmatpush.bf16.msra.mxu0 0
      %2874 = vmatpush.bf16.msra.mxu0 0
      %2875 = vmatpush.bf16.msra.mxu0 0
      %2876 = vmatpush.bf16.msra.mxu0 %v2861
      %2877 = vmatpush.bf16.msra.mxu0 %v2860
      %2878 = vmatmul.bf16.gmra.mxu0 %v2865
      %v2879 = vpop.f32.mrf.mxu0
      %v2880 = vadd.f32 %v2799, %v2879
      %v2881 = vpop.f32.mrf.mxu0
      %v2882 = vadd.f32 %v2801, %v2881
      %2883 = vmatmul.bf16.gmra.mxu0 %v2868
      %v2884 = vpop.f32.mrf.mxu0
      %v2885 = vadd.f32 %v2804, %v2884
      %v2886 = vpop.f32.mrf.mxu0
      %v2887 = vadd.f32 %v2806, %v2886
      %2888 = vdwg.mxu0
      %v2889 = vpack.c.bf16 %v2531, %v2531
      %v2890 = vpack.c.bf16 %v2532, %v2532
      %v2891 = vpack.c.bf16 %v2493, %v2493
      %v2892 = vpack.c.bf16 %v2533, %v2533
      %v2893 = vpack.c.bf16 %v2534, %v2534
      %v2894 = vpack.c.bf16 %v2540, %v2540
      %v2895 = vpack.c.bf16 %v2541, %v2541
      %v2896 = vpack.c.bf16 %v2496, %v2496
      %v2897 = vpack.c.bf16 %v2542, %v2542
      %v2898 = vpack.c.bf16 %v2543, %v2543
      %v2899 = vpack.c.bf16 %v2549, %v2549
      %v2900 = vpack.c.bf16 %v2550, %v2550
      %v2901 = vpack.c.bf16 %v2499, %v2499
      %v2902 = vpack.c.bf16 %v2551, %v2551
      %v2903 = vpack.c.bf16 %v2552, %v2552
      %v2904 = vpack.c.bf16 %v2558, %v2558
      %v2905 = vpack.c.bf16 %v2559, %v2559
      %v2906 = vpack.c.bf16 %v2502, %v2502
      %v2907 = vpack.c.bf16 %v2560, %v2560
      %v2908 = vpack.c.bf16 %v2561, %v2561
      %v2909 = vpack.c.bf16 %v2567, %v2567
      %v2910 = vpack.c.bf16 %v2568, %v2568
      %v2911 = vpack.c.bf16 %v2505, %v2505
      %v2912 = vpack.c.bf16 %v2569, %v2569
      %v2913 = vpack.c.bf16 %v2570, %v2570
      %v2914 = vld [vmem:[%s2 + $0x20] sm:$0xf]
      %v2915 = vld [vmem:[%s2 + $0x24] sm:$0xf]
      %v2916 = vld [vmem:[%s2 + $0x28] sm:$0xf]
      %v2917 = vld [vmem:[%s2 + $0x2c] sm:$0xf]
      %v2943 = vunpack.c.l.b16 %v2889
      %v2944 = vunpack.c.l.b16 %v2890
      %v2945 = vunpack.c.l.b16 %v2891
      %v2946 = vunpack.c.l.b16 %v2892
      %v2947 = vunpack.c.l.b16 %v2893
      %v2948 = vunpack.c.l.b16 %v2894
      %v2949 = vunpack.c.l.b16 %v2895
      %v2950 = vunpack.c.l.b16 %v2896
      %v2951 = vunpack.c.l.b16 %v2897
      %v2952 = vunpack.c.l.b16 %v2898
      %v2953 = vunpack.c.l.b16 %v2899
      %v2954 = vunpack.c.l.b16 %v2900
      %v2955 = vunpack.c.l.b16 %v2901
      %v2956 = vunpack.c.l.b16 %v2902
      %v2957 = vunpack.c.l.b16 %v2903
      %v2958 = vunpack.c.l.b16 %v2904
      %v2959 = vunpack.c.l.b16 %v2905
      %v2960 = vunpack.c.l.b16 %v2906
      %v2961 = vunpack.c.l.b16 %v2907
      %v2962 = vunpack.c.l.b16 %v2908
      %v2963 = vunpack.c.l.b16 %v2909
      %v2964 = vunpack.c.l.b16 %v2910
      %v2965 = vunpack.c.l.b16 %v2911
      %v2966 = vunpack.c.l.b16 %v2912
      %v2967 = vunpack.c.l.b16 %v2913
      %v2968 = vrot.slane %v2944, 7
      %v2969 = vsel %vm2719, %v2968, %v2943
      %v2970 = vrot.slane %v2945, 6
      %v2971 = vsel %vm2722, %v2970, %v2969
      %v2972 = vrot.slane %v2946, 5
      %v2973 = vsel %vm2725, %v2972, %v2971
      %v2974 = vrot.slane %v2947, 4
      %v2975 = vsel %vm2728, %v2974, %v2973
      %v2976 = vrot.slane %v2948, 3
      %v2977 = vsel %vm2731, %v2976, %v2975
      %v2978 = vrot.slane %v2949, 2
      %v2979 = vsel %vm2734, %v2978, %v2977
      %v2980 = vrot.slane %v2950, 1
      %v2981 = vsel %vm2737, %v2980, %v2979
      %v2982 = vrot.slane %v2952, 7
      %v2983 = vsel %vm2719, %v2982, %v2951
      %v2984 = vrot.slane %v2953, 6
      %v2985 = vsel %vm2722, %v2984, %v2983
      %v2986 = vrot.slane %v2954, 5
      %v2987 = vsel %vm2725, %v2986, %v2985
      %v2988 = vrot.slane %v2955, 4
      %v2989 = vsel %vm2728, %v2988, %v2987
      %v2990 = vrot.slane %v2956, 3
      %v2991 = vsel %vm2731, %v2990, %v2989
      %v2992 = vrot.slane %v2957, 2
      %v2993 = vsel %vm2734, %v2992, %v2991
      %v2994 = vrot.slane %v2958, 1
      %v2995 = vsel %vm2737, %v2994, %v2993
      %v2996 = vrot.slane %v2960, 7
      %v2997 = vsel %vm2719, %v2996, %v2959
      %v2998 = vrot.slane %v2961, 6
      %v2999 = vsel %vm2722, %v2998, %v2997
      %v3000 = vrot.slane %v2962, 5
      %v3001 = vsel %vm2725, %v3000, %v2999
      %v3002 = vrot.slane %v2963, 4
      %v3003 = vsel %vm2728, %v3002, %v3001
      %v3004 = vrot.slane %v2964, 3
      %v3005 = vsel %vm2731, %v3004, %v3003
      %v3006 = vrot.slane %v2965, 2
      %v3007 = vsel %vm2734, %v3006, %v3005
      %v3008 = vrot.slane %v2966, 1
      %v3009 = vsel %vm2737, %v3008, %v3007
      %v3010 = vpack.c.b16 %v2995, %v2981
      %v3011 = vpack.c.b16 %v2967, %v3009
      %v3016 = vunpack.c.l.b16 %v2914
      %v3017 = vunpack.c.l.b16 %v2915
      %v3018 = vunpack.c.l.b16 %v2916
      %v3019 = vunpack.c.l.b16 %v2917
      %v3020 = vpack.c.b16 %v3017, %v3016
      %v3021 = vpack.c.b16 %v3019, %v3018
      %v3025 = vsel %vm2782, %v3010, 0
      %v3028 = vsel %vm2782, %v3011, 0
      %3030 = vmatpush.bf16.msra.mxu0 0
      %3031 = vmatpush.bf16.msra.mxu0 0
      %3032 = vmatpush.bf16.msra.mxu0 0
      %3033 = vmatpush.bf16.msra.mxu0 0
      %3034 = vmatpush.bf16.msra.mxu0 0
      %3035 = vmatpush.bf16.msra.mxu0 0
      %3036 = vmatpush.bf16.msra.mxu0 %v3021
      %3037 = vmatpush.bf16.msra.mxu0 %v3020
      %3038 = vmatmul.bf16.gmra.mxu0 %v3025
      %v3039 = vpop.f32.mrf.mxu0
      %v3040 = vadd.f32 0.0, %v3039
      %v3041 = vpop.f32.mrf.mxu0
      %v3042 = vadd.f32 0.0, %v3041
      %3043 = vmatmul.bf16.gmra.mxu0 %v3028
      %v3044 = vpop.f32.mrf.mxu0
      %v3045 = vadd.f32 0.0, %v3044
      %v3046 = vpop.f32.mrf.mxu0
      %v3047 = vadd.f32 0.0, %v3046
      %3048 = vdwg.mxu0
      %v3049 = vadd.f32 %v2880, %v3040
      %v3050 = vadd.f32 %v2882, %v3042
      %v3051 = vadd.f32 %v2885, %v3045
      %v3052 = vadd.f32 %v2887, %v3047
      %v3053 = vld [vmem:[%s2 + $0x30] sm:$0xf]
      %v3054 = vld [vmem:[%s2 + $0x34] sm:$0xf]
      %v3055 = vld [vmem:[%s2 + $0x38] sm:$0xf]
      %v3056 = vld [vmem:[%s2 + $0x3c] sm:$0xf]
      %v3057 = vrot.slane %v2943, 1
      %v3058 = vsel %vm2719, %v2944, %v3057
      %v3059 = vrot.slane %v2945, 7
      %v3060 = vsel %vm2722, %v3059, %v3058
      %v3061 = vrot.slane %v2946, 6
      %v3062 = vsel %vm2725, %v3061, %v3060
      %v3063 = vrot.slane %v2947, 5
      %v3064 = vsel %vm2728, %v3063, %v3062
      %v3065 = vrot.slane %v2948, 4
      %v3066 = vsel %vm2731, %v3065, %v3064
      %v3067 = vrot.slane %v2949, 3
      %v3068 = vsel %vm2734, %v3067, %v3066
      %v3069 = vrot.slane %v2950, 2
      %v3070 = vsel %vm2737, %v3069, %v3068
      %v3071 = vrot.slane %v2951, 1
      %v3072 = vsel %vm2719, %v2952, %v3071
      %v3073 = vrot.slane %v2953, 7
      %v3074 = vsel %vm2722, %v3073, %v3072
      %v3075 = vrot.slane %v2954, 6
      %v3076 = vsel %vm2725, %v3075, %v3074
      %v3077 = vrot.slane %v2955, 5
      %v3078 = vsel %vm2728, %v3077, %v3076
      %v3079 = vrot.slane %v2956, 4
      %v3080 = vsel %vm2731, %v3079, %v3078
      %v3081 = vrot.slane %v2957, 3
      %v3082 = vsel %vm2734, %v3081, %v3080
      %v3083 = vrot.slane %v2958, 2
      %v3084 = vsel %vm2737, %v3083, %v3082
      %v3085 = vrot.slane %v2959, 1
      %v3086 = vsel %vm2719, %v2960, %v3085
      %v3087 = vrot.slane %v2961, 7
      %v3088 = vsel %vm2722, %v3087, %v3086
      %v3089 = vrot.slane %v2962, 6
      %v3090 = vsel %vm2725, %v3089, %v3088
      %v3091 = vrot.slane %v2963, 5
      %v3092 = vsel %vm2728, %v3091, %v3090
      %v3093 = vrot.slane %v2964, 4
      %v3094 = vsel %vm2731, %v3093, %v3092
      %v3095 = vrot.slane %v2965, 3
      %v3096 = vsel %vm2734, %v3095, %v3094
      %v3097 = vrot.slane %v2966, 2
      %v3098 = vsel %vm2737, %v3097, %v3096
      %v3099 = vrot.slane %v2967, 1
      %v3100 = vpack.c.b16 %v3084, %v3070
      %v3101 = vpack.c.b16 %v3099, %v3098
      %v3106 = vunpack.c.l.b16 %v3053
      %v3107 = vunpack.c.l.b16 %v3054
      %v3108 = vunpack.c.l.b16 %v3055
      %v3109 = vunpack.c.l.b16 %v3056
      %v3110 = vpack.c.b16 %v3107, %v3106
      %v3111 = vpack.c.b16 %v3109, %v3108
      %v3115 = vsel %vm2782, %v3100, 0
      %v3118 = vsel %vm2782, %v3101, 0
      %3120 = vmatpush.bf16.msra.mxu0 0
      %3121 = vmatpush.bf16.msra.mxu0 0
      %3122 = vmatpush.bf16.msra.mxu0 0
      %3123 = vmatpush.bf16.msra.mxu0 0
      %3124 = vmatpush.bf16.msra.mxu0 0
      %3125 = vmatpush.bf16.msra.mxu0 0
      %3126 = vmatpush.bf16.msra.mxu0 %v3111
      %3127 = vmatpush.bf16.msra.mxu0 %v3110
      %3128 = vmatmul.bf16.gmra.mxu0 %v3115
      %v3129 = vpop.f32.mrf.mxu0
      %v3130 = vadd.f32 0.0, %v3129
      %v3131 = vpop.f32.mrf.mxu0
      %v3132 = vadd.f32 0.0, %v3131
      %3133 = vmatmul.bf16.gmra.mxu0 %v3118
      %v3134 = vpop.f32.mrf.mxu0
      %v3135 = vadd.f32 0.0, %v3134
      %v3136 = vpop.f32.mrf.mxu0
      %v3137 = vadd.f32 0.0, %v3136
      %3138 = vdwg.mxu0
      %v3139 = vadd.f32 %v3049, %v3130
      %v3140 = vadd.f32 %v3050, %v3132
      %v3141 = vadd.f32 %v3051, %v3135
      %v3142 = vadd.f32 %v3052, %v3137
      %v3143 = vpack.c.bf16 %v2530, %v2530
      %v3144 = vpack.c.bf16 %v2539, %v2539
      %v3145 = vpack.c.bf16 %v2548, %v2548
      %v3146 = vpack.c.bf16 %v2557, %v2557
      %v3147 = vpack.c.bf16 %v2566, %v2566
      %v3148 = vld [vmem:[%s2 + $0x40] sm:$0xf]
      %v3149 = vld [vmem:[%s2 + $0x44] sm:$0xf]
      %v3150 = vld [vmem:[%s2 + $0x48] sm:$0xf]
      %v3151 = vld [vmem:[%s2 + $0x4c] sm:$0xf]
      %v3157 = vunpack.c.l.b16 %v3143
      %v3158 = vunpack.c.l.b16 %v3144
      %v3159 = vunpack.c.l.b16 %v3145
      %v3160 = vunpack.c.l.b16 %v3146
      %v3161 = vunpack.c.l.b16 %v3147
      %v3162 = vsel %vm2719, %v2721, %v2694
      %v3163 = vsel %vm2722, %v2724, %v3162
      %v3164 = vsel %vm2725, %v2727, %v3163
      %v3165 = vrot.slane %v3157, 4
      %v3166 = vsel %vm2728, %v3165, %v3164
      %v3167 = vsel %vm2731, %v2733, %v3166
      %v3168 = vsel %vm2734, %v2736, %v3167
      %v3169 = vsel %vm2737, %v2739, %v3168
      %v3170 = vrot.slane %v3158, 7
      %v3171 = vsel %vm2719, %v3170, %v2702
      %v3172 = vsel %vm2722, %v2743, %v3171
      %v3173 = vsel %vm2725, %v2745, %v3172
      %v3174 = vsel %vm2728, %v2747, %v3173
      %v3175 = vsel %vm2731, %v2749, %v3174
      %v3176 = vrot.slane %v3159, 2
      %v3177 = vsel %vm2734, %v3176, %v3175
      %v3178 = vsel %vm2737, %v2753, %v3177
      %v3179 = vsel %vm2719, %v2755, %v2710
      %v3180 = vsel %vm2722, %v2757, %v3179
      %v3181 = vrot.slane %v3160, 5
      %v3182 = vsel %vm2725, %v3181, %v3180
      %v3183 = vsel %vm2728, %v2761, %v3182
      %v3184 = vsel %vm2731, %v2763, %v3183
      %v3185 = vsel %vm2734, %v2765, %v3184
      %v3186 = vsel %vm2737, %v2767, %v3185
      %v3187 = vpack.c.b16 %v3178, %v3169
      %v3188 = vpack.c.b16 %v3161, %v3186
      %v3193 = vunpack.c.l.b16 %v3148
      %v3194 = vunpack.c.l.b16 %v3149
      %v3195 = vunpack.c.l.b16 %v3150
      %v3196 = vunpack.c.l.b16 %v3151
      %v3197 = vpack.c.b16 %v3194, %v3193
      %v3198 = vpack.c.b16 %v3196, %v3195
      %v3202 = vsel %vm2782, %v3187, 0
      %v3205 = vsel %vm2782, %v3188, 0
      %3207 = vmatpush.bf16.msra.mxu0 0
      %3208 = vmatpush.bf16.msra.mxu0 0
      %3209 = vmatpush.bf16.msra.mxu0 0
      %3210 = vmatpush.bf16.msra.mxu0 0
      %3211 = vmatpush.bf16.msra.mxu0 0
      %3212 = vmatpush.bf16.msra.mxu0 0
      %3213 = vmatpush.bf16.msra.mxu0 %v3198
      %3214 = vmatpush.bf16.msra.mxu0 %v3197
      %3215 = vmatmul.bf16.gmra.mxu0 %v3202
      %v3216 = vpop.f32.mrf.mxu0
      %v3217 = vadd.f32 0.0, %v3216
      %v3218 = vpop.f32.mrf.mxu0
      %v3219 = vadd.f32 0.0, %v3218
      %3220 = vmatmul.bf16.gmra.mxu0 %v3205
      %v3221 = vpop.f32.mrf.mxu0
      %v3222 = vadd.f32 0.0, %v3221
      %v3223 = vpop.f32.mrf.mxu0
      %v3224 = vadd.f32 0.0, %v3223
      %3225 = vdwg.mxu0
      %v3226 = vadd.f32 %v3139, %v3217
      %v3227 = vadd.f32 %v3140, %v3219
      %v3228 = vadd.f32 %v3141, %v3222
      %v3229 = vadd.f32 %v3142, %v3224
      %v3230 = vld [vmem:[%s2 + $0x50] sm:$0xf]
      %v3231 = vld [vmem:[%s2 + $0x54] sm:$0xf]
      %v3232 = vld [vmem:[%s2 + $0x58] sm:$0xf]
      %v3233 = vld [vmem:[%s2 + $0x5c] sm:$0xf]
      %v3234 = vrot.slane %v2694, 1
      %v3235 = vsel %vm2719, %v2695, %v3234
      %v3236 = vrot.slane %v2696, 7
      %v3237 = vsel %vm2722, %v3236, %v3235
      %v3238 = vrot.slane %v2697, 6
      %v3239 = vsel %vm2725, %v3238, %v3237
      %v3240 = vrot.slane %v3157, 5
      %v3241 = vsel %vm2728, %v3240, %v3239
      %v3242 = vrot.slane %v2699, 4
      %v3243 = vsel %vm2731, %v3242, %v3241
      %v3244 = vrot.slane %v2700, 3
      %v3245 = vsel %vm2734, %v3244, %v3243
      %v3246 = vrot.slane %v2701, 2
      %v3247 = vsel %vm2737, %v3246, %v3245
      %v3248 = vrot.slane %v2702, 1
      %v3249 = vsel %vm2719, %v3158, %v3248
      %v3250 = vrot.slane %v2704, 7
      %v3251 = vsel %vm2722, %v3250, %v3249
      %v3252 = vrot.slane %v2705, 6
      %v3253 = vsel %vm2725, %v3252, %v3251
      %v3254 = vrot.slane %v2706, 5
      %v3255 = vsel %vm2728, %v3254, %v3253
      %v3256 = vrot.slane %v2707, 4
      %v3257 = vsel %vm2731, %v3256, %v3255
      %v3258 = vrot.slane %v3159, 3
      %v3259 = vsel %vm2734, %v3258, %v3257
      %v3260 = vrot.slane %v2709, 2
      %v3261 = vsel %vm2737, %v3260, %v3259
      %v3262 = vrot.slane %v2710, 1
      %v3263 = vsel %vm2719, %v2711, %v3262
      %v3264 = vrot.slane %v2712, 7
      %v3265 = vsel %vm2722, %v3264, %v3263
      %v3266 = vrot.slane %v3160, 6
      %v3267 = vsel %vm2725, %v3266, %v3265
      %v3268 = vrot.slane %v2714, 5
      %v3269 = vsel %vm2728, %v3268, %v3267
      %v3270 = vrot.slane %v2715, 4
      %v3271 = vsel %vm2731, %v3270, %v3269
      %v3272 = vrot.slane %v2716, 3
      %v3273 = vsel %vm2734, %v3272, %v3271
      %v3274 = vrot.slane %v2717, 2
      %v3275 = vsel %vm2737, %v3274, %v3273
      %v3276 = vrot.slane %v3161, 1
      %v3277 = vpack.c.b16 %v3261, %v3247
      %v3278 = vpack.c.b16 %v3276, %v3275
      %v3283 = vunpack.c.l.b16 %v3230
      %v3284 = vunpack.c.l.b16 %v3231
      %v3285 = vunpack.c.l.b16 %v3232
      %v3286 = vunpack.c.l.b16 %v3233
      %v3287 = vpack.c.b16 %v3284, %v3283
      %v3288 = vpack.c.b16 %v3286, %v3285
      %v3292 = vsel %vm2782, %v3277, 0
      %v3295 = vsel %vm2782, %v3278, 0
      %3297 = vmatpush.bf16.msra.mxu0 0
      %3298 = vmatpush.bf16.msra.mxu0 0
      %3299 = vmatpush.bf16.msra.mxu0 0
      %3300 = vmatpush.bf16.msra.mxu0 0
      %3301 = vmatpush.bf16.msra.mxu0 0
      %3302 = vmatpush.bf16.msra.mxu0 0
      %3303 = vmatpush.bf16.msra.mxu0 %v3288
      %3304 = vmatpush.bf16.msra.mxu0 %v3287
      %3305 = vmatmul.bf16.gmra.mxu0 %v3292
      %v3306 = vpop.f32.mrf.mxu0
      %v3307 = vadd.f32 0.0, %v3306
      %v3308 = vpop.f32.mrf.mxu0
      %v3309 = vadd.f32 0.0, %v3308
      %3310 = vmatmul.bf16.gmra.mxu0 %v3295
      %v3311 = vpop.f32.mrf.mxu0
      %v3312 = vadd.f32 0.0, %v3311
      %v3313 = vpop.f32.mrf.mxu0
      %v3314 = vadd.f32 0.0, %v3313
      %3315 = vdwg.mxu0
      %v3316 = vadd.f32 %v3226, %v3307
      %v3317 = vadd.f32 %v3227, %v3309
      %v3318 = vadd.f32 %v3228, %v3312
      %v3319 = vadd.f32 %v3229, %v3314
      %v3320 = vpack.c.bf16 %v2535, %v2535
      %v3321 = vpack.c.bf16 %v2544, %v2544
      %v3322 = vpack.c.bf16 %v2553, %v2553
      %v3323 = vpack.c.bf16 %v2562, %v2562
      %v3324 = vpack.c.bf16 %v2571, %v2571
      %v3325 = vld [vmem:[%s2 + $0x60] sm:$0xf]
      %v3326 = vld [vmem:[%s2 + $0x64] sm:$0xf]
      %v3327 = vld [vmem:[%s2 + $0x68] sm:$0xf]
      %v3328 = vld [vmem:[%s2 + $0x6c] sm:$0xf]
      %v3334 = vunpack.c.l.b16 %v3320
      %v3335 = vunpack.c.l.b16 %v3321
      %v3336 = vunpack.c.l.b16 %v3322
      %v3337 = vunpack.c.l.b16 %v3323
      %v3338 = vunpack.c.l.b16 %v3324
      %v3339 = vsel %vm2719, %v3059, %v2944
      %v3340 = vsel %vm2722, %v3061, %v3339
      %v3341 = vsel %vm2725, %v3063, %v3340
      %v3342 = vrot.slane %v3334, 4
      %v3343 = vsel %vm2728, %v3342, %v3341
      %v3344 = vsel %vm2731, %v3067, %v3343
      %v3345 = vsel %vm2734, %v3069, %v3344
      %v3346 = vsel %vm2737, %v3071, %v3345
      %v3347 = vrot.slane %v3335, 7
      %v3348 = vsel %vm2719, %v3347, %v2952
      %v3349 = vsel %vm2722, %v3075, %v3348
      %v3350 = vsel %vm2725, %v3077, %v3349
      %v3351 = vsel %vm2728, %v3079, %v3350
      %v3352 = vsel %vm2731, %v3081, %v3351
      %v3353 = vrot.slane %v3336, 2
      %v3354 = vsel %vm2734, %v3353, %v3352
      %v3355 = vsel %vm2737, %v3085, %v3354
      %v3356 = vsel %vm2719, %v3087, %v2960
      %v3357 = vsel %vm2722, %v3089, %v3356
      %v3358 = vrot.slane %v3337, 5
      %v3359 = vsel %vm2725, %v3358, %v3357
      %v3360 = vsel %vm2728, %v3093, %v3359
      %v3361 = vsel %vm2731, %v3095, %v3360
      %v3362 = vsel %vm2734, %v3097, %v3361
      %v3363 = vsel %vm2737, %v3099, %v3362
      %v3364 = vpack.c.b16 %v3355, %v3346
      %v3365 = vpack.c.b16 %v3338, %v3363
      %v3370 = vunpack.c.l.b16 %v3325
      %v3371 = vunpack.c.l.b16 %v3326
      %v3372 = vunpack.c.l.b16 %v3327
      %v3373 = vunpack.c.l.b16 %v3328
      %v3374 = vpack.c.b16 %v3371, %v3370
      %v3375 = vpack.c.b16 %v3373, %v3372
      %v3379 = vsel %vm2782, %v3364, 0
      %v3382 = vsel %vm2782, %v3365, 0
      %3384 = vmatpush.bf16.msra.mxu0 0
      %3385 = vmatpush.bf16.msra.mxu0 0
      %3386 = vmatpush.bf16.msra.mxu0 0
      %3387 = vmatpush.bf16.msra.mxu0 0
      %3388 = vmatpush.bf16.msra.mxu0 0
      %3389 = vmatpush.bf16.msra.mxu0 0
      %3390 = vmatpush.bf16.msra.mxu0 %v3375
      %3391 = vmatpush.bf16.msra.mxu0 %v3374
      %3392 = vmatmul.bf16.gmra.mxu0 %v3379
      %v3393 = vpop.f32.mrf.mxu0
      %v3394 = vadd.f32 0.0, %v3393
      %v3395 = vpop.f32.mrf.mxu0
      %v3396 = vadd.f32 0.0, %v3395
      %3397 = vmatmul.bf16.gmra.mxu0 %v3382
      %v3398 = vpop.f32.mrf.mxu0
      %v3399 = vadd.f32 0.0, %v3398
      %v3400 = vpop.f32.mrf.mxu0
      %v3401 = vadd.f32 0.0, %v3400
      %3402 = vdwg.mxu0
      %v3403 = vadd.f32 %v3316, %v3394
      %v3404 = vadd.f32 %v3317, %v3396
      %v3405 = vadd.f32 %v3318, %v3399
      %v3406 = vadd.f32 %v3319, %v3401
      %v3407 = vld [vmem:[%s2 + $0x70] sm:$0xf]
      %v3408 = vld [vmem:[%s2 + $0x74] sm:$0xf]
      %v3409 = vld [vmem:[%s2 + $0x78] sm:$0xf]
      %v3410 = vld [vmem:[%s2 + $0x7c] sm:$0xf]
      %v3411 = vrot.slane %v2944, 1
      %v3412 = vsel %vm2719, %v2945, %v3411
      %v3413 = vrot.slane %v2946, 7
      %v3414 = vsel %vm2722, %v3413, %v3412
      %v3415 = vrot.slane %v2947, 6
      %v3416 = vsel %vm2725, %v3415, %v3414
      %v3417 = vrot.slane %v3334, 5
      %v3418 = vsel %vm2728, %v3417, %v3416
      %v3419 = vrot.slane %v2949, 4
      %v3420 = vsel %vm2731, %v3419, %v3418
      %v3421 = vrot.slane %v2950, 3
      %v3422 = vsel %vm2734, %v3421, %v3420
      %v3423 = vrot.slane %v2951, 2
      %v3424 = vsel %vm2737, %v3423, %v3422
      %v3425 = vrot.slane %v2952, 1
      %v3426 = vsel %vm2719, %v3335, %v3425
      %v3427 = vrot.slane %v2954, 7
      %v3428 = vsel %vm2722, %v3427, %v3426
      %v3429 = vrot.slane %v2955, 6
      %v3430 = vsel %vm2725, %v3429, %v3428
      %v3431 = vrot.slane %v2956, 5
      %v3432 = vsel %vm2728, %v3431, %v3430
      %v3433 = vrot.slane %v2957, 4
      %v3434 = vsel %vm2731, %v3433, %v3432
      %v3435 = vrot.slane %v3336, 3
      %v3436 = vsel %vm2734, %v3435, %v3434
      %v3437 = vrot.slane %v2959, 2
      %v3438 = vsel %vm2737, %v3437, %v3436
      %v3439 = vrot.slane %v2960, 1
      %v3440 = vsel %vm2719, %v2961, %v3439
      %v3441 = vrot.slane %v2962, 7
      %v3442 = vsel %vm2722, %v3441, %v3440
      %v3443 = vrot.slane %v3337, 6
      %v3444 = vsel %vm2725, %v3443, %v3442
      %v3445 = vrot.slane %v2964, 5
      %v3446 = vsel %vm2728, %v3445, %v3444
      %v3447 = vrot.slane %v2965, 4
      %v3448 = vsel %vm2731, %v3447, %v3446
      %v3449 = vrot.slane %v2966, 3
      %v3450 = vsel %vm2734, %v3449, %v3448
      %v3451 = vrot.slane %v2967, 2
      %v3452 = vsel %vm2737, %v3451, %v3450
      %v3453 = vrot.slane %v3338, 1
      %v3454 = vpack.c.b16 %v3438, %v3424
      %v3455 = vpack.c.b16 %v3453, %v3452
      %v3460 = vunpack.c.l.b16 %v3407
      %v3461 = vunpack.c.l.b16 %v3408
      %v3462 = vunpack.c.l.b16 %v3409
      %v3463 = vunpack.c.l.b16 %v3410
      %v3464 = vpack.c.b16 %v3461, %v3460
      %v3465 = vpack.c.b16 %v3463, %v3462
      %v3469 = vsel %vm2782, %v3454, 0
      %v3472 = vsel %vm2782, %v3455, 0
      %3474 = vmatpush.bf16.msra.mxu0 0
      %3475 = vmatpush.bf16.msra.mxu0 0
      %3476 = vmatpush.bf16.msra.mxu0 0
      %3477 = vmatpush.bf16.msra.mxu0 0
      %3478 = vmatpush.bf16.msra.mxu0 0
      %3479 = vmatpush.bf16.msra.mxu0 0
      %3480 = vmatpush.bf16.msra.mxu0 %v3465
      %3481 = vmatpush.bf16.msra.mxu0 %v3464
      %3482 = vmatmul.bf16.gmra.mxu0 %v3469
      %v3483 = vpop.f32.mrf.mxu0
      %v3484 = vadd.f32 0.0, %v3483
      %v3485 = vpop.f32.mrf.mxu0
      %v3486 = vadd.f32 0.0, %v3485
      %3487 = vmatmul.bf16.gmra.mxu0 %v3472
      %v3488 = vpop.f32.mrf.mxu0
      %v3489 = vadd.f32 0.0, %v3488
      %v3490 = vpop.f32.mrf.mxu0
      %v3491 = vadd.f32 0.0, %v3490
      %3492 = vdwg.mxu0
      %v3493 = vadd.f32 %v3403, %v3484
      %v3494 = vadd.f32 %v3404, %v3486
      %v3495 = vadd.f32 %v3405, %v3489
      %v3496 = vadd.f32 %v3406, %v3491
      %v3497 = vpack.c.bf16 %v2506, %v2506
      %v3498 = vpack.c.bf16 %v2572, %v2572
      %v3499 = vpack.c.bf16 %v2573, %v2573
      %v3500 = vpack.c.bf16 %v2574, %v2574
      %v3501 = vpack.c.bf16 %v2507, %v2507
      %v3502 = vld [vmem:[%s2 + $0x80] sm:$0xf]
      %v3503 = vld [vmem:[%s2 + $0x84] sm:$0xf]
      %v3504 = vld [vmem:[%s2 + $0x88] sm:$0xf]
      %v3505 = vld [vmem:[%s2 + $0x8c] sm:$0xf]
      %v3511 = vunpack.c.l.b16 %v3497
      %v3512 = vunpack.c.l.b16 %v3498
      %v3513 = vunpack.c.l.b16 %v3499
      %v3514 = vunpack.c.l.b16 %v3500
      %v3515 = vunpack.c.l.b16 %v3501
      %v3516 = vrot.slane %v2699, 7
      %v3517 = vsel %vm2719, %v3516, %v2698
      %v3518 = vrot.slane %v2700, 6
      %v3519 = vsel %vm2722, %v3518, %v3517
      %v3520 = vrot.slane %v2701, 5
      %v3521 = vsel %vm2725, %v3520, %v3519
      %v3522 = vrot.slane %v2702, 4
      %v3523 = vsel %vm2728, %v3522, %v3521
      %v3524 = vrot.slane %v2703, 3
      %v3525 = vsel %vm2731, %v3524, %v3523
      %v3526 = vrot.slane %v2704, 2
      %v3527 = vsel %vm2734, %v3526, %v3525
      %v3528 = vrot.slane %v2705, 1
      %v3529 = vsel %vm2737, %v3528, %v3527
      %v3530 = vrot.slane %v2707, 7
      %v3531 = vsel %vm2719, %v3530, %v2706
      %v3532 = vrot.slane %v2708, 6
      %v3533 = vsel %vm2722, %v3532, %v3531
      %v3534 = vrot.slane %v2709, 5
      %v3535 = vsel %vm2725, %v3534, %v3533
      %v3536 = vrot.slane %v2710, 4
      %v3537 = vsel %vm2728, %v3536, %v3535
      %v3538 = vrot.slane %v2711, 3
      %v3539 = vsel %vm2731, %v3538, %v3537
      %v3540 = vrot.slane %v2712, 2
      %v3541 = vsel %vm2734, %v3540, %v3539
      %v3542 = vrot.slane %v2713, 1
      %v3543 = vsel %vm2737, %v3542, %v3541
      %v3544 = vrot.slane %v2715, 7
      %v3545 = vsel %vm2719, %v3544, %v2714
      %v3546 = vrot.slane %v2716, 6
      %v3547 = vsel %vm2722, %v3546, %v3545
      %v3548 = vrot.slane %v2717, 5
      %v3549 = vsel %vm2725, %v3548, %v3547
      %v3550 = vrot.slane %v3511, 4
      %v3551 = vsel %vm2728, %v3550, %v3549
      %v3552 = vrot.slane %v3512, 3
      %v3553 = vsel %vm2731, %v3552, %v3551
      %v3554 = vrot.slane %v3513, 2
      %v3555 = vsel %vm2734, %v3554, %v3553
      %v3556 = vrot.slane %v3514, 1
      %v3557 = vsel %vm2737, %v3556, %v3555
      %v3558 = vpack.c.b16 %v3543, %v3529
      %v3559 = vpack.c.b16 %v3515, %v3557
      %v3564 = vunpack.c.l.b16 %v3502
      %v3565 = vunpack.c.l.b16 %v3503
      %v3566 = vunpack.c.l.b16 %v3504
      %v3567 = vunpack.c.l.b16 %v3505
      %v3568 = vpack.c.b16 %v3565, %v3564
      %v3569 = vpack.c.b16 %v3567, %v3566
      %v3573 = vsel %vm2782, %v3558, 0
      %v3576 = vsel %vm2782, %v3559, 0
      %3578 = vmatpush.bf16.msra.mxu0 0
      %3579 = vmatpush.bf16.msra.mxu0 0
      %3580 = vmatpush.bf16.msra.mxu0 0
      %3581 = vmatpush.bf16.msra.mxu0 0
      %3582 = vmatpush.bf16.msra.mxu0 0
      %3583 = vmatpush.bf16.msra.mxu0 0
      %3584 = vmatpush.bf16.msra.mxu0 %v3569
      %3585 = vmatpush.bf16.msra.mxu0 %v3568
      %3586 = vmatmul.bf16.gmra.mxu0 %v3573
      %v3587 = vpop.f32.mrf.mxu0
      %v3588 = vadd.f32 0.0, %v3587
      %v3589 = vpop.f32.mrf.mxu0
      %v3590 = vadd.f32 0.0, %v3589
      %3591 = vmatmul.bf16.gmra.mxu0 %v3576
      %v3592 = vpop.f32.mrf.mxu0
      %v3593 = vadd.f32 0.0, %v3592
      %v3594 = vpop.f32.mrf.mxu0
      %v3595 = vadd.f32 0.0, %v3594
      %3596 = vdwg.mxu0
      %v3597 = vadd.f32 %v3493, %v3588
      %v3598 = vadd.f32 %v3494, %v3590
      %v3599 = vadd.f32 %v3495, %v3593
      %v3600 = vadd.f32 %v3496, %v3595
      %v3601 = vld [vmem:[%s2 + $0x90] sm:$0xf]
      %v3602 = vld [vmem:[%s2 + $0x94] sm:$0xf]
      %v3603 = vld [vmem:[%s2 + $0x98] sm:$0xf]
      %v3604 = vld [vmem:[%s2 + $0x9c] sm:$0xf]
      %v3605 = vrot.slane %v2698, 1
      %v3606 = vsel %vm2719, %v2699, %v3605
      %v3607 = vrot.slane %v2700, 7
      %v3608 = vsel %vm2722, %v3607, %v3606
      %v3609 = vrot.slane %v2701, 6
      %v3610 = vsel %vm2725, %v3609, %v3608
      %v3611 = vrot.slane %v2702, 5
      %v3612 = vsel %vm2728, %v3611, %v3610
      %v3613 = vrot.slane %v2703, 4
      %v3614 = vsel %vm2731, %v3613, %v3612
      %v3615 = vrot.slane %v2704, 3
      %v3616 = vsel %vm2734, %v3615, %v3614
      %v3617 = vrot.slane %v2705, 2
      %v3618 = vsel %vm2737, %v3617, %v3616
      %v3619 = vrot.slane %v2706, 1
      %v3620 = vsel %vm2719, %v2707, %v3619
      %v3621 = vrot.slane %v2708, 7
      %v3622 = vsel %vm2722, %v3621, %v3620
      %v3623 = vrot.slane %v2709, 6
      %v3624 = vsel %vm2725, %v3623, %v3622
      %v3625 = vrot.slane %v2710, 5
      %v3626 = vsel %vm2728, %v3625, %v3624
      %v3627 = vrot.slane %v2711, 4
      %v3628 = vsel %vm2731, %v3627, %v3626
      %v3629 = vrot.slane %v2712, 3
      %v3630 = vsel %vm2734, %v3629, %v3628
      %v3631 = vrot.slane %v2713, 2
      %v3632 = vsel %vm2737, %v3631, %v3630
      %v3633 = vrot.slane %v2714, 1
      %v3634 = vsel %vm2719, %v2715, %v3633
      %v3635 = vrot.slane %v2716, 7
      %v3636 = vsel %vm2722, %v3635, %v3634
      %v3637 = vrot.slane %v2717, 6
      %v3638 = vsel %vm2725, %v3637, %v3636
      %v3639 = vrot.slane %v3511, 5
      %v3640 = vsel %vm2728, %v3639, %v3638
      %v3641 = vrot.slane %v3512, 4
      %v3642 = vsel %vm2731, %v3641, %v3640
      %v3643 = vrot.slane %v3513, 3
      %v3644 = vsel %vm2734, %v3643, %v3642
      %v3645 = vrot.slane %v3514, 2
      %v3646 = vsel %vm2737, %v3645, %v3644
      %v3647 = vrot.slane %v3515, 1
      %v3648 = vpack.c.b16 %v3632, %v3618
      %v3649 = vpack.c.b16 %v3647, %v3646
      %v3654 = vunpack.c.l.b16 %v3601
      %v3655 = vunpack.c.l.b16 %v3602
      %v3656 = vunpack.c.l.b16 %v3603
      %v3657 = vunpack.c.l.b16 %v3604
      %v3658 = vpack.c.b16 %v3655, %v3654
      %v3659 = vpack.c.b16 %v3657, %v3656
      %v3663 = vsel %vm2782, %v3648, 0
      %v3666 = vsel %vm2782, %v3649, 0
      %3668 = vmatpush.bf16.msra.mxu0 0
      %3669 = vmatpush.bf16.msra.mxu0 0
      %3670 = vmatpush.bf16.msra.mxu0 0
      %3671 = vmatpush.bf16.msra.mxu0 0
      %3672 = vmatpush.bf16.msra.mxu0 0
      %3673 = vmatpush.bf16.msra.mxu0 0
      %3674 = vmatpush.bf16.msra.mxu0 %v3659
      %3675 = vmatpush.bf16.msra.mxu0 %v3658
      %3676 = vmatmul.bf16.gmra.mxu0 %v3663
      %v3677 = vpop.f32.mrf.mxu0
      %v3678 = vadd.f32 0.0, %v3677
      %v3679 = vpop.f32.mrf.mxu0
      %v3680 = vadd.f32 0.0, %v3679
      %3681 = vmatmul.bf16.gmra.mxu0 %v3666
      %v3682 = vpop.f32.mrf.mxu0
      %v3683 = vadd.f32 0.0, %v3682
      %v3684 = vpop.f32.mrf.mxu0
      %v3685 = vadd.f32 0.0, %v3684
      %3686 = vdwg.mxu0
      %v3687 = vadd.f32 %v3597, %v3678
      %v3688 = vadd.f32 %v3598, %v3680
      %v3689 = vadd.f32 %v3599, %v3683
      %v3690 = vadd.f32 %v3600, %v3685
      %v3691 = vpack.c.bf16 %v2576, %v2576
      %v3692 = vpack.c.bf16 %v2577, %v2577
      %v3693 = vpack.c.bf16 %v2508, %v2508
      %v3694 = vpack.c.bf16 %v2578, %v2578
      %v3695 = vpack.c.bf16 %v2579, %v2579
      %v3696 = vld [vmem:[%s2 + $0xa0] sm:$0xf]
      %v3697 = vld [vmem:[%s2 + $0xa4] sm:$0xf]
      %v3698 = vld [vmem:[%s2 + $0xa8] sm:$0xf]
      %v3699 = vld [vmem:[%s2 + $0xac] sm:$0xf]
      %v3705 = vunpack.c.l.b16 %v3691
      %v3706 = vunpack.c.l.b16 %v3692
      %v3707 = vunpack.c.l.b16 %v3693
      %v3708 = vunpack.c.l.b16 %v3694
      %v3709 = vunpack.c.l.b16 %v3695
      %v3710 = vrot.slane %v2949, 7
      %v3711 = vsel %vm2719, %v3710, %v2948
      %v3712 = vrot.slane %v2950, 6
      %v3713 = vsel %vm2722, %v3712, %v3711
      %v3714 = vrot.slane %v2951, 5
      %v3715 = vsel %vm2725, %v3714, %v3713
      %v3716 = vrot.slane %v2952, 4
      %v3717 = vsel %vm2728, %v3716, %v3715
      %v3718 = vrot.slane %v2953, 3
      %v3719 = vsel %vm2731, %v3718, %v3717
      %v3720 = vrot.slane %v2954, 2
      %v3721 = vsel %vm2734, %v3720, %v3719
      %v3722 = vrot.slane %v2955, 1
      %v3723 = vsel %vm2737, %v3722, %v3721
      %v3724 = vrot.slane %v2957, 7
      %v3725 = vsel %vm2719, %v3724, %v2956
      %v3726 = vrot.slane %v2958, 6
      %v3727 = vsel %vm2722, %v3726, %v3725
      %v3728 = vrot.slane %v2959, 5
      %v3729 = vsel %vm2725, %v3728, %v3727
      %v3730 = vrot.slane %v2960, 4
      %v3731 = vsel %vm2728, %v3730, %v3729
      %v3732 = vrot.slane %v2961, 3
      %v3733 = vsel %vm2731, %v3732, %v3731
      %v3734 = vrot.slane %v2962, 2
      %v3735 = vsel %vm2734, %v3734, %v3733
      %v3736 = vrot.slane %v2963, 1
      %v3737 = vsel %vm2737, %v3736, %v3735
      %v3738 = vrot.slane %v2965, 7
      %v3739 = vsel %vm2719, %v3738, %v2964
      %v3740 = vrot.slane %v2966, 6
      %v3741 = vsel %vm2722, %v3740, %v3739
      %v3742 = vrot.slane %v2967, 5
      %v3743 = vsel %vm2725, %v3742, %v3741
      %v3744 = vrot.slane %v3705, 4
      %v3745 = vsel %vm2728, %v3744, %v3743
      %v3746 = vrot.slane %v3706, 3
      %v3747 = vsel %vm2731, %v3746, %v3745
      %v3748 = vrot.slane %v3707, 2
      %v3749 = vsel %vm2734, %v3748, %v3747
      %v3750 = vrot.slane %v3708, 1
      %v3751 = vsel %vm2737, %v3750, %v3749
      %v3752 = vpack.c.b16 %v3737, %v3723
      %v3753 = vpack.c.b16 %v3709, %v3751
      %v3758 = vunpack.c.l.b16 %v3696
      %v3759 = vunpack.c.l.b16 %v3697
      %v3760 = vunpack.c.l.b16 %v3698
      %v3761 = vunpack.c.l.b16 %v3699
      %v3762 = vpack.c.b16 %v3759, %v3758
      %v3763 = vpack.c.b16 %v3761, %v3760
      %v3767 = vsel %vm2782, %v3752, 0
      %v3770 = vsel %vm2782, %v3753, 0
      %3772 = vmatpush.bf16.msra.mxu0 0
      %3773 = vmatpush.bf16.msra.mxu0 0
      %3774 = vmatpush.bf16.msra.mxu0 0
      %3775 = vmatpush.bf16.msra.mxu0 0
      %3776 = vmatpush.bf16.msra.mxu0 0
      %3777 = vmatpush.bf16.msra.mxu0 0
      %3778 = vmatpush.bf16.msra.mxu0 %v3763
      %3779 = vmatpush.bf16.msra.mxu0 %v3762
      %3780 = vmatmul.bf16.gmra.mxu0 %v3767
      %v3781 = vpop.f32.mrf.mxu0
      %v3782 = vadd.f32 0.0, %v3781
      %v3783 = vpop.f32.mrf.mxu0
      %v3784 = vadd.f32 0.0, %v3783
      %3785 = vmatmul.bf16.gmra.mxu0 %v3770
      %v3786 = vpop.f32.mrf.mxu0
      %v3787 = vadd.f32 0.0, %v3786
      %v3788 = vpop.f32.mrf.mxu0
      %v3789 = vadd.f32 0.0, %v3788
      %3790 = vdwg.mxu0
      %v3791 = vadd.f32 %v3687, %v3782
      %v3792 = vadd.f32 %v3688, %v3784
      %v3793 = vadd.f32 %v3689, %v3787
      %v3794 = vadd.f32 %v3690, %v3789
      %v3795 = vld [vmem:[%s2 + $0xb0] sm:$0xf]
      %v3796 = vld [vmem:[%s2 + $0xb4] sm:$0xf]
      %v3797 = vld [vmem:[%s2 + $0xb8] sm:$0xf]
      %v3798 = vld [vmem:[%s2 + $0xbc] sm:$0xf]
      %v3799 = vrot.slane %v2948, 1
      %v3800 = vsel %vm2719, %v2949, %v3799
      %v3801 = vrot.slane %v2950, 7
      %v3802 = vsel %vm2722, %v3801, %v3800
      %v3803 = vrot.slane %v2951, 6
      %v3804 = vsel %vm2725, %v3803, %v3802
      %v3805 = vrot.slane %v2952, 5
      %v3806 = vsel %vm2728, %v3805, %v3804
      %v3807 = vrot.slane %v2953, 4
      %v3808 = vsel %vm2731, %v3807, %v3806
      %v3809 = vrot.slane %v2954, 3
      %v3810 = vsel %vm2734, %v3809, %v3808
      %v3811 = vrot.slane %v2955, 2
      %v3812 = vsel %vm2737, %v3811, %v3810
      %v3813 = vrot.slane %v2956, 1
      %v3814 = vsel %vm2719, %v2957, %v3813
      %v3815 = vrot.slane %v2958, 7
      %v3816 = vsel %vm2722, %v3815, %v3814
      %v3817 = vrot.slane %v2959, 6
      %v3818 = vsel %vm2725, %v3817, %v3816
      %v3819 = vrot.slane %v2960, 5
      %v3820 = vsel %vm2728, %v3819, %v3818
      %v3821 = vrot.slane %v2961, 4
      %v3822 = vsel %vm2731, %v3821, %v3820
      %v3823 = vrot.slane %v2962, 3
      %v3824 = vsel %vm2734, %v3823, %v3822
      %v3825 = vrot.slane %v2963, 2
      %v3826 = vsel %vm2737, %v3825, %v3824
      %v3827 = vrot.slane %v2964, 1
      %v3828 = vsel %vm2719, %v2965, %v3827
      %v3829 = vrot.slane %v2966, 7
      %v3830 = vsel %vm2722, %v3829, %v3828
      %v3831 = vrot.slane %v2967, 6
      %v3832 = vsel %vm2725, %v3831, %v3830
      %v3833 = vrot.slane %v3705, 5
      %v3834 = vsel %vm2728, %v3833, %v3832
      %v3835 = vrot.slane %v3706, 4
      %v3836 = vsel %vm2731, %v3835, %v3834
      %v3837 = vrot.slane %v3707, 3
      %v3838 = vsel %vm2734, %v3837, %v3836
      %v3839 = vrot.slane %v3708, 2
      %v3840 = vsel %vm2737, %v3839, %v3838
      %v3841 = vrot.slane %v3709, 1
      %v3842 = vpack.c.b16 %v3826, %v3812
      %v3843 = vpack.c.b16 %v3841, %v3840
      %v3848 = vunpack.c.l.b16 %v3795
      %v3849 = vunpack.c.l.b16 %v3796
      %v3850 = vunpack.c.l.b16 %v3797
      %v3851 = vunpack.c.l.b16 %v3798
      %v3852 = vpack.c.b16 %v3849, %v3848
      %v3853 = vpack.c.b16 %v3851, %v3850
      %v3857 = vsel %vm2782, %v3842, 0
      %v3860 = vsel %vm2782, %v3843, 0
      %3862 = vmatpush.bf16.msra.mxu0 0
      %3863 = vmatpush.bf16.msra.mxu0 0
      %3864 = vmatpush.bf16.msra.mxu0 0
      %3865 = vmatpush.bf16.msra.mxu0 0
      %3866 = vmatpush.bf16.msra.mxu0 0
      %3867 = vmatpush.bf16.msra.mxu0 0
      %3868 = vmatpush.bf16.msra.mxu0 %v3853
      %3869 = vmatpush.bf16.msra.mxu0 %v3852
      %3870 = vmatmul.bf16.gmra.mxu0 %v3857
      %v3871 = vpop.f32.mrf.mxu0
      %v3872 = vadd.f32 0.0, %v3871
      %v3873 = vpop.f32.mrf.mxu0
      %v3874 = vadd.f32 0.0, %v3873
      %3875 = vmatmul.bf16.gmra.mxu0 %v3860
      %v3876 = vpop.f32.mrf.mxu0
      %v3877 = vadd.f32 0.0, %v3876
      %v3878 = vpop.f32.mrf.mxu0
      %v3879 = vadd.f32 0.0, %v3878
      %3880 = vdwg.mxu0
      %v3881 = vadd.f32 %v3791, %v3872
      %v3882 = vadd.f32 %v3792, %v3874
      %v3883 = vadd.f32 %v3793, %v3877
      %v3884 = vadd.f32 %v3794, %v3879
      %v3885 = vpack.c.bf16 %v2575, %v2575
      %v3886 = vld [vmem:[%s2 + $0xc0] sm:$0xf]
      %v3887 = vld [vmem:[%s2 + $0xc4] sm:$0xf]
      %v3888 = vld [vmem:[%s2 + $0xc8] sm:$0xf]
      %v3889 = vld [vmem:[%s2 + $0xcc] sm:$0xf]
      %v3891 = vunpack.c.l.b16 %v3885
      %v3892 = vsel %vm2719, %v3607, %v2699
      %v3893 = vsel %vm2722, %v3609, %v3892
      %v3894 = vsel %vm2725, %v3611, %v3893
      %v3895 = vrot.slane %v3158, 4
      %v3896 = vsel %vm2728, %v3895, %v3894
      %v3897 = vsel %vm2731, %v3615, %v3896
      %v3898 = vsel %vm2734, %v3617, %v3897
      %v3899 = vsel %vm2737, %v3619, %v3898
      %v3900 = vrot.slane %v3159, 7
      %v3901 = vsel %vm2719, %v3900, %v2707
      %v3902 = vsel %vm2722, %v3623, %v3901
      %v3903 = vsel %vm2725, %v3625, %v3902
      %v3904 = vsel %vm2728, %v3627, %v3903
      %v3905 = vsel %vm2731, %v3629, %v3904
      %v3906 = vrot.slane %v3160, 2
      %v3907 = vsel %vm2734, %v3906, %v3905
      %v3908 = vsel %vm2737, %v3633, %v3907
      %v3909 = vsel %vm2719, %v3635, %v2715
      %v3910 = vsel %vm2722, %v3637, %v3909
      %v3911 = vrot.slane %v3161, 5
      %v3912 = vsel %vm2725, %v3911, %v3910
      %v3913 = vsel %vm2728, %v3641, %v3912
      %v3914 = vsel %vm2731, %v3643, %v3913
      %v3915 = vsel %vm2734, %v3645, %v3914
      %v3916 = vsel %vm2737, %v3647, %v3915
      %v3917 = vpack.c.b16 %v3908, %v3899
      %v3918 = vpack.c.b16 %v3891, %v3916
      %v3923 = vunpack.c.l.b16 %v3886
      %v3924 = vunpack.c.l.b16 %v3887
      %v3925 = vunpack.c.l.b16 %v3888
      %v3926 = vunpack.c.l.b16 %v3889
      %v3927 = vpack.c.b16 %v3924, %v3923
      %v3928 = vpack.c.b16 %v3926, %v3925
      %v3932 = vsel %vm2782, %v3917, 0
      %v3935 = vsel %vm2782, %v3918, 0
      %3937 = vmatpush.bf16.msra.mxu0 0
      %3938 = vmatpush.bf16.msra.mxu0 0
      %3939 = vmatpush.bf16.msra.mxu0 0
      %3940 = vmatpush.bf16.msra.mxu0 0
      %3941 = vmatpush.bf16.msra.mxu0 0
      %3942 = vmatpush.bf16.msra.mxu0 0
      %3943 = vmatpush.bf16.msra.mxu0 %v3928
      %3944 = vmatpush.bf16.msra.mxu0 %v3927
      %3945 = vmatmul.bf16.gmra.mxu0 %v3932
      %v3946 = vpop.f32.mrf.mxu0
      %v3947 = vadd.f32 0.0, %v3946
      %v3948 = vpop.f32.mrf.mxu0
      %v3949 = vadd.f32 0.0, %v3948
      %3950 = vmatmul.bf16.gmra.mxu0 %v3935
      %v3951 = vpop.f32.mrf.mxu0
      %v3952 = vadd.f32 0.0, %v3951
      %v3953 = vpop.f32.mrf.mxu0
      %v3954 = vadd.f32 0.0, %v3953
      %3955 = vdwg.mxu0
      %v3956 = vadd.f32 %v3881, %v3947
      %v3957 = vadd.f32 %v3882, %v3949
      %v3958 = vadd.f32 %v3883, %v3952
      %v3959 = vadd.f32 %v3884, %v3954
      %v3960 = vld [vmem:[%s2 + $0xd0] sm:$0xf]
      %v3961 = vld [vmem:[%s2 + $0xd4] sm:$0xf]
      %v3962 = vld [vmem:[%s2 + $0xd8] sm:$0xf]
      %v3963 = vld [vmem:[%s2 + $0xdc] sm:$0xf]
      %v3964 = vrot.slane %v2699, 1
      %v3965 = vsel %vm2719, %v2700, %v3964
      %v3966 = vrot.slane %v2701, 7
      %v3967 = vsel %vm2722, %v3966, %v3965
      %v3968 = vrot.slane %v2702, 6
      %v3969 = vsel %vm2725, %v3968, %v3967
      %v3970 = vrot.slane %v3158, 5
      %v3971 = vsel %vm2728, %v3970, %v3969
      %v3972 = vrot.slane %v2704, 4
      %v3973 = vsel %vm2731, %v3972, %v3971
      %v3974 = vrot.slane %v2705, 3
      %v3975 = vsel %vm2734, %v3974, %v3973
      %v3976 = vrot.slane %v2706, 2
      %v3977 = vsel %vm2737, %v3976, %v3975
      %v3978 = vrot.slane %v2707, 1
      %v3979 = vsel %vm2719, %v3159, %v3978
      %v3980 = vrot.slane %v2709, 7
      %v3981 = vsel %vm2722, %v3980, %v3979
      %v3982 = vrot.slane %v2710, 6
      %v3983 = vsel %vm2725, %v3982, %v3981
      %v3984 = vrot.slane %v2711, 5
      %v3985 = vsel %vm2728, %v3984, %v3983
      %v3986 = vrot.slane %v2712, 4
      %v3987 = vsel %vm2731, %v3986, %v3985
      %v3988 = vrot.slane %v3160, 3
      %v3989 = vsel %vm2734, %v3988, %v3987
      %v3990 = vrot.slane %v2714, 2
      %v3991 = vsel %vm2737, %v3990, %v3989
      %v3992 = vrot.slane %v2715, 1
      %v3993 = vsel %vm2719, %v2716, %v3992
      %v3994 = vrot.slane %v2717, 7
      %v3995 = vsel %vm2722, %v3994, %v3993
      %v3996 = vrot.slane %v3161, 6
      %v3997 = vsel %vm2725, %v3996, %v3995
      %v3998 = vrot.slane %v3512, 5
      %v3999 = vsel %vm2728, %v3998, %v3997
      %v4000 = vrot.slane %v3513, 4
      %v4001 = vsel %vm2731, %v4000, %v3999
      %v4002 = vrot.slane %v3514, 3
      %v4003 = vsel %vm2734, %v4002, %v4001
      %v4004 = vrot.slane %v3515, 2
      %v4005 = vsel %vm2737, %v4004, %v4003
      %v4006 = vrot.slane %v3891, 1
      %v4007 = vpack.c.b16 %v3991, %v3977
      %v4008 = vpack.c.b16 %v4006, %v4005
      %v4013 = vunpack.c.l.b16 %v3960
      %v4014 = vunpack.c.l.b16 %v3961
      %v4015 = vunpack.c.l.b16 %v3962
      %v4016 = vunpack.c.l.b16 %v3963
      %v4017 = vpack.c.b16 %v4014, %v4013
      %v4018 = vpack.c.b16 %v4016, %v4015
      %v4022 = vsel %vm2782, %v4007, 0
      %v4025 = vsel %vm2782, %v4008, 0
      %4027 = vmatpush.bf16.msra.mxu0 0
      %4028 = vmatpush.bf16.msra.mxu0 0
      %4029 = vmatpush.bf16.msra.mxu0 0
      %4030 = vmatpush.bf16.msra.mxu0 0
      %4031 = vmatpush.bf16.msra.mxu0 0
      %4032 = vmatpush.bf16.msra.mxu0 0
      %4033 = vmatpush.bf16.msra.mxu0 %v4018
      %4034 = vmatpush.bf16.msra.mxu0 %v4017
      %4035 = vmatmul.bf16.gmra.mxu0 %v4022
      %v4036 = vpop.f32.mrf.mxu0
      %v4037 = vadd.f32 0.0, %v4036
      %v4038 = vpop.f32.mrf.mxu0
      %v4039 = vadd.f32 0.0, %v4038
      %4040 = vmatmul.bf16.gmra.mxu0 %v4025
      %v4041 = vpop.f32.mrf.mxu0
      %v4042 = vadd.f32 0.0, %v4041
      %v4043 = vpop.f32.mrf.mxu0
      %v4044 = vadd.f32 0.0, %v4043
      %4045 = vdwg.mxu0
      %v4046 = vadd.f32 %v3956, %v4037
      %v4047 = vadd.f32 %v3957, %v4039
      %v4048 = vadd.f32 %v3958, %v4042
      %v4049 = vadd.f32 %v3959, %v4044
      %v4050 = vpack.c.bf16 %v2580, %v2580
      %v4051 = vld [vmem:[%s2 + $0xe0] sm:$0xf]
      %v4052 = vld [vmem:[%s2 + $0xe4] sm:$0xf]
      %v4053 = vld [vmem:[%s2 + $0xe8] sm:$0xf]
      %v4054 = vld [vmem:[%s2 + $0xec] sm:$0xf]
      %v4056 = vunpack.c.l.b16 %v4050
      %v4057 = vsel %vm2719, %v3801, %v2949
      %v4058 = vsel %vm2722, %v3803, %v4057
      %v4059 = vsel %vm2725, %v3805, %v4058
      %v4060 = vrot.slane %v3335, 4
      %v4061 = vsel %vm2728, %v4060, %v4059
      %v4062 = vsel %vm2731, %v3809, %v4061
      %v4063 = vsel %vm2734, %v3811, %v4062
      %v4064 = vsel %vm2737, %v3813, %v4063
      %v4065 = vrot.slane %v3336, 7
      %v4066 = vsel %vm2719, %v4065, %v2957
      %v4067 = vsel %vm2722, %v3817, %v4066
      %v4068 = vsel %vm2725, %v3819, %v4067
      %v4069 = vsel %vm2728, %v3821, %v4068
      %v4070 = vsel %vm2731, %v3823, %v4069
      %v4071 = vrot.slane %v3337, 2
      %v4072 = vsel %vm2734, %v4071, %v4070
      %v4073 = vsel %vm2737, %v3827, %v4072
      %v4074 = vsel %vm2719, %v3829, %v2965
      %v4075 = vsel %vm2722, %v3831, %v4074
      %v4076 = vrot.slane %v3338, 5
      %v4077 = vsel %vm2725, %v4076, %v4075
      %v4078 = vsel %vm2728, %v3835, %v4077
      %v4079 = vsel %vm2731, %v3837, %v4078
      %v4080 = vsel %vm2734, %v3839, %v4079
      %v4081 = vsel %vm2737, %v3841, %v4080
      %v4082 = vpack.c.b16 %v4073, %v4064
      %v4083 = vpack.c.b16 %v4056, %v4081
      %v4088 = vunpack.c.l.b16 %v4051
      %v4089 = vunpack.c.l.b16 %v4052
      %v4090 = vunpack.c.l.b16 %v4053
      %v4091 = vunpack.c.l.b16 %v4054
      %v4092 = vpack.c.b16 %v4089, %v4088
      %v4093 = vpack.c.b16 %v4091, %v4090
      %v4097 = vsel %vm2782, %v4082, 0
      %v4100 = vsel %vm2782, %v4083, 0
      %4102 = vmatpush.bf16.msra.mxu0 0
      %4103 = vmatpush.bf16.msra.mxu0 0
      %4104 = vmatpush.bf16.msra.mxu0 0
      %4105 = vmatpush.bf16.msra.mxu0 0
      %4106 = vmatpush.bf16.msra.mxu0 0
      %4107 = vmatpush.bf16.msra.mxu0 0
      %4108 = vmatpush.bf16.msra.mxu0 %v4093
      %4109 = vmatpush.bf16.msra.mxu0 %v4092
      %4110 = vmatmul.bf16.gmra.mxu0 %v4097
      %v4111 = vpop.f32.mrf.mxu0
      %v4112 = vadd.f32 0.0, %v4111
      %v4113 = vpop.f32.mrf.mxu0
      %v4114 = vadd.f32 0.0, %v4113
      %4115 = vmatmul.bf16.gmra.mxu0 %v4100
      %v4116 = vpop.f32.mrf.mxu0
      %v4117 = vadd.f32 0.0, %v4116
      %v4118 = vpop.f32.mrf.mxu0
      %v4119 = vadd.f32 0.0, %v4118
      %4120 = vdwg.mxu0
      %v4121 = vadd.f32 %v4046, %v4112
      %v4122 = vadd.f32 %v4047, %v4114
      %v4123 = vadd.f32 %v4048, %v4117
      %v4124 = vadd.f32 %v4049, %v4119
      %v4125 = vld [vmem:[%s2 + $0xf0] sm:$0xf]
      %v4126 = vld [vmem:[%s2 + $0xf4] sm:$0xf]
      %v4127 = vld [vmem:[%s2 + $0xf8] sm:$0xf]
      %v4128 = vld [vmem:[%s2 + $0xfc] sm:$0xf]
      %v4129 = vrot.slane %v2949, 1
      %v4130 = vsel %vm2719, %v2950, %v4129
      %v4131 = vrot.slane %v2951, 7
      %v4132 = vsel %vm2722, %v4131, %v4130
      %v4133 = vrot.slane %v2952, 6
      %v4134 = vsel %vm2725, %v4133, %v4132
      %v4135 = vrot.slane %v3335, 5
      %v4136 = vsel %vm2728, %v4135, %v4134
      %v4137 = vrot.slane %v2954, 4
      %v4138 = vsel %vm2731, %v4137, %v4136
      %v4139 = vrot.slane %v2955, 3
      %v4140 = vsel %vm2734, %v4139, %v4138
      %v4141 = vrot.slane %v2956, 2
      %v4142 = vsel %vm2737, %v4141, %v4140
      %v4143 = vrot.slane %v2957, 1
      %v4144 = vsel %vm2719, %v3336, %v4143
      %v4145 = vrot.slane %v2959, 7
      %v4146 = vsel %vm2722, %v4145, %v4144
      %v4147 = vrot.slane %v2960, 6
      %v4148 = vsel %vm2725, %v4147, %v4146
      %v4149 = vrot.slane %v2961, 5
      %v4150 = vsel %vm2728, %v4149, %v4148
      %v4151 = vrot.slane %v2962, 4
      %v4152 = vsel %vm2731, %v4151, %v4150
      %v4153 = vrot.slane %v3337, 3
      %v4154 = vsel %vm2734, %v4153, %v4152
      %v4155 = vrot.slane %v2964, 2
      %v4156 = vsel %vm2737, %v4155, %v4154
      %v4157 = vrot.slane %v2965, 1
      %v4158 = vsel %vm2719, %v2966, %v4157
      %v4159 = vrot.slane %v2967, 7
      %v4160 = vsel %vm2722, %v4159, %v4158
      %v4161 = vrot.slane %v3338, 6
      %v4162 = vsel %vm2725, %v4161, %v4160
      %v4163 = vrot.slane %v3706, 5
      %v4164 = vsel %vm2728, %v4163, %v4162
      %v4165 = vrot.slane %v3707, 4
      %v4166 = vsel %vm2731, %v4165, %v4164
      %v4167 = vrot.slane %v3708, 3
      %v4168 = vsel %vm2734, %v4167, %v4166
      %v4169 = vrot.slane %v3709, 2
      %v4170 = vsel %vm2737, %v4169, %v4168
      %v4171 = vrot.slane %v4056, 1
      %v4172 = vpack.c.b16 %v4156, %v4142
      %v4173 = vpack.c.b16 %v4171, %v4170
      %v4178 = vunpack.c.l.b16 %v4125
      %v4179 = vunpack.c.l.b16 %v4126
      %v4180 = vunpack.c.l.b16 %v4127
      %v4181 = vunpack.c.l.b16 %v4128
      %v4182 = vpack.c.b16 %v4179, %v4178
      %v4183 = vpack.c.b16 %v4181, %v4180
      %v4187 = vsel %vm2782, %v4172, 0
      %v4190 = vsel %vm2782, %v4173, 0
      %4192 = vmatpush.bf16.msra.mxu0 0
      %4193 = vmatpush.bf16.msra.mxu0 0
      %4194 = vmatpush.bf16.msra.mxu0 0
      %4195 = vmatpush.bf16.msra.mxu0 0
      %4196 = vmatpush.bf16.msra.mxu0 0
      %4197 = vmatpush.bf16.msra.mxu0 0
      %4198 = vmatpush.bf16.msra.mxu0 %v4183
      %4199 = vmatpush.bf16.msra.mxu0 %v4182
      %4200 = vmatmul.bf16.gmra.mxu0 %v4187
      %v4201 = vpop.f32.mrf.mxu0
      %v4202 = vadd.f32 0.0, %v4201
      %v4203 = vpop.f32.mrf.mxu0
      %v4204 = vadd.f32 0.0, %v4203
      %4205 = vmatmul.bf16.gmra.mxu0 %v4190
      %v4206 = vpop.f32.mrf.mxu0
      %v4207 = vadd.f32 0.0, %v4206
      %v4208 = vpop.f32.mrf.mxu0
      %v4209 = vadd.f32 0.0, %v4208
      %4210 = vdwg.mxu0
      %v4211 = vadd.f32 %v4121, %v4202
      %v4212 = vadd.f32 %v4122, %v4204
      %v4213 = vadd.f32 %v4123, %v4207
      %v4214 = vadd.f32 %v4124, %v4209
      %v4215 = vld [vmem:[%s5] sm:$0x1]
      %v4217 = vperm.slane %v4215, 0
      %v4219 = vadd.f32 %v4211, %v4217
      %v4220 = vadd.f32 %v4212, %v4217
      %v4221 = vadd.f32 %v4213, %v4217
      %v4222 = vadd.f32 %v4214, %v4217
      %v4227 = vrot.slane %v4219, 1
      %v4228 = vrot.slane %v4219, 2
      %v4229 = vrot.slane %v4219, 3
      %v4230 = vrot.slane %v4219, 4
      %v4231 = vrot.slane %v4219, 5
      %v4232 = vrot.slane %v4219, 6
      %v4233 = vrot.slane %v4219, 7
      %v4234 = vrot.slane %v4220, 1
      %v4235 = vrot.slane %v4220, 2
      %v4236 = vrot.slane %v4220, 3
      %v4237 = vrot.slane %v4220, 4
      %v4238 = vrot.slane %v4220, 5
      %v4239 = vrot.slane %v4220, 6
      %v4240 = vrot.slane %v4220, 7
      %v4241 = vrot.slane %v4221, 1
      %v4242 = vrot.slane %v4221, 2
      %v4243 = vrot.slane %v4221, 3
      %v4244 = vrot.slane %v4221, 4
      %v4245 = vrot.slane %v4221, 5
      %v4246 = vrot.slane %v4221, 6
      %v4247 = vrot.slane %v4221, 7
      %4248 = vst [vmem:[#allocation1] ss:$9 sm:$0xff] %v4219
      %s4249 = scalar_lea.vmem [#allocation1], 1
      %4250 = vst [vmem:[%s4249] ss:$9 sm:$0xff] %v4227
      %s4251 = scalar_lea.vmem [#allocation1], 2
      %4252 = vst [vmem:[%s4251] ss:$9 sm:$0xff] %v4228
      %s4253 = scalar_lea.vmem [#allocation1], 3
      %4254 = vst [vmem:[%s4253] ss:$9 sm:$0xff] %v4231
      %s4255 = scalar_lea.vmem [#allocation1], 4
      %4256 = vst [vmem:[%s4255] ss:$9 sm:$0xff] %v4232
      %s4257 = scalar_lea.vmem [#allocation1], 5
      %4258 = vst [vmem:[%s4257] ss:$9 sm:$0xff] %v4233
      %s4259 = scalar_lea.vmem [#allocation1], 6
      %4260 = vst [vmem:[%s4259] ss:$9 sm:$0xff] %v4235
      %s4261 = scalar_lea.vmem [#allocation1], 7
      %4262 = vst [vmem:[%s4261] ss:$9 sm:$0xff] %v4236
      %v4263 = vld [vmem:[#allocation1] sm:$0xff]
      %4264 = vst [vmem:[#allocation1] ss:$9 sm:$0xff] %v4237
      %v4265 = vld [vmem:[#allocation1] sm:$0xff]
      %v4268 = vpack.c.bf16 %v4265, %v4263
      %v4269 = vld [vmem:[%s3] sm:$0xf]
      %v4270 = vld [vmem:[%s3 + $0x4] sm:$0xf]
      %v4271 = vld [vmem:[%s3 + $0x8] sm:$0xf]
      %v4272 = vld [vmem:[%s3 + $0xc] sm:$0xf]
      %v4273 = vld [vmem:[%s3 + $0x10] sm:$0xf]
      %v4274 = vld [vmem:[%s3 + $0x14] sm:$0xf]
      %v4275 = vld [vmem:[%s3 + $0x18] sm:$0xf]
      %v4276 = vld [vmem:[%s3 + $0x1c] sm:$0xf]
      %4277 = vst [vmem:[#allocation1] ss:$9 sm:$0xff] %v4227
      %s4278 = scalar_lea.vmem [#allocation1], 1
      %4279 = vst [vmem:[%s4278] ss:$9 sm:$0xff] %v4228
      %s4280 = scalar_lea.vmem [#allocation1], 2
      %4281 = vst [vmem:[%s4280] ss:$9 sm:$0xff] %v4229
      %s4282 = scalar_lea.vmem [#allocation1], 3
      %4283 = vst [vmem:[%s4282] ss:$9 sm:$0xff] %v4232
      %s4284 = scalar_lea.vmem [#allocation1], 4
      %4285 = vst [vmem:[%s4284] ss:$9 sm:$0xff] %v4233
      %s4286 = scalar_lea.vmem [#allocation1], 5
      %4287 = vst [vmem:[%s4286] ss:$9 sm:$0xff] %v4220
      %s4288 = scalar_lea.vmem [#allocation1], 6
      %4289 = vst [vmem:[%s4288] ss:$9 sm:$0xff] %v4236
      %s4290 = scalar_lea.vmem [#allocation1], 7
      %4291 = vst [vmem:[%s4290] ss:$9 sm:$0xff] %v4237
      %v4292 = vld [vmem:[#allocation1] sm:$0xff]
      %4293 = vst [vmem:[#allocation1] ss:$9 sm:$0xff] %v4238
      %v4294 = vld [vmem:[#allocation1] sm:$0xff]
      %v4297 = vpack.c.bf16 %v4294, %v4292
      %v4298 = vld [vmem:[%s3 + $0x20] sm:$0xf]
      %v4299 = vld [vmem:[%s3 + $0x24] sm:$0xf]
      %v4300 = vld [vmem:[%s3 + $0x28] sm:$0xf]
      %v4301 = vld [vmem:[%s3 + $0x2c] sm:$0xf]
      %v4302 = vld [vmem:[%s3 + $0x30] sm:$0xf]
      %v4303 = vld [vmem:[%s3 + $0x34] sm:$0xf]
      %v4304 = vld [vmem:[%s3 + $0x38] sm:$0xf]
      %v4305 = vld [vmem:[%s3 + $0x3c] sm:$0xf]
      %v4314 = vunpack.c.l.b16 %v4298
      %v4315 = vunpack.c.l.b16 %v4299
      %v4316 = vunpack.c.l.b16 %v4300
      %v4317 = vunpack.c.l.b16 %v4301
      %v4318 = vunpack.c.l.b16 %v4302
      %v4319 = vunpack.c.l.b16 %v4303
      %v4320 = vunpack.c.l.b16 %v4304
      %v4321 = vunpack.c.l.b16 %v4305
      %v4322 = vpack.c.b16 %v4315, %v4314
      %v4323 = vpack.c.b16 %v4317, %v4316
      %v4324 = vpack.c.b16 %v4319, %v4318
      %v4325 = vpack.c.b16 %v4321, %v4320
      %v4331 = vsel %vm1089, %v4297, 0
      %4333 = vmatpush.bf16.msra.mxu0 0
      %4334 = vmatpush.bf16.msra.mxu0 0
      %4335 = vmatpush.bf16.msra.mxu0 0
      %4336 = vmatpush.bf16.msra.mxu0 0
      %4337 = vmatpush.bf16.msra.mxu0 %v4325
      %4338 = vmatpush.bf16.msra.mxu0 %v4324
      %4339 = vmatpush.bf16.msra.mxu0 %v4323
      %4340 = vmatpush.bf16.msra.mxu0 %v4322
      %4341 = vmatmul.bf16.gmra.mxu0 %v4331
      %v4342 = vpop.f32.mrf.mxu0
      %v4343 = vadd.f32 0.0, %v4342
      %v4344 = vpop.f32.mrf.mxu0
      %v4345 = vadd.f32 0.0, %v4344
      %4346 = vdwg.mxu0
      %v4355 = vunpack.c.l.b16 %v4269
      %v4356 = vunpack.c.l.b16 %v4270
      %v4357 = vunpack.c.l.b16 %v4271
      %v4358 = vunpack.c.l.b16 %v4272
      %v4359 = vunpack.c.l.b16 %v4273
      %v4360 = vunpack.c.l.b16 %v4274
      %v4361 = vunpack.c.l.b16 %v4275
      %v4362 = vunpack.c.l.b16 %v4276
      %v4363 = vpack.c.b16 %v4356, %v4355
      %v4364 = vpack.c.b16 %v4358, %v4357
      %v4365 = vpack.c.b16 %v4360, %v4359
      %v4366 = vpack.c.b16 %v4362, %v4361
      %v4372 = vsel %vm1089, %v4268, 0
      %4374 = vmatpush.bf16.msra.mxu0 0
      %4375 = vmatpush.bf16.msra.mxu0 0
      %4376 = vmatpush.bf16.msra.mxu0 0
      %4377 = vmatpush.bf16.msra.mxu0 0
      %4378 = vmatpush.bf16.msra.mxu0 %v4366
      %4379 = vmatpush.bf16.msra.mxu0 %v4365
      %4380 = vmatpush.bf16.msra.mxu0 %v4364
      %4381 = vmatpush.bf16.msra.mxu0 %v4363
      %4382 = vmatmul.bf16.gmra.mxu0 %v4372
      %v4383 = vpop.f32.mrf.mxu0
      %v4384 = vadd.f32 %v4343, %v4383
      %v4385 = vpop.f32.mrf.mxu0
      %v4386 = vadd.f32 %v4345, %v4385
      %4387 = vdwg.mxu0
      %4388 = vst [vmem:[#allocation1] ss:$9 sm:$0xff] %v4228
      %s4389 = scalar_lea.vmem [#allocation1], 1
      %4390 = vst [vmem:[%s4389] ss:$9 sm:$0xff] %v4229
      %s4391 = scalar_lea.vmem [#allocation1], 2
      %4392 = vst [vmem:[%s4391] ss:$9 sm:$0xff] %v4230
      %s4393 = scalar_lea.vmem [#allocation1], 3
      %4394 = vst [vmem:[%s4393] ss:$9 sm:$0xff] %v4233
      %s4395 = scalar_lea.vmem [#allocation1], 4
      %4396 = vst [vmem:[%s4395] ss:$9 sm:$0xff] %v4220
      %s4397 = scalar_lea.vmem [#allocation1], 5
      %4398 = vst [vmem:[%s4397] ss:$9 sm:$0xff] %v4234
      %s4399 = scalar_lea.vmem [#allocation1], 6
      %4400 = vst [vmem:[%s4399] ss:$9 sm:$0xff] %v4237
      %s4401 = scalar_lea.vmem [#allocation1], 7
      %4402 = vst [vmem:[%s4401] ss:$9 sm:$0xff] %v4238
      %v4403 = vld [vmem:[#allocation1] sm:$0xff]
      %4404 = vst [vmem:[#allocation1] ss:$9 sm:$0xff] %v4239
      %v4405 = vld [vmem:[#allocation1] sm:$0xff]
      %v4408 = vpack.c.bf16 %v4405, %v4403
      %v4409 = vld [vmem:[%s3 + $0x40] sm:$0xf]
      %v4410 = vld [vmem:[%s3 + $0x44] sm:$0xf]
      %v4411 = vld [vmem:[%s3 + $0x48] sm:$0xf]
      %v4412 = vld [vmem:[%s3 + $0x4c] sm:$0xf]
      %v4413 = vld [vmem:[%s3 + $0x50] sm:$0xf]
      %v4414 = vld [vmem:[%s3 + $0x54] sm:$0xf]
      %v4415 = vld [vmem:[%s3 + $0x58] sm:$0xf]
      %v4416 = vld [vmem:[%s3 + $0x5c] sm:$0xf]
      %v4425 = vunpack.c.l.b16 %v4409
      %v4426 = vunpack.c.l.b16 %v4410
      %v4427 = vunpack.c.l.b16 %v4411
      %v4428 = vunpack.c.l.b16 %v4412
      %v4429 = vunpack.c.l.b16 %v4413
      %v4430 = vunpack.c.l.b16 %v4414
      %v4431 = vunpack.c.l.b16 %v4415
      %v4432 = vunpack.c.l.b16 %v4416
      %v4433 = vpack.c.b16 %v4426, %v4425
      %v4434 = vpack.c.b16 %v4428, %v4427
      %v4435 = vpack.c.b16 %v4430, %v4429
      %v4436 = vpack.c.b16 %v4432, %v4431
      %v4442 = vsel %vm1089, %v4408, 0
      %4444 = vmatpush.bf16.msra.mxu0 0
      %4445 = vmatpush.bf16.msra.mxu0 0
      %4446 = vmatpush.bf16.msra.mxu0 0
      %4447 = vmatpush.bf16.msra.mxu0 0
      %4448 = vmatpush.bf16.msra.mxu0 %v4436
      %4449 = vmatpush.bf16.msra.mxu0 %v4435
      %4450 = vmatpush.bf16.msra.mxu0 %v4434
      %4451 = vmatpush.bf16.msra.mxu0 %v4433
      %4452 = vmatmul.bf16.gmra.mxu0 %v4442
      %v4453 = vpop.f32.mrf.mxu0
      %v4454 = vadd.f32 0.0, %v4453
      %v4455 = vpop.f32.mrf.mxu0
      %v4456 = vadd.f32 0.0, %v4455
      %4457 = vdwg.mxu0
      %v4458 = vadd.f32 %v4384, %v4454
      %v4459 = vadd.f32 %v4386, %v4456
      %4460 = vst [vmem:[#allocation1] ss:$9 sm:$0xff] %v4231
      %s4461 = scalar_lea.vmem [#allocation1], 1
      %4462 = vst [vmem:[%s4461] ss:$9 sm:$0xff] %v4232
      %s4463 = scalar_lea.vmem [#allocation1], 2
      %4464 = vst [vmem:[%s4463] ss:$9 sm:$0xff] %v4233
      %s4465 = scalar_lea.vmem [#allocation1], 3
      %4466 = vst [vmem:[%s4465] ss:$9 sm:$0xff] %v4235
      %s4467 = scalar_lea.vmem [#allocation1], 4
      %4468 = vst [vmem:[%s4467] ss:$9 sm:$0xff] %v4236
      %s4469 = scalar_lea.vmem [#allocation1], 5
      %4470 = vst [vmem:[%s4469] ss:$9 sm:$0xff] %v4237
      %s4471 = scalar_lea.vmem [#allocation1], 6
      %4472 = vst [vmem:[%s4471] ss:$9 sm:$0xff] %v4240
      %s4473 = scalar_lea.vmem [#allocation1], 7
      %4474 = vst [vmem:[%s4473] ss:$9 sm:$0xff] %v4221
      %v4475 = vld [vmem:[#allocation1] sm:$0xff]
      %4476 = vst [vmem:[#allocation1] ss:$9 sm:$0xff] %v4241
      %v4477 = vld [vmem:[#allocation1] sm:$0xff]
      %v4480 = vpack.c.bf16 %v4477, %v4475
      %v4481 = vld [vmem:[%s3 + $0x60] sm:$0xf]
      %v4482 = vld [vmem:[%s3 + $0x64] sm:$0xf]
      %v4483 = vld [vmem:[%s3 + $0x68] sm:$0xf]
      %v4484 = vld [vmem:[%s3 + $0x6c] sm:$0xf]
      %v4485 = vld [vmem:[%s3 + $0x70] sm:$0xf]
      %v4486 = vld [vmem:[%s3 + $0x74] sm:$0xf]
      %v4487 = vld [vmem:[%s3 + $0x78] sm:$0xf]
      %v4488 = vld [vmem:[%s3 + $0x7c] sm:$0xf]
      %v4497 = vunpack.c.l.b16 %v4481
      %v4498 = vunpack.c.l.b16 %v4482
      %v4499 = vunpack.c.l.b16 %v4483
      %v4500 = vunpack.c.l.b16 %v4484
      %v4501 = vunpack.c.l.b16 %v4485
      %v4502 = vunpack.c.l.b16 %v4486
      %v4503 = vunpack.c.l.b16 %v4487
      %v4504 = vunpack.c.l.b16 %v4488
      %v4505 = vpack.c.b16 %v4498, %v4497
      %v4506 = vpack.c.b16 %v4500, %v4499
      %v4507 = vpack.c.b16 %v4502, %v4501
      %v4508 = vpack.c.b16 %v4504, %v4503
      %v4514 = vsel %vm1089, %v4480, 0
      %4516 = vmatpush.bf16.msra.mxu0 0
      %4517 = vmatpush.bf16.msra.mxu0 0
      %4518 = vmatpush.bf16.msra.mxu0 0
      %4519 = vmatpush.bf16.msra.mxu0 0
      %4520 = vmatpush.bf16.msra.mxu0 %v4508
      %4521 = vmatpush.bf16.msra.mxu0 %v4507
      %4522 = vmatpush.bf16.msra.mxu0 %v4506
      %4523 = vmatpush.bf16.msra.mxu0 %v4505
      %4524 = vmatmul.bf16.gmra.mxu0 %v4514
      %v4525 = vpop.f32.mrf.mxu0
      %v4526 = vadd.f32 0.0, %v4525
      %v4527 = vpop.f32.mrf.mxu0
      %v4528 = vadd.f32 0.0, %v4527
      %4529 = vdwg.mxu0
      %v4530 = vadd.f32 %v4458, %v4526
      %v4531 = vadd.f32 %v4459, %v4528
      %4532 = vst [vmem:[#allocation1] ss:$9 sm:$0xff] %v4232
      %s4533 = scalar_lea.vmem [#allocation1], 1
      %4534 = vst [vmem:[%s4533] ss:$9 sm:$0xff] %v4233
      %s4535 = scalar_lea.vmem [#allocation1], 2
      %4536 = vst [vmem:[%s4535] ss:$9 sm:$0xff] %v4220
      %s4537 = scalar_lea.vmem [#allocation1], 3
      %4538 = vst [vmem:[%s4537] ss:$9 sm:$0xff] %v4236
      %s4539 = scalar_lea.vmem [#allocation1], 4
      %4540 = vst [vmem:[%s4539] ss:$9 sm:$0xff] %v4237
      %s4541 = scalar_lea.vmem [#allocation1], 5
      %4542 = vst [vmem:[%s4541] ss:$9 sm:$0xff] %v4238
      %s4543 = scalar_lea.vmem [#allocation1], 6
      %4544 = vst [vmem:[%s4543] ss:$9 sm:$0xff] %v4221
      %s4545 = scalar_lea.vmem [#allocation1], 7
      %4546 = vst [vmem:[%s4545] ss:$9 sm:$0xff] %v4241
      %v4547 = vld [vmem:[#allocation1] sm:$0xff]
      %4548 = vst [vmem:[#allocation1] ss:$9 sm:$0xff] %v4242
      %v4549 = vld [vmem:[#allocation1] sm:$0xff]
      %v4552 = vpack.c.bf16 %v4549, %v4547
      %v4553 = vld [vmem:[%s3 + $0x80] sm:$0xf]
      %v4554 = vld [vmem:[%s3 + $0x84] sm:$0xf]
      %v4555 = vld [vmem:[%s3 + $0x88] sm:$0xf]
      %v4556 = vld [vmem:[%s3 + $0x8c] sm:$0xf]
      %v4557 = vld [vmem:[%s3 + $0x90] sm:$0xf]
      %v4558 = vld [vmem:[%s3 + $0x94] sm:$0xf]
      %v4559 = vld [vmem:[%s3 + $0x98] sm:$0xf]
      %v4560 = vld [vmem:[%s3 + $0x9c] sm:$0xf]
      %v4569 = vunpack.c.l.b16 %v4553
      %v4570 = vunpack.c.l.b16 %v4554
      %v4571 = vunpack.c.l.b16 %v4555
      %v4572 = vunpack.c.l.b16 %v4556
      %v4573 = vunpack.c.l.b16 %v4557
      %v4574 = vunpack.c.l.b16 %v4558
      %v4575 = vunpack.c.l.b16 %v4559
      %v4576 = vunpack.c.l.b16 %v4560
      %v4577 = vpack.c.b16 %v4570, %v4569
      %v4578 = vpack.c.b16 %v4572, %v4571
      %v4579 = vpack.c.b16 %v4574, %v4573
      %v4580 = vpack.c.b16 %v4576, %v4575
      %v4586 = vsel %vm1089, %v4552, 0
      %4588 = vmatpush.bf16.msra.mxu0 0
      %4589 = vmatpush.bf16.msra.mxu0 0
      %4590 = vmatpush.bf16.msra.mxu0 0
      %4591 = vmatpush.bf16.msra.mxu0 0
      %4592 = vmatpush.bf16.msra.mxu0 %v4580
      %4593 = vmatpush.bf16.msra.mxu0 %v4579
      %4594 = vmatpush.bf16.msra.mxu0 %v4578
      %4595 = vmatpush.bf16.msra.mxu0 %v4577
      %4596 = vmatmul.bf16.gmra.mxu0 %v4586
      %v4597 = vpop.f32.mrf.mxu0
      %v4598 = vadd.f32 0.0, %v4597
      %v4599 = vpop.f32.mrf.mxu0
      %v4600 = vadd.f32 0.0, %v4599
      %4601 = vdwg.mxu0
      %v4602 = vadd.f32 %v4530, %v4598
      %v4603 = vadd.f32 %v4531, %v4600
      %4604 = vst [vmem:[#allocation1] ss:$9 sm:$0xff] %v4233
      %s4605 = scalar_lea.vmem [#allocation1], 1
      %4606 = vst [vmem:[%s4605] ss:$9 sm:$0xff] %v4220
      %s4607 = scalar_lea.vmem [#allocation1], 2
      %4608 = vst [vmem:[%s4607] ss:$9 sm:$0xff] %v4234
      %s4609 = scalar_lea.vmem [#allocation1], 3
      %4610 = vst [vmem:[%s4609] ss:$9 sm:$0xff] %v4237
      %s4611 = scalar_lea.vmem [#allocation1], 4
      %4612 = vst [vmem:[%s4611] ss:$9 sm:$0xff] %v4238
      %s4613 = scalar_lea.vmem [#allocation1], 5
      %4614 = vst [vmem:[%s4613] ss:$9 sm:$0xff] %v4239
      %s4615 = scalar_lea.vmem [#allocation1], 6
      %4616 = vst [vmem:[%s4615] ss:$9 sm:$0xff] %v4241
      %s4617 = scalar_lea.vmem [#allocation1], 7
      %4618 = vst [vmem:[%s4617] ss:$9 sm:$0xff] %v4242
      %v4619 = vld [vmem:[#allocation1] sm:$0xff]
      %4620 = vst [vmem:[#allocation1] ss:$9 sm:$0xff] %v4243
      %v4621 = vld [vmem:[#allocation1] sm:$0xff]
      %v4624 = vpack.c.bf16 %v4621, %v4619
      %v4625 = vld [vmem:[%s3 + $0xa0] sm:$0xf]
      %v4626 = vld [vmem:[%s3 + $0xa4] sm:$0xf]
      %v4627 = vld [vmem:[%s3 + $0xa8] sm:$0xf]
      %v4628 = vld [vmem:[%s3 + $0xac] sm:$0xf]
      %v4629 = vld [vmem:[%s3 + $0xb0] sm:$0xf]
      %v4630 = vld [vmem:[%s3 + $0xb4] sm:$0xf]
      %v4631 = vld [vmem:[%s3 + $0xb8] sm:$0xf]
      %v4632 = vld [vmem:[%s3 + $0xbc] sm:$0xf]
      %v4641 = vunpack.c.l.b16 %v4625
      %v4642 = vunpack.c.l.b16 %v4626
      %v4643 = vunpack.c.l.b16 %v4627
      %v4644 = vunpack.c.l.b16 %v4628
      %v4645 = vunpack.c.l.b16 %v4629
      %v4646 = vunpack.c.l.b16 %v4630
      %v4647 = vunpack.c.l.b16 %v4631
      %v4648 = vunpack.c.l.b16 %v4632
      %v4649 = vpack.c.b16 %v4642, %v4641
      %v4650 = vpack.c.b16 %v4644, %v4643
      %v4651 = vpack.c.b16 %v4646, %v4645
      %v4652 = vpack.c.b16 %v4648, %v4647
      %v4658 = vsel %vm1089, %v4624, 0
      %4660 = vmatpush.bf16.msra.mxu0 0
      %4661 = vmatpush.bf16.msra.mxu0 0
      %4662 = vmatpush.bf16.msra.mxu0 0
      %4663 = vmatpush.bf16.msra.mxu0 0
      %4664 = vmatpush.bf16.msra.mxu0 %v4652
      %4665 = vmatpush.bf16.msra.mxu0 %v4651
      %4666 = vmatpush.bf16.msra.mxu0 %v4650
      %4667 = vmatpush.bf16.msra.mxu0 %v4649
      %4668 = vmatmul.bf16.gmra.mxu0 %v4658
      %v4669 = vpop.f32.mrf.mxu0
      %v4670 = vadd.f32 0.0, %v4669
      %v4671 = vpop.f32.mrf.mxu0
      %v4672 = vadd.f32 0.0, %v4671
      %4673 = vdwg.mxu0
      %v4674 = vadd.f32 %v4602, %v4670
      %v4675 = vadd.f32 %v4603, %v4672
      %4676 = vst [vmem:[#allocation1] ss:$9 sm:$0xff] %v4235
      %s4677 = scalar_lea.vmem [#allocation1], 1
      %4678 = vst [vmem:[%s4677] ss:$9 sm:$0xff] %v4236
      %s4679 = scalar_lea.vmem [#allocation1], 2
      %4680 = vst [vmem:[%s4679] ss:$9 sm:$0xff] %v4237
      %s4681 = scalar_lea.vmem [#allocation1], 3
      %4682 = vst [vmem:[%s4681] ss:$9 sm:$0xff] %v4240
      %s4683 = scalar_lea.vmem [#allocation1], 4
      %4684 = vst [vmem:[%s4683] ss:$9 sm:$0xff] %v4221
      %s4685 = scalar_lea.vmem [#allocation1], 5
      %4686 = vst [vmem:[%s4685] ss:$9 sm:$0xff] %v4241
      %s4687 = scalar_lea.vmem [#allocation1], 6
      %4688 = vst [vmem:[%s4687] ss:$9 sm:$0xff] %v4244
      %s4689 = scalar_lea.vmem [#allocation1], 7
      %4690 = vst [vmem:[%s4689] ss:$9 sm:$0xff] %v4245
      %v4691 = vld [vmem:[#allocation1] sm:$0xff]
      %4692 = vst [vmem:[#allocation1] ss:$9 sm:$0xff] %v4246
      %v4693 = vld [vmem:[#allocation1] sm:$0xff]
      %v4696 = vpack.c.bf16 %v4693, %v4691
      %v4697 = vld [vmem:[%s3 + $0xc0] sm:$0xf]
      %v4698 = vld [vmem:[%s3 + $0xc4] sm:$0xf]
      %v4699 = vld [vmem:[%s3 + $0xc8] sm:$0xf]
      %v4700 = vld [vmem:[%s3 + $0xcc] sm:$0xf]
      %v4701 = vld [vmem:[%s3 + $0xd0] sm:$0xf]
      %v4702 = vld [vmem:[%s3 + $0xd4] sm:$0xf]
      %v4703 = vld [vmem:[%s3 + $0xd8] sm:$0xf]
      %v4704 = vld [vmem:[%s3 + $0xdc] sm:$0xf]
      %v4713 = vunpack.c.l.b16 %v4697
      %v4714 = vunpack.c.l.b16 %v4698
      %v4715 = vunpack.c.l.b16 %v4699
      %v4716 = vunpack.c.l.b16 %v4700
      %v4717 = vunpack.c.l.b16 %v4701
      %v4718 = vunpack.c.l.b16 %v4702
      %v4719 = vunpack.c.l.b16 %v4703
      %v4720 = vunpack.c.l.b16 %v4704
      %v4721 = vpack.c.b16 %v4714, %v4713
      %v4722 = vpack.c.b16 %v4716, %v4715
      %v4723 = vpack.c.b16 %v4718, %v4717
      %v4724 = vpack.c.b16 %v4720, %v4719
      %v4730 = vsel %vm1089, %v4696, 0
      %4732 = vmatpush.bf16.msra.mxu0 0
      %4733 = vmatpush.bf16.msra.mxu0 0
      %4734 = vmatpush.bf16.msra.mxu0 0
      %4735 = vmatpush.bf16.msra.mxu0 0
      %4736 = vmatpush.bf16.msra.mxu0 %v4724
      %4737 = vmatpush.bf16.msra.mxu0 %v4723
      %4738 = vmatpush.bf16.msra.mxu0 %v4722
      %4739 = vmatpush.bf16.msra.mxu0 %v4721
      %4740 = vmatmul.bf16.gmra.mxu0 %v4730
      %v4741 = vpop.f32.mrf.mxu0
      %v4742 = vadd.f32 0.0, %v4741
      %v4743 = vpop.f32.mrf.mxu0
      %v4744 = vadd.f32 0.0, %v4743
      %4745 = vdwg.mxu0
      %v4746 = vadd.f32 %v4674, %v4742
      %v4747 = vadd.f32 %v4675, %v4744
      %4748 = vst [vmem:[#allocation1] ss:$9 sm:$0xff] %v4236
      %s4749 = scalar_lea.vmem [#allocation1], 1
      %4750 = vst [vmem:[%s4749] ss:$9 sm:$0xff] %v4237
      %s4751 = scalar_lea.vmem [#allocation1], 2
      %4752 = vst [vmem:[%s4751] ss:$9 sm:$0xff] %v4238
      %s4753 = scalar_lea.vmem [#allocation1], 3
      %4754 = vst [vmem:[%s4753] ss:$9 sm:$0xff] %v4221
      %s4755 = scalar_lea.vmem [#allocation1], 4
      %4756 = vst [vmem:[%s4755] ss:$9 sm:$0xff] %v4241
      %s4757 = scalar_lea.vmem [#allocation1], 5
      %4758 = vst [vmem:[%s4757] ss:$9 sm:$0xff] %v4242
      %s4759 = scalar_lea.vmem [#allocation1], 6
      %4760 = vst [vmem:[%s4759] ss:$9 sm:$0xff] %v4245
      %s4761 = scalar_lea.vmem [#allocation1], 7
      %4762 = vst [vmem:[%s4761] ss:$9 sm:$0xff] %v4246
      %v4763 = vld [vmem:[#allocation1] sm:$0xff]
      %4764 = vst [vmem:[#allocation1] ss:$9 sm:$0xff] %v4247
      %v4765 = vld [vmem:[#allocation1] sm:$0xff]
      %v4768 = vpack.c.bf16 %v4765, %v4763
      %v4769 = vld [vmem:[%s3 + $0xe0] sm:$0xf]
      %v4770 = vld [vmem:[%s3 + $0xe4] sm:$0xf]
      %v4771 = vld [vmem:[%s3 + $0xe8] sm:$0xf]
      %v4772 = vld [vmem:[%s3 + $0xec] sm:$0xf]
      %v4773 = vld [vmem:[%s3 + $0xf0] sm:$0xf]
      %v4774 = vld [vmem:[%s3 + $0xf4] sm:$0xf]
      %v4775 = vld [vmem:[%s3 + $0xf8] sm:$0xf]
      %v4776 = vld [vmem:[%s3 + $0xfc] sm:$0xf]
      %v4785 = vunpack.c.l.b16 %v4769
      %v4786 = vunpack.c.l.b16 %v4770
      %v4787 = vunpack.c.l.b16 %v4771
      %v4788 = vunpack.c.l.b16 %v4772
      %v4789 = vunpack.c.l.b16 %v4773
      %v4790 = vunpack.c.l.b16 %v4774
      %v4791 = vunpack.c.l.b16 %v4775
      %v4792 = vunpack.c.l.b16 %v4776
      %v4793 = vpack.c.b16 %v4786, %v4785
      %v4794 = vpack.c.b16 %v4788, %v4787
      %v4795 = vpack.c.b16 %v4790, %v4789
      %v4796 = vpack.c.b16 %v4792, %v4791
      %v4802 = vsel %vm1089, %v4768, 0
      %4804 = vmatpush.bf16.msra.mxu0 0
      %4805 = vmatpush.bf16.msra.mxu0 0
      %4806 = vmatpush.bf16.msra.mxu0 0
      %4807 = vmatpush.bf16.msra.mxu0 0
      %4808 = vmatpush.bf16.msra.mxu0 %v4796
      %4809 = vmatpush.bf16.msra.mxu0 %v4795
      %4810 = vmatpush.bf16.msra.mxu0 %v4794
      %4811 = vmatpush.bf16.msra.mxu0 %v4793
      %4812 = vmatmul.bf16.gmra.mxu0 %v4802
      %v4813 = vpop.f32.mrf.mxu0
      %v4814 = vadd.f32 0.0, %v4813
      %v4815 = vpop.f32.mrf.mxu0
      %v4816 = vadd.f32 0.0, %v4815
      %4817 = vdwg.mxu0
      %v4818 = vadd.f32 %v4746, %v4814
      %v4819 = vadd.f32 %v4747, %v4816
      %4820 = vst [vmem:[#allocation1] ss:$9 sm:$0xff] %v4237
      %s4821 = scalar_lea.vmem [#allocation1], 1
      %4822 = vst [vmem:[%s4821] ss:$9 sm:$0xff] %v4238
      %s4823 = scalar_lea.vmem [#allocation1], 2
      %4824 = vst [vmem:[%s4823] ss:$9 sm:$0xff] %v4239
      %s4825 = scalar_lea.vmem [#allocation1], 3
      %4826 = vst [vmem:[%s4825] ss:$9 sm:$0xff] %v4241
      %s4827 = scalar_lea.vmem [#allocation1], 4
      %4828 = vst [vmem:[%s4827] ss:$9 sm:$0xff] %v4242
      %s4829 = scalar_lea.vmem [#allocation1], 5
      %4830 = vst [vmem:[%s4829] ss:$9 sm:$0xff] %v4243
      %s4831 = scalar_lea.vmem [#allocation1], 6
      %4832 = vst [vmem:[%s4831] ss:$9 sm:$0xff] %v4246
      %s4833 = scalar_lea.vmem [#allocation1], 7
      %4834 = vst [vmem:[%s4833] ss:$9 sm:$0xff] %v4247
      %v4835 = vld [vmem:[#allocation1] sm:$0xff]
      %4836 = vst [vmem:[#allocation1] ss:$9 sm:$0xff] %v4222
      %v4837 = vld [vmem:[#allocation1] sm:$0xff]
      %v4840 = vpack.c.bf16 %v4837, %v4835
      %v4841 = vld [vmem:[%s3 + $0x100] sm:$0xf]
      %v4842 = vld [vmem:[%s3 + $0x104] sm:$0xf]
      %v4843 = vld [vmem:[%s3 + $0x108] sm:$0xf]
      %v4844 = vld [vmem:[%s3 + $0x10c] sm:$0xf]
      %v4845 = vld [vmem:[%s3 + $0x110] sm:$0xf]
      %v4846 = vld [vmem:[%s3 + $0x114] sm:$0xf]
      %v4847 = vld [vmem:[%s3 + $0x118] sm:$0xf]
      %v4848 = vld [vmem:[%s3 + $0x11c] sm:$0xf]
      %v4857 = vunpack.c.l.b16 %v4841
      %v4858 = vunpack.c.l.b16 %v4842
      %v4859 = vunpack.c.l.b16 %v4843
      %v4860 = vunpack.c.l.b16 %v4844
      %v4861 = vunpack.c.l.b16 %v4845
      %v4862 = vunpack.c.l.b16 %v4846
      %v4863 = vunpack.c.l.b16 %v4847
      %v4864 = vunpack.c.l.b16 %v4848
      %v4865 = vpack.c.b16 %v4858, %v4857
      %v4866 = vpack.c.b16 %v4860, %v4859
      %v4867 = vpack.c.b16 %v4862, %v4861
      %v4868 = vpack.c.b16 %v4864, %v4863
      %v4874 = vsel %vm1089, %v4840, 0
      %4876 = vmatpush.bf16.msra.mxu0 0
      %4877 = vmatpush.bf16.msra.mxu0 0
      %4878 = vmatpush.bf16.msra.mxu0 0
      %4879 = vmatpush.bf16.msra.mxu0 0
      %4880 = vmatpush.bf16.msra.mxu0 %v4868
      %4881 = vmatpush.bf16.msra.mxu0 %v4867
      %4882 = vmatpush.bf16.msra.mxu0 %v4866
      %4883 = vmatpush.bf16.msra.mxu0 %v4865
      %4884 = vmatmul.bf16.gmra.mxu0 %v4874
      %v4885 = vpop.f32.mrf.mxu0
      %v4886 = vadd.f32 0.0, %v4885
      %v4887 = vpop.f32.mrf.mxu0
      %v4888 = vadd.f32 0.0, %v4887
      %4889 = vdwg.mxu0
      %v4890 = vadd.f32 %v4818, %v4886
      %v4891 = vadd.f32 %v4819, %v4888
      %v4892 = vld [vmem:[%s6] sm:$0x1]
      %v4894 = vperm.slane %v4892, 0
      %v4896 = vadd.f32 %v4890, %v4894
      %v4897 = vadd.f32 %v4891, %v4894
      %4898 = vst.msk [vmem:[%s278] sm:$0xff] %vm1089, %v4896
      %vm4899 = vcmask 516096
      %4900 = vst.msk [vmem:[%s278 + $0x8] sm:$0x1] %vm4899, %v4897
      %p4901 = scmp.lt.s32.totalorder %s18, 1
      %s4902 = scalar_select %p4901, %s18, 1
      %s4903 = smul.addr %s4902, 2
      %s4904 = smul.addr %s4903, 8
      %s4905 = scalar_lea.vmem %s7, %s4904
      // Predicated region
      $region49: #{picture_processor_forward.1} parent=47 // pred_check
        %p4906 = pneg %p188
      $region50: #{picture_processor_forward.1} parent=47 // pred_check_branch
        %4908 = sbr.rel (%p4906) target = $region52
      $region51: #{picture_processor_forward.1} parent=47 // pred_region
        _
      $region52: #{picture_processor_forward.1} parent=47 // pred_fallthru
        _
    $region48: #{picture_processor_forward.1} parent=5 // pred_fallthru
      _
    %p4909 = scmp.le.s32.totalorder 2, %s13
    // Predicated region
    $region53: #{picture_processor_forward.1} parent=5 // pred_check
      %p4910 = pneg %p4909
    $region54: #{picture_processor_forward.1} parent=5 // pred_check_branch
      %4912 = sbr.rel (%p4910) target = $region56
    $region55: #{picture_processor_forward.1} parent=5 // pred_region
      %s4913 = ssub.s32 %s13, 2
      // Predicated region
      $region57: #{picture_processor_forward.1} parent=55 // pred_check
        %p4914 = pneg %p194
      $region58: #{picture_processor_forward.1} parent=55 // pred_check_branch
        %4916 = sbr.rel (%p4914) target = $region60
      $region59: #{picture_processor_forward.1} parent=55 // pred_region
        %p4917 = scmp.lt.s32.totalorder %s19, 1
        %s4918 = scalar_select %p4917, %s19, 1
        %s4919 = smul.addr %s4918, 2
        %s4920 = smul.addr %s4919, 8
        %s4921 = scalar_lea.vmem %s7, %s4920
      $region60: #{picture_processor_forward.1} parent=55 // pred_fallthru
        _
    $region56: #{picture_processor_forward.1} parent=5 // pred_fallthru
      _
  $region6: #{picture_processor_forward.1} parent=0 // loop_footer
    %s17 = sadd.s32 1, %s13
  $region7: #{picture_processor_forward.1} parent=0 // loop_footer_branch
    %12 = sbr.rel target = $region3
  $region8: #{picture_processor_forward.1} parent=0 // loop_exit
    _

</llo_original>
